<compile_context>
chip_gen: v7x
topology: tpu7x:2x2x1
jax: 0.10.0
libtpu: 0.0.40
codegen_flags: <defaults>
</compile_context>

<pallas_src>
import functools

import jax
import jax.numpy as jnp
from jax.experimental import pallas as pl
from jax.experimental.pallas import tpu as pltpu

LEAKY_SLOPE = 0.3
BN_EPS = 1e-5


def _leaky(x):
    # max(x, 0.3*x) == LeakyReLU(0.3) for slope < 1 (single VPU max).
    return jnp.maximum(x, LEAKY_SLOPE * x)


def _roll(a, shift):
    """Circular lane roll of a (C, P) map (jnp.roll semantics, positive shift)."""
    return pltpu.roll(a, shift % a.shape[-1], 1)


def _halo_taps(a, H, W, h_first, h_last, w_first, w_last):
    """The 9 shifted copies of a (C, H*W) map that a 3x3 conv needs, with
    reflect padding along H and circular (wrap) padding along W, built entirely
    from lane rolls + masked selects on VMEM-resident data (no HBM padding
    pass, no tile-crossing slice/reshape relayouts).

    Returned in (dy, dx) order, dy/dx in {0,1,2}:
      tap[dy*3+dx][c, h*W + w] == a_padded[c, h+dy, w+dx].
    """
    # Column (W) shifts, circular wrap.
    a_xp = jnp.where(w_last, _roll(a, W - 1), _roll(a, -1))      # col w+1
    a_xm = jnp.where(w_first, _roll(a, -(W - 1)), _roll(a, 1))   # col w-1
    cols = (a_xm, a, a_xp)                                       # dx = 0, 1, 2
    taps = []
    for col in cols:
        dn = _roll(col, -W)                      # row h+1 (naive)
        up = _roll(col, W)                       # row h-1 (naive)
        t_up = jnp.where(h_first, dn, up)        # reflect at the top row
        t_dn = jnp.where(h_last, up, dn)         # reflect at the bottom row
        taps.append((t_up, col, t_dn))           # dy = 0, 1, 2
    return [taps[dx][dy] for dy in range(3) for dx in range(3)]


def _conv3x3_bn_act(a, w_ref, shift_ref, H, W, masks):
    """3x3 conv (reflect-H / wrap-W padded) + folded BatchNorm + LeakyReLU.

    a: (Cin, P) activations; w_ref: (9, Cout, Cin) BN-folded per-tap weights;
    shift_ref: (Cout, 1) BN-folded bias.  Every dot has N = P on the lane axis
    (lane-dense MXU work, unmasked output).
    NOTE: with Cin a multiple of 8 the nine taps could be packed into a single
    (9*Cin, P) im2col slab and contracted with one K=9*Cin dot; at Cin=4 that
    packing needs an unaligned sublane repack, so we keep 9 small lane-dense
    dots (identical result, same N).
    """
    h_first, h_last, w_first, w_last = masks
    taps = _halo_taps(a, H, W, h_first, h_last, w_first, w_last)
    acc = jnp.dot(w_ref[0], taps[0], preferred_element_type=jnp.float32)
    for t in range(1, 9):
        acc = acc + jnp.dot(w_ref[t], taps[t], preferred_element_type=jnp.float32)
    return _leaky(acc + shift_ref[...])


def _gcb_kernel(H, W, has_shortcut, *refs):
    if has_shortcut:
        (h_idx_ref, w_idx_ref, x_ref,
         w1c_ref, b1c_ref, w2c_ref, b2c_ref,
         w1s_ref, b1s_ref, w2s_ref, b2s_ref,
         wm1_ref, sh1_ref, wm2_ref, sh2_ref,
         wsc_ref, shsc_ref, o_ref) = refs
    else:
        (h_idx_ref, w_idx_ref, x_ref,
         w1c_ref, b1c_ref, w2c_ref, b2c_ref,
         w1s_ref, b1s_ref, w2s_ref, b2s_ref,
         wm1_ref, sh1_ref, wm2_ref, sh2_ref, o_ref) = refs
        wsc_ref = shsc_ref = None

    x = x_ref[...]                                               # (Cin, P)

    # Boundary masks for the halo construction, hoisted (used by both convs).
    h_idx = h_idx_ref[...]
    w_idx = w_idx_ref[...]
    masks = (h_idx == 0, h_idx == (H - 1), w_idx == 0, w_idx == (W - 1))

    # ---- channel attention: tiny MLP on the pooled vector (VPU/XLU only,
    #      no M=1 / N=1 MXU passes) ----
    pooled = jnp.mean(x, axis=1, keepdims=True)                              # (Cin, 1)
    hc = _leaky(jnp.sum(w1c_ref[...] * pooled, axis=0, keepdims=True)
                + b1c_ref[...])                                              # (1, cr)
    ca = jax.nn.sigmoid(jnp.sum(w2c_ref[...] * hc, axis=1, keepdims=True)
                        + b2c_ref[...])                                      # (Cin, 1)

    # ---- spatial attention: per-pixel 1x1 MLP; first projection is a
    #      lane-dense dot, second (single output channel) is VPU mul + reduce ----
    s = _leaky(jnp.dot(w1s_ref[...], x, preferred_element_type=jnp.float32)
               + b1s_ref[...])                                               # (cr, P)
    sa = jax.nn.sigmoid(jnp.sum(w2s_ref[...] * s, axis=0, keepdims=True)
                        + b2s_ref[...])                                      # (1, P)

    # ---- fused context gating: x*ca + x*sa == x * (ca + sa) ----
    g = x * (ca + sa)                                                        # (Cin, P)

    # ---- conv1 + BN + LeakyReLU, conv2 + BN + LeakyReLU, all in VMEM ----
    h1 = _conv3x3_bn_act(g, wm1_ref, sh1_ref, H, W, masks)                   # (Cout, P)
    h2 = _conv3x3_bn_act(h1, wm2_ref, sh2_ref, H, W, masks)                  # (Cout, P)

    # Dropout(p=0.2) is identity in eval mode.

    # ---- residual / shortcut fused into the epilogue (no extra HBM pass) ----
    if has_shortcut:
        sc = (jnp.dot(wsc_ref[...], x, preferred_element_type=jnp.float32)
              + shsc_ref[...])                                               # (Cout, P)
        o_ref[...] = h2 + sc
    else:
        o_ref[...] = h2 + x


# ----------------------------------------------------------------------------
# Wrapper: weight folding, kernel-layout packing, pallas_call
# ----------------------------------------------------------------------------
def _full_spec(shape):
    return pl.BlockSpec(tuple(shape), lambda b: (0,) * len(shape))


def _fold_conv3x3(w, b, scale, shift):
    """Fold conv bias + BN(scale, shift) into per-tap weights.
    w: (Cout, Cin, 3, 3) -> (9, Cout, Cin) with tap index t = dy*3 + dx."""
    cout, cin = w.shape[0], w.shape[1]
    wm = jnp.transpose(w, (2, 3, 0, 1)).reshape(9, cout, cin) * scale[None, :, None]
    sh = (b * scale + shift).reshape(cout, 1)
    return wm, sh


def global_context_block(x, p):
    """Forward pass of GlobalContextBlock. x: (B, Cin, H, W) float32 (NCHW)."""
    B, Cin, H, W = x.shape
    P = H * W
    Cout = p['conv1_w'].shape[0]
    has_shortcut = 'sc_w' in p

    xf = x.reshape(B, Cin, P)

    # Static pixel -> (h, w) index maps for the in-kernel halo construction.
    h_idx = jnp.repeat(jnp.arange(H, dtype=jnp.int32), W).reshape(1, P)
    w_idx = jnp.tile(jnp.arange(W, dtype=jnp.int32), H).reshape(1, P)

    # Attention weights in channel-major (column-vector) kernel layout.
    w1c = p['ca_w1'].T                      # (Cin, cr)
    b1c = p['ca_b1'].reshape(1, -1)         # (1, cr)
    w2c = p['ca_w2']                        # (Cin, cr)
    b2c = p['ca_b2'].reshape(-1, 1)         # (Cin, 1)
    w1s = p['sp_w1']                        # (cr, Cin)
    b1s = p['sp_b1'].reshape(-1, 1)         # (cr, 1)
    w2s = p['sp_w2'].reshape(-1, 1)         # (cr, 1)
    b2s = p['sp_b2'].reshape(1, 1)          # (1, 1)

    # Fold conv bias + BatchNorm (eval running stats) into the conv weights.
    wm1, sh1 = _fold_conv3x3(p['conv1_w'], p['conv1_b'], p['bn1_scale'], p['bn1_shift'])
    wm2, sh2 = _fold_conv3x3(p['conv2_w'], p['conv2_b'], p['bn2_scale'], p['bn2_shift'])

    inputs = [h_idx, w_idx, xf, w1c, b1c, w2c, b2c, w1s, b1s, w2s, b2s,
              wm1, sh1, wm2, sh2]
    if has_shortcut:
        wsc = p['sc_w'] * p['bn_sc_scale'][:, None]                           # (Cout, Cin)
        shsc = (p['sc_b'] * p['bn_sc_scale'] + p['bn_sc_shift']).reshape(-1, 1)
        inputs += [wsc, shsc]

    in_specs = ([_full_spec(h_idx.shape), _full_spec(w_idx.shape),
                 pl.BlockSpec((None, Cin, P), lambda b: (b, 0, 0))]
                + [_full_spec(a.shape) for a in inputs[3:]])

    # NOTE: bf16 MXU operands (v6e/v7x) only pay off at larger channel counts;
    # kept f32 here. TODO(synk): for large H*W add an H-row tile grid axis
    # (budget for v7x's 64 MiB VMEM) instead of one-image-per-step blocks.
    out = pl.pallas_call(
        functools.partial(_gcb_kernel, H, W, has_shortcut),
        out_shape=jax.ShapeDtypeStruct((B, Cout, P), jnp.float32),
        grid=(B,),   # batch axis 'parallel' -> shards across TCs on megacore/v7x
        in_specs=in_specs,
        out_specs=pl.BlockSpec((None, Cout, P), lambda b: (b, 0, 0)),
        compiler_params=pltpu.CompilerParams(
            dimension_semantics=("parallel",),
            vmem_limit_bytes=32 * 1024 * 1024),
    )(*inputs)
    return out.reshape(B, Cout, H, W)


# ----------------------------------------------------------------------------
# Deterministic parameter construction (mirrors the module's __init__ shapes)
# ----------------------------------------------------------------------------
def init_params(key, cin, cout, reduction_ratio=0.5):
    cr = max(1, int(cin * reduction_ratio))
    ks = jax.random.split(key, 14)

    def w(k, shape):
        return jax.random.normal(k, shape, jnp.float32) * 0.1

    # BatchNorm2d default (eval) stats folded: gamma=1, beta=0, mean=0, var=1.
    scale = jnp.full((cout,), 1.0 / jnp.sqrt(1.0 + BN_EPS), jnp.float32)
    shift = jnp.zeros((cout,), jnp.float32)

    p = dict(
        ca_w1=w(ks[0], (cr, cin)), ca_b1=w(ks[1], (cr,)),
        ca_w2=w(ks[2], (cin, cr)), ca_b2=w(ks[3], (cin,)),
        sp_w1=w(ks[4], (cr, cin)), sp_b1=w(ks[5], (cr,)),
        sp_w2=w(ks[6], (1, cr)),   sp_b2=w(ks[7], (1,)),
        conv1_w=w(ks[8], (cout, cin, 3, 3)),  conv1_b=w(ks[9], (cout,)),
        conv2_w=w(ks[10], (cout, cout, 3, 3)), conv2_b=w(ks[11], (cout,)),
        bn1_scale=scale, bn1_shift=shift,
        bn2_scale=scale, bn2_shift=shift,
    )
    if cin != cout:
        p.update(sc_w=w(ks[12], (cout, cin)), sc_b=w(ks[13], (cout,)),
                 bn_sc_scale=scale, bn_sc_shift=shift)
    return p


# ----------------------------------------------------------------------------
# Pure-JAX reference (NCHW, eval semantics) for correctness checking
# ----------------------------------------------------------------------------
def reference(x, p):
    hi = jax.lax.Precision.HIGHEST

    def conv1x1(z, w, b):      # w: (Co, Ci), b: (Co,)
        return jnp.einsum('bchw,oc->bohw', z, w, precision=hi) + b[None, :, None, None]

    pooled = jnp.mean(x, axis=(2, 3), keepdims=True)
    ca = jax.nn.sigmoid(conv1x1(_leaky(conv1x1(pooled, p['ca_w1'], p['ca_b1'])),
                                p['ca_w2'], p['ca_b2']))
    sa = jax.nn.sigmoid(conv1x1(_leaky(conv1x1(x, p['sp_w1'], p['sp_b1'])),
                                p['sp_w2'], p['sp_b2']))
    g = x * ca + x * sa

    def pad(z):
        z = jnp.pad(z, ((0, 0), (0, 0), (1, 1), (0, 0)), mode='reflect')
        z = jnp.pad(z, ((0, 0), (0, 0), (0, 0), (1, 1)), mode='wrap')
        return z

    def conv_bn_act(z, w, b, scale, shift):
        y = jax.lax.conv_general_dilated(
            pad(z), w, (1, 1), 'VALID',
            dimension_numbers=('NCHW', 'OIHW', 'NCHW'), precision=hi)
        y = (y + b[None, :, None, None]) * scale[None, :, None, None] \
            + shift[None, :, None, None]
        return _leaky(y)

    h = conv_bn_act(g, p['conv1_w'], p['conv1_b'], p['bn1_scale'], p['bn1_shift'])
    h = conv_bn_act(h, p['conv2_w'], p['conv2_b'], p['bn2_scale'], p['bn2_shift'])
    if 'sc_w' in p:
        sc = conv1x1(x, p['sc_w'], p['sc_b']) * p['bn_sc_scale'][None, :, None, None] \
             + p['bn_sc_shift'][None, :, None, None]
        return h + sc
    return h + x


if __name__ == "__main__":
    key = jax.random.PRNGKey(0)
    kx, kp, kp2 = jax.random.split(key, 3)

    # Same NCHW input as the PyTorch module: (B, Cin, H, W) = (2, 4, 16, 16).
    B, Cin, Cout, H, W = 2, 4, 8, 16, 16
    x = jax.random.normal(kx, (B, Cin, H, W), jnp.float32)

    # Shortcut path (in_channels != out_channels).
    params = init_params(kp, Cin, Cout, reduction_ratio=0.5)
    out = jax.block_until_ready(global_context_block(x, params))
    assert out.shape == (B, Cout, H, W), out.shape
    ref = reference(x, params)
    err = float(jnp.max(jnp.abs(out - ref)))
    assert jnp.allclose(out, ref, atol=1e-4, rtol=1e-4), f"max abs err {err}"

    # Identity-shortcut path (in_channels == out_channels).
    x2 = jax.random.normal(kx, (B, Cout, H, W), jnp.float32)
    params_id = init_params(kp2, Cout, Cout, reduction_ratio=0.5)
    out2 = jax.block_until_ready(global_context_block(x2, params_id))
    ref2 = reference(x2, params_id)
    err2 = float(jnp.max(jnp.abs(out2 - ref2)))
    assert jnp.allclose(out2, ref2, atol=1e-4, rtol=1e-4), f"max abs err {err2}"

    print("KERNEL_OK")
</pallas_src>

<mosaic_0001>
module attributes {stable_mosaic.version = 11 : i64} {
  func.func @_gcb_kernel(%arg0: i32, %arg1: memref<1x256xi32, #tpu.memory_space<vmem>>, %arg2: memref<1x256xi32, #tpu.memory_space<vmem>>, %arg3: memref<1x4x256xf32, #tpu.memory_space<vmem>>, %arg4: memref<4x2xf32, #tpu.memory_space<vmem>>, %arg5: memref<1x2xf32, #tpu.memory_space<vmem>>, %arg6: memref<4x2xf32, #tpu.memory_space<vmem>>, %arg7: memref<4x1xf32, #tpu.memory_space<vmem>>, %arg8: memref<2x4xf32, #tpu.memory_space<vmem>>, %arg9: memref<2x1xf32, #tpu.memory_space<vmem>>, %arg10: memref<2x1xf32, #tpu.memory_space<vmem>>, %arg11: memref<1x1xf32, #tpu.memory_space<vmem>>, %arg12: memref<9x8x4xf32, #tpu.memory_space<vmem>>, %arg13: memref<8x1xf32, #tpu.memory_space<vmem>>, %arg14: memref<9x8x8xf32, #tpu.memory_space<vmem>>, %arg15: memref<8x1xf32, #tpu.memory_space<vmem>>, %arg16: memref<8x4xf32, #tpu.memory_space<vmem>>, %arg17: memref<8x1xf32, #tpu.memory_space<vmem>>, %arg18: memref<1x8x256xf32, #tpu.memory_space<vmem>>) attributes {dimension_semantics = [#tpu.dimension_semantics<parallel>], iteration_bounds = array<i64: 2>, scalar_prefetch = 0 : i64, scratch_operands = 0 : i64, tpu.core_type = #tpu.core_type<tc>, window_params = [{pipeline_mode = #tpu.pipeline_mode<synchronous>, transform_indices = @transform_0, window_bounds = array<i64: 1, 256>}, {pipeline_mode = #tpu.pipeline_mode<synchronous>, transform_indices = @transform_1, window_bounds = array<i64: 1, 256>}, {transform_indices = @transform_2, window_bounds = array<i64: 1, 4, 256>}, {pipeline_mode = #tpu.pipeline_mode<synchronous>, transform_indices = @transform_3, window_bounds = array<i64: 4, 2>}, {pipeline_mode = #tpu.pipeline_mode<synchronous>, transform_indices = @transform_4, window_bounds = array<i64: 1, 2>}, {pipeline_mode = #tpu.pipeline_mode<synchronous>, transform_indices = @transform_5, window_bounds = array<i64: 4, 2>}, {pipeline_mode = #tpu.pipeline_mode<synchronous>, transform_indices = @transform_6, window_bounds = array<i64: 4, 1>}, {pipeline_mode = #tpu.pipeline_mode<synchronous>, transform_indices = @transform_7, window_bounds = array<i64: 2, 4>}, {pipeline_mode = #tpu.pipeline_mode<synchronous>, transform_indices = @transform_8, window_bounds = array<i64: 2, 1>}, {pipeline_mode = #tpu.pipeline_mode<synchronous>, transform_indices = @transform_9, window_bounds = array<i64: 2, 1>}, {pipeline_mode = #tpu.pipeline_mode<synchronous>, transform_indices = @transform_10, window_bounds = array<i64: 1, 1>}, {pipeline_mode = #tpu.pipeline_mode<synchronous>, transform_indices = @transform_11, window_bounds = array<i64: 9, 8, 4>}, {pipeline_mode = #tpu.pipeline_mode<synchronous>, transform_indices = @transform_12, window_bounds = array<i64: 8, 1>}, {pipeline_mode = #tpu.pipeline_mode<synchronous>, transform_indices = @transform_13, window_bounds = array<i64: 9, 8, 8>}, {pipeline_mode = #tpu.pipeline_mode<synchronous>, transform_indices = @transform_14, window_bounds = array<i64: 8, 1>}, {pipeline_mode = #tpu.pipeline_mode<synchronous>, transform_indices = @transform_15, window_bounds = array<i64: 8, 4>}, {pipeline_mode = #tpu.pipeline_mode<synchronous>, transform_indices = @transform_16, window_bounds = array<i64: 8, 1>}, {transform_indices = @transform_17, window_bounds = array<i64: 1, 8, 256>}]} {
    %c0 = arith.constant 0 : index
    %c0_0 = arith.constant 0 : index
    %c0_1 = arith.constant 0 : index
    %0 = vector.load %arg3[%c0, %c0_0, %c0_1] : memref<1x4x256xf32, #tpu.memory_space<vmem>>, vector<1x4x256xf32>
    %1 = vector.shape_cast %0 : vector<1x4x256xf32> to vector<4x256xf32>
    %c0_2 = arith.constant 0 : index
    %c0_3 = arith.constant 0 : index
    %2 = vector.load %arg1[%c0_2, %c0_3] : memref<1x256xi32, #tpu.memory_space<vmem>>, vector<1x256xi32>
    %c0_4 = arith.constant 0 : index
    %c0_5 = arith.constant 0 : index
    %3 = vector.load %arg2[%c0_4, %c0_5] : memref<1x256xi32, #tpu.memory_space<vmem>>, vector<1x256xi32>
    %c0_i32 = arith.constant 0 : i32
    %4 = vector.broadcast %c0_i32 : i32 to vector<1x256xi32>
    %5 = arith.cmpi eq, %2, %4 : vector<1x256xi32>
    %c15_i32 = arith.constant 15 : i32
    %6 = vector.broadcast %c15_i32 : i32 to vector<1x256xi32>
    %7 = arith.cmpi eq, %2, %6 : vector<1x256xi32>
    %c0_i32_6 = arith.constant 0 : i32
    %8 = vector.broadcast %c0_i32_6 : i32 to vector<1x256xi32>
    %9 = arith.cmpi eq, %3, %8 : vector<1x256xi32>
    %c15_i32_7 = arith.constant 15 : i32
    %10 = vector.broadcast %c15_i32_7 : i32 to vector<1x256xi32>
    %11 = arith.cmpi eq, %3, %10 : vector<1x256xi32>
    %cst = arith.constant dense<0.000000e+00> : vector<4xf32>
    %12 = vector.multi_reduction <add>, %1, %cst [1] : vector<4x256xf32> to vector<4xf32>
    %13 = vector.shape_cast %12 : vector<4xf32> to vector<4x1xf32>
    %cst_8 = arith.constant 2.560000e+02 : f32
    %14 = vector.broadcast %cst_8 : f32 to vector<4x1xf32>
    %15 = arith.divf %13, %14 : vector<4x1xf32>
    %c0_9 = arith.constant 0 : index
    %c0_10 = arith.constant 0 : index
    %16 = vector.load %arg4[%c0_9, %c0_10] : memref<4x2xf32, #tpu.memory_space<vmem>>, vector<4x2xf32>
    %17 = vector.broadcast %15 : vector<4x1xf32> to vector<4x2xf32>
    %18 = arith.mulf %16, %17 : vector<4x2xf32>
    %cst_11 = arith.constant dense<0.000000e+00> : vector<2xf32>
    %19 = vector.multi_reduction <add>, %18, %cst_11 [0] : vector<4x2xf32> to vector<2xf32>
    %20 = vector.shape_cast %19 : vector<2xf32> to vector<1x2xf32>
    %c0_12 = arith.constant 0 : index
    %c0_13 = arith.constant 0 : index
    %21 = vector.load %arg5[%c0_12, %c0_13] : memref<1x2xf32, #tpu.memory_space<vmem>>, vector<1x2xf32>
    %22 = arith.addf %20, %21 : vector<1x2xf32>
    %cst_14 = arith.constant 3.000000e-01 : f32
    %23 = vector.broadcast %cst_14 : f32 to vector<1x2xf32>
    %24 = arith.mulf %23, %22 : vector<1x2xf32>
    %25 = arith.maximumf %22, %24 : vector<1x2xf32>
    %c0_15 = arith.constant 0 : index
    %c0_16 = arith.constant 0 : index
    %26 = vector.load %arg6[%c0_15, %c0_16] : memref<4x2xf32, #tpu.memory_space<vmem>>, vector<4x2xf32>
    %27 = vector.broadcast %25 : vector<1x2xf32> to vector<4x2xf32>
    %28 = arith.mulf %26, %27 : vector<4x2xf32>
    %cst_17 = arith.constant dense<0.000000e+00> : vector<4xf32>
    %29 = vector.multi_reduction <add>, %28, %cst_17 [1] : vector<4x2xf32> to vector<4xf32>
    %30 = vector.shape_cast %29 : vector<4xf32> to vector<4x1xf32>
    %c0_18 = arith.constant 0 : index
    %c0_19 = arith.constant 0 : index
    %31 = vector.load %arg7[%c0_18, %c0_19] : memref<4x1xf32, #tpu.memory_space<vmem>>, vector<4x1xf32>
    %32 = arith.addf %30, %31 : vector<4x1xf32>
    %33 = arith.negf %32 : vector<4x1xf32>
    %34 = math.exp %33 : vector<4x1xf32>
    %cst_20 = arith.constant 1.000000e+00 : f32
    %35 = vector.broadcast %cst_20 : f32 to vector<4x1xf32>
    %36 = arith.addf %35, %34 : vector<4x1xf32>
    %37 = arith.divf %35, %36 : vector<4x1xf32>
    %c0_21 = arith.constant 0 : index
    %c0_22 = arith.constant 0 : index
    %38 = vector.load %arg8[%c0_21, %c0_22] : memref<2x4xf32, #tpu.memory_space<vmem>>, vector<2x4xf32>
    %cst_23 = arith.constant dense<0.000000e+00> : vector<2x256xf32>
    %39 = tpu.matmul %38, %1, %cst_23 {dimension_numbers = #tpu.dot_dimension_numbers<[1], [0], [0], [1], [0, 0, 1, 1], [], []>} : vector<2x4xf32>, vector<4x256xf32>, vector<2x256xf32> -> vector<2x256xf32>
    %c0_24 = arith.constant 0 : index
    %c0_25 = arith.constant 0 : index
    %40 = vector.load %arg9[%c0_24, %c0_25] : memref<2x1xf32, #tpu.memory_space<vmem>>, vector<2x1xf32>
    %41 = vector.broadcast %40 : vector<2x1xf32> to vector<2x256xf32>
    %42 = arith.addf %39, %41 : vector<2x256xf32>
    %cst_26 = arith.constant 3.000000e-01 : f32
    %43 = vector.broadcast %cst_26 : f32 to vector<2x256xf32>
    %44 = arith.mulf %43, %42 : vector<2x256xf32>
    %45 = arith.maximumf %42, %44 : vector<2x256xf32>
    %c0_27 = arith.constant 0 : index
    %c0_28 = arith.constant 0 : index
    %46 = vector.load %arg10[%c0_27, %c0_28] : memref<2x1xf32, #tpu.memory_space<vmem>>, vector<2x1xf32>
    %47 = vector.broadcast %46 : vector<2x1xf32> to vector<2x256xf32>
    %48 = arith.mulf %47, %45 : vector<2x256xf32>
    %cst_29 = arith.constant dense<0.000000e+00> : vector<256xf32>
    %49 = vector.multi_reduction <add>, %48, %cst_29 [0] : vector<2x256xf32> to vector<256xf32>
    %50 = vector.shape_cast %49 : vector<256xf32> to vector<1x256xf32>
    %c0_30 = arith.constant 0 : index
    %c0_31 = arith.constant 0 : index
    %51 = vector.load %arg11[%c0_30, %c0_31] : memref<1x1xf32, #tpu.memory_space<vmem>>, vector<1x1xf32>
    %52 = vector.broadcast %51 : vector<1x1xf32> to vector<1x256xf32>
    %53 = arith.addf %50, %52 : vector<1x256xf32>
    %54 = arith.negf %53 : vector<1x256xf32>
    %55 = math.exp %54 : vector<1x256xf32>
    %cst_32 = arith.constant 1.000000e+00 : f32
    %56 = vector.broadcast %cst_32 : f32 to vector<1x256xf32>
    %57 = arith.addf %56, %55 : vector<1x256xf32>
    %58 = arith.divf %56, %57 : vector<1x256xf32>
    %59 = vector.broadcast %37 : vector<4x1xf32> to vector<4x256xf32>
    %60 = vector.broadcast %58 : vector<1x256xf32> to vector<4x256xf32>
    %61 = arith.addf %59, %60 : vector<4x256xf32>
    %62 = arith.mulf %1, %61 : vector<4x256xf32>
    %c15_i32_33 = arith.constant 15 : i32
    %63 = tpu.dynamic_rotate %62 by %c15_i32_33 dim 1 : vector<4x256xf32>, i32 -> vector<4x256xf32>
    %c255_i32 = arith.constant 255 : i32
    %64 = tpu.dynamic_rotate %62 by %c255_i32 dim 1 : vector<4x256xf32>, i32 -> vector<4x256xf32>
    %65 = vector.shape_cast %11 : vector<1x256xi1> to vector<1x256xi1>
    %66 = vector.broadcast %65 : vector<1x256xi1> to vector<4x256xi1>
    %67 = arith.select %66, %63, %64 : vector<4x256xi1>, vector<4x256xf32>
    %c241_i32 = arith.constant 241 : i32
    %68 = tpu.dynamic_rotate %62 by %c241_i32 dim 1 : vector<4x256xf32>, i32 -> vector<4x256xf32>
    %c1_i32 = arith.constant 1 : i32
    %69 = tpu.dynamic_rotate %62 by %c1_i32 dim 1 : vector<4x256xf32>, i32 -> vector<4x256xf32>
    %70 = vector.shape_cast %9 : vector<1x256xi1> to vector<1x256xi1>
    %71 = vector.broadcast %70 : vector<1x256xi1> to vector<4x256xi1>
    %72 = arith.select %71, %68, %69 : vector<4x256xi1>, vector<4x256xf32>
    %c240_i32 = arith.constant 240 : i32
    %73 = tpu.dynamic_rotate %72 by %c240_i32 dim 1 : vector<4x256xf32>, i32 -> vector<4x256xf32>
    %c16_i32 = arith.constant 16 : i32
    %74 = tpu.dynamic_rotate %72 by %c16_i32 dim 1 : vector<4x256xf32>, i32 -> vector<4x256xf32>
    %75 = vector.shape_cast %5 : vector<1x256xi1> to vector<1x256xi1>
    %76 = vector.broadcast %75 : vector<1x256xi1> to vector<4x256xi1>
    %77 = arith.select %76, %73, %74 : vector<4x256xi1>, vector<4x256xf32>
    %78 = vector.shape_cast %7 : vector<1x256xi1> to vector<1x256xi1>
    %79 = vector.broadcast %78 : vector<1x256xi1> to vector<4x256xi1>
    %80 = arith.select %79, %74, %73 : vector<4x256xi1>, vector<4x256xf32>
    %c240_i32_34 = arith.constant 240 : i32
    %81 = tpu.dynamic_rotate %62 by %c240_i32_34 dim 1 : vector<4x256xf32>, i32 -> vector<4x256xf32>
    %c16_i32_35 = arith.constant 16 : i32
    %82 = tpu.dynamic_rotate %62 by %c16_i32_35 dim 1 : vector<4x256xf32>, i32 -> vector<4x256xf32>
    %83 = vector.shape_cast %5 : vector<1x256xi1> to vector<1x256xi1>
    %84 = vector.broadcast %83 : vector<1x256xi1> to vector<4x256xi1>
    %85 = arith.select %84, %81, %82 : vector<4x256xi1>, vector<4x256xf32>
    %86 = vector.shape_cast %7 : vector<1x256xi1> to vector<1x256xi1>
    %87 = vector.broadcast %86 : vector<1x256xi1> to vector<4x256xi1>
    %88 = arith.select %87, %82, %81 : vector<4x256xi1>, vector<4x256xf32>
    %c240_i32_36 = arith.constant 240 : i32
    %89 = tpu.dynamic_rotate %67 by %c240_i32_36 dim 1 : vector<4x256xf32>, i32 -> vector<4x256xf32>
    %c16_i32_37 = arith.constant 16 : i32
    %90 = tpu.dynamic_rotate %67 by %c16_i32_37 dim 1 : vector<4x256xf32>, i32 -> vector<4x256xf32>
    %91 = vector.shape_cast %5 : vector<1x256xi1> to vector<1x256xi1>
    %92 = vector.broadcast %91 : vector<1x256xi1> to vector<4x256xi1>
    %93 = arith.select %92, %89, %90 : vector<4x256xi1>, vector<4x256xf32>
    %94 = vector.shape_cast %7 : vector<1x256xi1> to vector<1x256xi1>
    %95 = vector.broadcast %94 : vector<1x256xi1> to vector<4x256xi1>
    %96 = arith.select %95, %90, %89 : vector<4x256xi1>, vector<4x256xf32>
    %c0_38 = arith.constant 0 : index
    %c0_39 = arith.constant 0 : index
    %c0_40 = arith.constant 0 : index
    %97 = vector.load %arg12[%c0_38, %c0_39, %c0_40] : memref<9x8x4xf32, #tpu.memory_space<vmem>>, vector<1x8x4xf32>
    %98 = vector.shape_cast %97 : vector<1x8x4xf32> to vector<8x4xf32>
    %cst_41 = arith.constant dense<0.000000e+00> : vector<8x256xf32>
    %99 = tpu.matmul %98, %77, %cst_41 {dimension_numbers = #tpu.dot_dimension_numbers<[1], [0], [0], [1], [0, 0, 1, 1], [], []>} : vector<8x4xf32>, vector<4x256xf32>, vector<8x256xf32> -> vector<8x256xf32>
    %c1 = arith.constant 1 : index
    %c0_42 = arith.constant 0 : index
    %c0_43 = arith.constant 0 : index
    %100 = vector.load %arg12[%c1, %c0_42, %c0_43] : memref<9x8x4xf32, #tpu.memory_space<vmem>>, vector<1x8x4xf32>
    %101 = vector.shape_cast %100 : vector<1x8x4xf32> to vector<8x4xf32>
    %cst_44 = arith.constant dense<0.000000e+00> : vector<8x256xf32>
    %102 = tpu.matmul %101, %85, %cst_44 {dimension_numbers = #tpu.dot_dimension_numbers<[1], [0], [0], [1], [0, 0, 1, 1], [], []>} : vector<8x4xf32>, vector<4x256xf32>, vector<8x256xf32> -> vector<8x256xf32>
    %103 = arith.addf %99, %102 : vector<8x256xf32>
    %c2 = arith.constant 2 : index
    %c0_45 = arith.constant 0 : index
    %c0_46 = arith.constant 0 : index
    %104 = vector.load %arg12[%c2, %c0_45, %c0_46] : memref<9x8x4xf32, #tpu.memory_space<vmem>>, vector<1x8x4xf32>
    %105 = vector.shape_cast %104 : vector<1x8x4xf32> to vector<8x4xf32>
    %cst_47 = arith.constant dense<0.000000e+00> : vector<8x256xf32>
    %106 = tpu.matmul %105, %93, %cst_47 {dimension_numbers = #tpu.dot_dimension_numbers<[1], [0], [0], [1], [0, 0, 1, 1], [], []>} : vector<8x4xf32>, vector<4x256xf32>, vector<8x256xf32> -> vector<8x256xf32>
    %107 = arith.addf %103, %106 : vector<8x256xf32>
    %c3 = arith.constant 3 : index
    %c0_48 = arith.constant 0 : index
    %c0_49 = arith.constant 0 : index
    %108 = vector.load %arg12[%c3, %c0_48, %c0_49] : memref<9x8x4xf32, #tpu.memory_space<vmem>>, vector<1x8x4xf32>
    %109 = vector.shape_cast %108 : vector<1x8x4xf32> to vector<8x4xf32>
    %cst_50 = arith.constant dense<0.000000e+00> : vector<8x256xf32>
    %110 = tpu.matmul %109, %72, %cst_50 {dimension_numbers = #tpu.dot_dimension_numbers<[1], [0], [0], [1], [0, 0, 1, 1], [], []>} : vector<8x4xf32>, vector<4x256xf32>, vector<8x256xf32> -> vector<8x256xf32>
    %111 = arith.addf %107, %110 : vector<8x256xf32>
    %c4 = arith.constant 4 : index
    %c0_51 = arith.constant 0 : index
    %c0_52 = arith.constant 0 : index
    %112 = vector.load %arg12[%c4, %c0_51, %c0_52] : memref<9x8x4xf32, #tpu.memory_space<vmem>>, vector<1x8x4xf32>
    %113 = vector.shape_cast %112 : vector<1x8x4xf32> to vector<8x4xf32>
    %cst_53 = arith.constant dense<0.000000e+00> : vector<8x256xf32>
    %114 = tpu.matmul %113, %62, %cst_53 {dimension_numbers = #tpu.dot_dimension_numbers<[1], [0], [0], [1], [0, 0, 1, 1], [], []>} : vector<8x4xf32>, vector<4x256xf32>, vector<8x256xf32> -> vector<8x256xf32>
    %115 = arith.addf %111, %114 : vector<8x256xf32>
    %c5 = arith.constant 5 : index
    %c0_54 = arith.constant 0 : index
    %c0_55 = arith.constant 0 : index
    %116 = vector.load %arg12[%c5, %c0_54, %c0_55] : memref<9x8x4xf32, #tpu.memory_space<vmem>>, vector<1x8x4xf32>
    %117 = vector.shape_cast %116 : vector<1x8x4xf32> to vector<8x4xf32>
    %cst_56 = arith.constant dense<0.000000e+00> : vector<8x256xf32>
    %118 = tpu.matmul %117, %67, %cst_56 {dimension_numbers = #tpu.dot_dimension_numbers<[1], [0], [0], [1], [0, 0, 1, 1], [], []>} : vector<8x4xf32>, vector<4x256xf32>, vector<8x256xf32> -> vector<8x256xf32>
    %119 = arith.addf %115, %118 : vector<8x256xf32>
    %c6 = arith.constant 6 : index
    %c0_57 = arith.constant 0 : index
    %c0_58 = arith.constant 0 : index
    %120 = vector.load %arg12[%c6, %c0_57, %c0_58] : memref<9x8x4xf32, #tpu.memory_space<vmem>>, vector<1x8x4xf32>
    %121 = vector.shape_cast %120 : vector<1x8x4xf32> to vector<8x4xf32>
    %cst_59 = arith.constant dense<0.000000e+00> : vector<8x256xf32>
    %122 = tpu.matmul %121, %80, %cst_59 {dimension_numbers = #tpu.dot_dimension_numbers<[1], [0], [0], [1], [0, 0, 1, 1], [], []>} : vector<8x4xf32>, vector<4x256xf32>, vector<8x256xf32> -> vector<8x256xf32>
    %123 = arith.addf %119, %122 : vector<8x256xf32>
    %c7 = arith.constant 7 : index
    %c0_60 = arith.constant 0 : index
    %c0_61 = arith.constant 0 : index
    %124 = vector.load %arg12[%c7, %c0_60, %c0_61] : memref<9x8x4xf32, #tpu.memory_space<vmem>>, vector<1x8x4xf32>
    %125 = vector.shape_cast %124 : vector<1x8x4xf32> to vector<8x4xf32>
    %cst_62 = arith.constant dense<0.000000e+00> : vector<8x256xf32>
    %126 = tpu.matmul %125, %88, %cst_62 {dimension_numbers = #tpu.dot_dimension_numbers<[1], [0], [0], [1], [0, 0, 1, 1], [], []>} : vector<8x4xf32>, vector<4x256xf32>, vector<8x256xf32> -> vector<8x256xf32>
    %127 = arith.addf %123, %126 : vector<8x256xf32>
    %c8 = arith.constant 8 : index
    %c0_63 = arith.constant 0 : index
    %c0_64 = arith.constant 0 : index
    %128 = vector.load %arg12[%c8, %c0_63, %c0_64] : memref<9x8x4xf32, #tpu.memory_space<vmem>>, vector<1x8x4xf32>
    %129 = vector.shape_cast %128 : vector<1x8x4xf32> to vector<8x4xf32>
    %cst_65 = arith.constant dense<0.000000e+00> : vector<8x256xf32>
    %130 = tpu.matmul %129, %96, %cst_65 {dimension_numbers = #tpu.dot_dimension_numbers<[1], [0], [0], [1], [0, 0, 1, 1], [], []>} : vector<8x4xf32>, vector<4x256xf32>, vector<8x256xf32> -> vector<8x256xf32>
    %131 = arith.addf %127, %130 : vector<8x256xf32>
    %c0_66 = arith.constant 0 : index
    %c0_67 = arith.constant 0 : index
    %132 = vector.load %arg13[%c0_66, %c0_67] : memref<8x1xf32, #tpu.memory_space<vmem>>, vector<8x1xf32>
    %133 = vector.broadcast %132 : vector<8x1xf32> to vector<8x256xf32>
    %134 = arith.addf %131, %133 : vector<8x256xf32>
    %cst_68 = arith.constant 3.000000e-01 : f32
    %135 = vector.broadcast %cst_68 : f32 to vector<8x256xf32>
    %136 = arith.mulf %135, %134 : vector<8x256xf32>
    %137 = arith.maximumf %134, %136 : vector<8x256xf32>
    %c15_i32_69 = arith.constant 15 : i32
    %138 = tpu.dynamic_rotate %137 by %c15_i32_69 dim 1 : vector<8x256xf32>, i32 -> vector<8x256xf32>
    %c255_i32_70 = arith.constant 255 : i32
    %139 = tpu.dynamic_rotate %137 by %c255_i32_70 dim 1 : vector<8x256xf32>, i32 -> vector<8x256xf32>
    %140 = vector.shape_cast %11 : vector<1x256xi1> to vector<1x256xi1>
    %141 = vector.broadcast %140 : vector<1x256xi1> to vector<8x256xi1>
    %142 = arith.select %141, %138, %139 : vector<8x256xi1>, vector<8x256xf32>
    %c241_i32_71 = arith.constant 241 : i32
    %143 = tpu.dynamic_rotate %137 by %c241_i32_71 dim 1 : vector<8x256xf32>, i32 -> vector<8x256xf32>
    %c1_i32_72 = arith.constant 1 : i32
    %144 = tpu.dynamic_rotate %137 by %c1_i32_72 dim 1 : vector<8x256xf32>, i32 -> vector<8x256xf32>
    %145 = vector.shape_cast %9 : vector<1x256xi1> to vector<1x256xi1>
    %146 = vector.broadcast %145 : vector<1x256xi1> to vector<8x256xi1>
    %147 = arith.select %146, %143, %144 : vector<8x256xi1>, vector<8x256xf32>
    %c240_i32_73 = arith.constant 240 : i32
    %148 = tpu.dynamic_rotate %147 by %c240_i32_73 dim 1 : vector<8x256xf32>, i32 -> vector<8x256xf32>
    %c16_i32_74 = arith.constant 16 : i32
    %149 = tpu.dynamic_rotate %147 by %c16_i32_74 dim 1 : vector<8x256xf32>, i32 -> vector<8x256xf32>
    %150 = vector.shape_cast %5 : vector<1x256xi1> to vector<1x256xi1>
    %151 = vector.broadcast %150 : vector<1x256xi1> to vector<8x256xi1>
    %152 = arith.select %151, %148, %149 : vector<8x256xi1>, vector<8x256xf32>
    %153 = vector.shape_cast %7 : vector<1x256xi1> to vector<1x256xi1>
    %154 = vector.broadcast %153 : vector<1x256xi1> to vector<8x256xi1>
    %155 = arith.select %154, %149, %148 : vector<8x256xi1>, vector<8x256xf32>
    %c240_i32_75 = arith.constant 240 : i32
    %156 = tpu.dynamic_rotate %137 by %c240_i32_75 dim 1 : vector<8x256xf32>, i32 -> vector<8x256xf32>
    %c16_i32_76 = arith.constant 16 : i32
    %157 = tpu.dynamic_rotate %137 by %c16_i32_76 dim 1 : vector<8x256xf32>, i32 -> vector<8x256xf32>
    %158 = vector.shape_cast %5 : vector<1x256xi1> to vector<1x256xi1>
    %159 = vector.broadcast %158 : vector<1x256xi1> to vector<8x256xi1>
    %160 = arith.select %159, %156, %157 : vector<8x256xi1>, vector<8x256xf32>
    %161 = vector.shape_cast %7 : vector<1x256xi1> to vector<1x256xi1>
    %162 = vector.broadcast %161 : vector<1x256xi1> to vector<8x256xi1>
    %163 = arith.select %162, %157, %156 : vector<8x256xi1>, vector<8x256xf32>
    %c240_i32_77 = arith.constant 240 : i32
    %164 = tpu.dynamic_rotate %142 by %c240_i32_77 dim 1 : vector<8x256xf32>, i32 -> vector<8x256xf32>
    %c16_i32_78 = arith.constant 16 : i32
    %165 = tpu.dynamic_rotate %142 by %c16_i32_78 dim 1 : vector<8x256xf32>, i32 -> vector<8x256xf32>
    %166 = vector.shape_cast %5 : vector<1x256xi1> to vector<1x256xi1>
    %167 = vector.broadcast %166 : vector<1x256xi1> to vector<8x256xi1>
    %168 = arith.select %167, %164, %165 : vector<8x256xi1>, vector<8x256xf32>
    %169 = vector.shape_cast %7 : vector<1x256xi1> to vector<1x256xi1>
    %170 = vector.broadcast %169 : vector<1x256xi1> to vector<8x256xi1>
    %171 = arith.select %170, %165, %164 : vector<8x256xi1>, vector<8x256xf32>
    %c0_79 = arith.constant 0 : index
    %c0_80 = arith.constant 0 : index
    %c0_81 = arith.constant 0 : index
    %172 = vector.load %arg14[%c0_79, %c0_80, %c0_81] : memref<9x8x8xf32, #tpu.memory_space<vmem>>, vector<1x8x8xf32>
    %173 = vector.shape_cast %172 : vector<1x8x8xf32> to vector<8x8xf32>
    %cst_82 = arith.constant dense<0.000000e+00> : vector<8x256xf32>
    %174 = tpu.matmul %173, %152, %cst_82 {dimension_numbers = #tpu.dot_dimension_numbers<[1], [0], [0], [1], [0, 0, 1, 1], [], []>} : vector<8x8xf32>, vector<8x256xf32>, vector<8x256xf32> -> vector<8x256xf32>
    %c1_83 = arith.constant 1 : index
    %c0_84 = arith.constant 0 : index
    %c0_85 = arith.constant 0 : index
    %175 = vector.load %arg14[%c1_83, %c0_84, %c0_85] : memref<9x8x8xf32, #tpu.memory_space<vmem>>, vector<1x8x8xf32>
    %176 = vector.shape_cast %175 : vector<1x8x8xf32> to vector<8x8xf32>
    %cst_86 = arith.constant dense<0.000000e+00> : vector<8x256xf32>
    %177 = tpu.matmul %176, %160, %cst_86 {dimension_numbers = #tpu.dot_dimension_numbers<[1], [0], [0], [1], [0, 0, 1, 1], [], []>} : vector<8x8xf32>, vector<8x256xf32>, vector<8x256xf32> -> vector<8x256xf32>
    %178 = arith.addf %174, %177 : vector<8x256xf32>
    %c2_87 = arith.constant 2 : index
    %c0_88 = arith.constant 0 : index
    %c0_89 = arith.constant 0 : index
    %179 = vector.load %arg14[%c2_87, %c0_88, %c0_89] : memref<9x8x8xf32, #tpu.memory_space<vmem>>, vector<1x8x8xf32>
    %180 = vector.shape_cast %179 : vector<1x8x8xf32> to vector<8x8xf32>
    %cst_90 = arith.constant dense<0.000000e+00> : vector<8x256xf32>
    %181 = tpu.matmul %180, %168, %cst_90 {dimension_numbers = #tpu.dot_dimension_numbers<[1], [0], [0], [1], [0, 0, 1, 1], [], []>} : vector<8x8xf32>, vector<8x256xf32>, vector<8x256xf32> -> vector<8x256xf32>
    %182 = arith.addf %178, %181 : vector<8x256xf32>
    %c3_91 = arith.constant 3 : index
    %c0_92 = arith.constant 0 : index
    %c0_93 = arith.constant 0 : index
    %183 = vector.load %arg14[%c3_91, %c0_92, %c0_93] : memref<9x8x8xf32, #tpu.memory_space<vmem>>, vector<1x8x8xf32>
    %184 = vector.shape_cast %183 : vector<1x8x8xf32> to vector<8x8xf32>
    %cst_94 = arith.constant dense<0.000000e+00> : vector<8x256xf32>
    %185 = tpu.matmul %184, %147, %cst_94 {dimension_numbers = #tpu.dot_dimension_numbers<[1], [0], [0], [1], [0, 0, 1, 1], [], []>} : vector<8x8xf32>, vector<8x256xf32>, vector<8x256xf32> -> vector<8x256xf32>
    %186 = arith.addf %182, %185 : vector<8x256xf32>
    %c4_95 = arith.constant 4 : index
    %c0_96 = arith.constant 0 : index
    %c0_97 = arith.constant 0 : index
    %187 = vector.load %arg14[%c4_95, %c0_96, %c0_97] : memref<9x8x8xf32, #tpu.memory_space<vmem>>, vector<1x8x8xf32>
    %188 = vector.shape_cast %187 : vector<1x8x8xf32> to vector<8x8xf32>
    %cst_98 = arith.constant dense<0.000000e+00> : vector<8x256xf32>
    %189 = tpu.matmul %188, %137, %cst_98 {dimension_numbers = #tpu.dot_dimension_numbers<[1], [0], [0], [1], [0, 0, 1, 1], [], []>} : vector<8x8xf32>, vector<8x256xf32>, vector<8x256xf32> -> vector<8x256xf32>
    %190 = arith.addf %186, %189 : vector<8x256xf32>
    %c5_99 = arith.constant 5 : index
    %c0_100 = arith.constant 0 : index
    %c0_101 = arith.constant 0 : index
    %191 = vector.load %arg14[%c5_99, %c0_100, %c0_101] : memref<9x8x8xf32, #tpu.memory_space<vmem>>, vector<1x8x8xf32>
    %192 = vector.shape_cast %191 : vector<1x8x8xf32> to vector<8x8xf32>
    %cst_102 = arith.constant dense<0.000000e+00> : vector<8x256xf32>
    %193 = tpu.matmul %192, %142, %cst_102 {dimension_numbers = #tpu.dot_dimension_numbers<[1], [0], [0], [1], [0, 0, 1, 1], [], []>} : vector<8x8xf32>, vector<8x256xf32>, vector<8x256xf32> -> vector<8x256xf32>
    %194 = arith.addf %190, %193 : vector<8x256xf32>
    %c6_103 = arith.constant 6 : index
    %c0_104 = arith.constant 0 : index
    %c0_105 = arith.constant 0 : index
    %195 = vector.load %arg14[%c6_103, %c0_104, %c0_105] : memref<9x8x8xf32, #tpu.memory_space<vmem>>, vector<1x8x8xf32>
    %196 = vector.shape_cast %195 : vector<1x8x8xf32> to vector<8x8xf32>
    %cst_106 = arith.constant dense<0.000000e+00> : vector<8x256xf32>
    %197 = tpu.matmul %196, %155, %cst_106 {dimension_numbers = #tpu.dot_dimension_numbers<[1], [0], [0], [1], [0, 0, 1, 1], [], []>} : vector<8x8xf32>, vector<8x256xf32>, vector<8x256xf32> -> vector<8x256xf32>
    %198 = arith.addf %194, %197 : vector<8x256xf32>
    %c7_107 = arith.constant 7 : index
    %c0_108 = arith.constant 0 : index
    %c0_109 = arith.constant 0 : index
    %199 = vector.load %arg14[%c7_107, %c0_108, %c0_109] : memref<9x8x8xf32, #tpu.memory_space<vmem>>, vector<1x8x8xf32>
    %200 = vector.shape_cast %199 : vector<1x8x8xf32> to vector<8x8xf32>
    %cst_110 = arith.constant dense<0.000000e+00> : vector<8x256xf32>
    %201 = tpu.matmul %200, %163, %cst_110 {dimension_numbers = #tpu.dot_dimension_numbers<[1], [0], [0], [1], [0, 0, 1, 1], [], []>} : vector<8x8xf32>, vector<8x256xf32>, vector<8x256xf32> -> vector<8x256xf32>
    %202 = arith.addf %198, %201 : vector<8x256xf32>
    %c8_111 = arith.constant 8 : index
    %c0_112 = arith.constant 0 : index
    %c0_113 = arith.constant 0 : index
    %203 = vector.load %arg14[%c8_111, %c0_112, %c0_113] : memref<9x8x8xf32, #tpu.memory_space<vmem>>, vector<1x8x8xf32>
    %204 = vector.shape_cast %203 : vector<1x8x8xf32> to vector<8x8xf32>
    %cst_114 = arith.constant dense<0.000000e+00> : vector<8x256xf32>
    %205 = tpu.matmul %204, %171, %cst_114 {dimension_numbers = #tpu.dot_dimension_numbers<[1], [0], [0], [1], [0, 0, 1, 1], [], []>} : vector<8x8xf32>, vector<8x256xf32>, vector<8x256xf32> -> vector<8x256xf32>
    %206 = arith.addf %202, %205 : vector<8x256xf32>
    %c0_115 = arith.constant 0 : index
    %c0_116 = arith.constant 0 : index
    %207 = vector.load %arg15[%c0_115, %c0_116] : memref<8x1xf32, #tpu.memory_space<vmem>>, vector<8x1xf32>
    %208 = vector.broadcast %207 : vector<8x1xf32> to vector<8x256xf32>
    %209 = arith.addf %206, %208 : vector<8x256xf32>
    %cst_117 = arith.constant 3.000000e-01 : f32
    %210 = vector.broadcast %cst_117 : f32 to vector<8x256xf32>
    %211 = arith.mulf %210, %209 : vector<8x256xf32>
    %212 = arith.maximumf %209, %211 : vector<8x256xf32>
    %c0_118 = arith.constant 0 : index
    %c0_119 = arith.constant 0 : index
    %213 = vector.load %arg16[%c0_118, %c0_119] : memref<8x4xf32, #tpu.memory_space<vmem>>, vector<8x4xf32>
    %cst_120 = arith.constant dense<0.000000e+00> : vector<8x256xf32>
    %214 = tpu.matmul %213, %1, %cst_120 {dimension_numbers = #tpu.dot_dimension_numbers<[1], [0], [0], [1], [0, 0, 1, 1], [], []>} : vector<8x4xf32>, vector<4x256xf32>, vector<8x256xf32> -> vector<8x256xf32>
    %c0_121 = arith.constant 0 : index
    %c0_122 = arith.constant 0 : index
    %215 = vector.load %arg17[%c0_121, %c0_122] : memref<8x1xf32, #tpu.memory_space<vmem>>, vector<8x1xf32>
    %216 = vector.broadcast %215 : vector<8x1xf32> to vector<8x256xf32>
    %217 = arith.addf %214, %216 : vector<8x256xf32>
    %218 = arith.addf %212, %217 : vector<8x256xf32>
    %c0_123 = arith.constant 0 : index
    %c0_124 = arith.constant 0 : index
    %c0_125 = arith.constant 0 : index
    %219 = vector.load %arg18[%c0_123, %c0_124, %c0_125] : memref<1x8x256xf32, #tpu.memory_space<vmem>>, vector<1x8x256xf32>
    %220 = vector.shape_cast %219 : vector<1x8x256xf32> to vector<8x256xf32>
    %221 = vector.shape_cast %218 : vector<8x256xf32> to vector<1x8x256xf32>
    tpu.vector_store %arg18[%c0_123, %c0_124, %c0_125], %221 {strides = array<i32>} : memref<1x8x256xf32, #tpu.memory_space<vmem>>, vector<1x8x256xf32>,
    return
  }
  func.func @transform_0(%arg0: i32) -> (i32, i32) {
    %c0_i32 = arith.constant 0 : i32
    %c0_i32_0 = arith.constant 0 : i32
    %c0_i32_1 = arith.constant 0 : i32
    return %c0_i32, %c0_i32_0 : i32, i32
  }
  func.func @transform_1(%arg0: i32) -> (i32, i32) {
    %c0_i32 = arith.constant 0 : i32
    %c0_i32_0 = arith.constant 0 : i32
    %c0_i32_1 = arith.constant 0 : i32
    return %c0_i32, %c0_i32_0 : i32, i32
  }
  func.func @transform_2(%arg0: i32) -> (i32, i32, i32) {
    %c0_i32 = arith.constant 0 : i32
    %c0_i32_0 = arith.constant 0 : i32
    %c0_i32_1 = arith.constant 0 : i32
    return %arg0, %c0_i32, %c0_i32_0 : i32, i32, i32
  }
  func.func @transform_3(%arg0: i32) -> (i32, i32) {
    %c0_i32 = arith.constant 0 : i32
    %c0_i32_0 = arith.constant 0 : i32
    %c0_i32_1 = arith.constant 0 : i32
    return %c0_i32, %c0_i32_0 : i32, i32
  }
  func.func @transform_4(%arg0: i32) -> (i32, i32) {
    %c0_i32 = arith.constant 0 : i32
    %c0_i32_0 = arith.constant 0 : i32
    %c0_i32_1 = arith.constant 0 : i32
    return %c0_i32, %c0_i32_0 : i32, i32
  }
  func.func @transform_5(%arg0: i32) -> (i32, i32) {
    %c0_i32 = arith.constant 0 : i32
    %c0_i32_0 = arith.constant 0 : i32
    %c0_i32_1 = arith.constant 0 : i32
    return %c0_i32, %c0_i32_0 : i32, i32
  }
  func.func @transform_6(%arg0: i32) -> (i32, i32) {
    %c0_i32 = arith.constant 0 : i32
    %c0_i32_0 = arith.constant 0 : i32
    %c0_i32_1 = arith.constant 0 : i32
    return %c0_i32, %c0_i32_0 : i32, i32
  }
  func.func @transform_7(%arg0: i32) -> (i32, i32) {
    %c0_i32 = arith.constant 0 : i32
    %c0_i32_0 = arith.constant 0 : i32
    %c0_i32_1 = arith.constant 0 : i32
    return %c0_i32, %c0_i32_0 : i32, i32
  }
  func.func @transform_8(%arg0: i32) -> (i32, i32) {
    %c0_i32 = arith.constant 0 : i32
    %c0_i32_0 = arith.constant 0 : i32
    %c0_i32_1 = arith.constant 0 : i32
    return %c0_i32, %c0_i32_0 : i32, i32
  }
  func.func @transform_9(%arg0: i32) -> (i32, i32) {
    %c0_i32 = arith.constant 0 : i32
    %c0_i32_0 = arith.constant 0 : i32
    %c0_i32_1 = arith.constant 0 : i32
    return %c0_i32, %c0_i32_0 : i32, i32
  }
  func.func @transform_10(%arg0: i32) -> (i32, i32) {
    %c0_i32 = arith.constant 0 : i32
    %c0_i32_0 = arith.constant 0 : i32
    %c0_i32_1 = arith.constant 0 : i32
    return %c0_i32, %c0_i32_0 : i32, i32
  }
  func.func @transform_11(%arg0: i32) -> (i32, i32, i32) {
    %c0_i32 = arith.constant 0 : i32
    %c0_i32_0 = arith.constant 0 : i32
    %c0_i32_1 = arith.constant 0 : i32
    %c0_i32_2 = arith.constant 0 : i32
    return %c0_i32, %c0_i32_0, %c0_i32_1 : i32, i32, i32
  }
  func.func @transform_12(%arg0: i32) -> (i32, i32) {
    %c0_i32 = arith.constant 0 : i32
    %c0_i32_0 = arith.constant 0 : i32
    %c0_i32_1 = arith.constant 0 : i32
    return %c0_i32, %c0_i32_0 : i32, i32
  }
  func.func @transform_13(%arg0: i32) -> (i32, i32, i32) {
    %c0_i32 = arith.constant 0 : i32
    %c0_i32_0 = arith.constant 0 : i32
    %c0_i32_1 = arith.constant 0 : i32
    %c0_i32_2 = arith.constant 0 : i32
    return %c0_i32, %c0_i32_0, %c0_i32_1 : i32, i32, i32
  }
  func.func @transform_14(%arg0: i32) -> (i32, i32) {
    %c0_i32 = arith.constant 0 : i32
    %c0_i32_0 = arith.constant 0 : i32
    %c0_i32_1 = arith.constant 0 : i32
    return %c0_i32, %c0_i32_0 : i32, i32
  }
  func.func @transform_15(%arg0: i32) -> (i32, i32) {
    %c0_i32 = arith.constant 0 : i32
    %c0_i32_0 = arith.constant 0 : i32
    %c0_i32_1 = arith.constant 0 : i32
    return %c0_i32, %c0_i32_0 : i32, i32
  }
  func.func @transform_16(%arg0: i32) -> (i32, i32) {
    %c0_i32 = arith.constant 0 : i32
    %c0_i32_0 = arith.constant 0 : i32
    %c0_i32_1 = arith.constant 0 : i32
    return %c0_i32, %c0_i32_0 : i32, i32
  }
  func.func @transform_17(%arg0: i32) -> (i32, i32, i32) {
    %c0_i32 = arith.constant 0 : i32
    %c0_i32_0 = arith.constant 0 : i32
    %c0_i32_1 = arith.constant 0 : i32
    return %arg0, %c0_i32, %c0_i32_0 : i32, i32, i32
  }
}

</mosaic_0001>

<llo_original>
// kernel: tpu_custom_call.1
$region0: #{tpu_custom_call.1}
  #allocation0 [shape = 'u32[]', space=smem, size = 0x4, offset = 0x4, fixed_abs, tag = 'smem constant byte address 0x4 - core index']
  #allocation1 [shape = 'u32[144,128]{1,0:T(1,128)}', space=vmem, size = 0x12000, scoped, tag = 'internal scratch']
  #allocation2 [shape = 'f32[1,1]{1,0:T(1,128)S(1)}', space=vmem, size = 0x200, scoped, tag = 'scoped memory for tpu_custom_call.1']
  %s0 = inlined_call_operand.vmem [shape: s32[1,256], index: 0, kind: input, shape index: {}]
  %s1 = inlined_call_operand.vmem [shape: s32[1,256], index: 1, kind: input, shape index: {}]
  %s2 = inlined_call_operand.vmem [shape: f32[2,4,256], index: 2, kind: input, shape index: {}]
  %s3 = inlined_call_operand.vmem [shape: f32[4,2], index: 3, kind: input, shape index: {}]
  %s4 = inlined_call_operand.vmem [shape: f32[1,2], index: 4, kind: input, shape index: {}]
  %s5 = inlined_call_operand.vmem [shape: f32[4,2], index: 5, kind: input, shape index: {}]
  %s6 = inlined_call_operand.vmem [shape: f32[4,1], index: 6, kind: input, shape index: {}]
  %s7 = inlined_call_operand.vmem [shape: f32[2,4], index: 7, kind: input, shape index: {}]
  %s8 = inlined_call_operand.vmem [shape: f32[2,1], index: 8, kind: input, shape index: {}]
  %s9 = inlined_call_operand.vmem [shape: f32[2,1], index: 9, kind: input, shape index: {}]
  %s10 = inlined_call_operand.<no memory space> [shape: f32[1,1], index: 10, kind: input, shape index: {}]
  %s11 = inlined_call_operand.vmem [shape: f32[9,8,4], index: 11, kind: input, shape index: {}]
  %s12 = inlined_call_operand.vmem [shape: f32[8,1], index: 12, kind: input, shape index: {}]
  %s13 = inlined_call_operand.vmem [shape: f32[9,8,8], index: 13, kind: input, shape index: {}]
  %s14 = inlined_call_operand.vmem [shape: f32[8,1], index: 14, kind: input, shape index: {}]
  %s15 = inlined_call_operand.vmem [shape: f32[8,4], index: 15, kind: input, shape index: {}]
  %s16 = inlined_call_operand.vmem [shape: f32[8,1], index: 16, kind: input, shape index: {}]
  %s17 = inlined_call_operand.hbm [shape: f32[2,8,256], index: 17, kind: output, shape index: {}]
  %s18 = sld [smem:[#allocation0]]
  $region101: #{tpu_custom_call.1} parent=0
    _
  %s20 = ssub.s32 1, %s18
  %s21 = scalar_select 0, %s20, %s18
  %v22 = vstv %s10
  %23 = vst [vmem:[#allocation2] sm:$0x1] %v22
  $region1: #{tpu_custom_call.1} parent=0
    #allocation3 [shape = 'u8[16384]{0}', space=vmem, size = 0x4000, scoped, tag = 'output window, operand 0']
    #allocation4 [shape = 's32[2]{0}', space=sflag, size = 0x8, scoped, tag = 'scoped memory for tpu_custom_call.1']
    %24 = vsyncpa [#allocation4], 0
    %s25 = scalar_lea.sflag [#allocation4], 1
    %26 = vsyncpa %s25, 0
    loop: start=0, step=1, limit=4
    $region2: #{tpu_custom_call.1} parent=1 // loop_pre_header
      _
    $region3: #{tpu_custom_call.1} parent=1 // loop_header
      %s28 = sphi 0, %s32
      %p29 = scmp.ge.s32.totalorder %s28, 4
      %s36 = sphi 0, %s36
      %s38 = sphi 0, %s36
      %s39 = sphi 0, %s38
      %s53 = sphi 0, %s39
      %s57 = sphi 0, %s57
      %s59 = sphi 0, %s57
      %s60 = sphi 0, %s59
      %s74 = sphi 0, %s60
      %s80 = sphi 0, %s82
      %s83 = sphi 0, %s80
      %s84 = sphi 0, %s83
      %s100 = sphi 0, %s84
      %s104 = sphi 0, %s104
      %s106 = sphi 0, %s104
      %s107 = sphi 0, %s106
      %s121 = sphi 0, %s107
      %s125 = sphi 0, %s125
      %s127 = sphi 0, %s125
      %s128 = sphi 0, %s127
      %s142 = sphi 0, %s128
      %s146 = sphi 0, %s146
      %s148 = sphi 0, %s146
      %s149 = sphi 0, %s148
      %s163 = sphi 0, %s149
      %s167 = sphi 0, %s167
      %s169 = sphi 0, %s167
      %s170 = sphi 0, %s169
      %s184 = sphi 0, %s170
      %s188 = sphi 0, %s188
      %s190 = sphi 0, %s188
      %s191 = sphi 0, %s190
      %s205 = sphi 0, %s191
      %s209 = sphi 0, %s209
      %s211 = sphi 0, %s209
      %s212 = sphi 0, %s211
      %s226 = sphi 0, %s212
      %s230 = sphi 0, %s230
      %s232 = sphi 0, %s230
      %s233 = sphi 0, %s232
      %s247 = sphi 0, %s233
      %s251 = sphi 0, %s251
      %s253 = sphi 0, %s251
      %s254 = sphi 0, %s253
      %s268 = sphi 0, %s254
      %s272 = sphi 0, %s272
      %s274 = sphi 0, %s272
      %s275 = sphi 0, %s274
      %s289 = sphi 0, %s275
      %s293 = sphi 0, %s293
      %s295 = sphi 0, %s293
      %s296 = sphi 0, %s295
      %s310 = sphi 0, %s296
      %s314 = sphi 0, %s314
      %s316 = sphi 0, %s314
      %s317 = sphi 0, %s316
      %s331 = sphi 0, %s317
      %s335 = sphi 0, %s335
      %s337 = sphi 0, %s335
      %s338 = sphi 0, %s337
      %s352 = sphi 0, %s338
      %s356 = sphi 0, %s356
      %s358 = sphi 0, %s356
      %s359 = sphi 0, %s358
      %s373 = sphi 0, %s359
      %s377 = sphi 0, %s377
      %s379 = sphi 0, %s377
      %s380 = sphi 0, %s379
      %s394 = sphi 0, %s380
      %s400 = sphi 0, %s402
      %s403 = sphi 0, %s400
      %s404 = sphi 0, %s403
      %s420 = sphi 0, %s404
    $region4: #{tpu_custom_call.1} parent=1 // loop_header_branch
      %31 = sbr.rel (%p29) target = $region8
    $region5: #{tpu_custom_call.1} parent=1 // loop_body
      %s33 = ssub.s32 %s28, 1
      %s34 = ssub.s32 %s28, 2
      %s35 = sadd.s32 %s28, 1
      %s37 = sadd.s32 %s36, 1
      %p40 = scmp.eq.s32.totalorder %s28, 1
      %p41 = scmp.ne.s32.totalorder %s36, %s38
      %p42 = scmp.eq.s32.totalorder %s28, 0
      %p43 = por %p41, %p42
      %p44 = scmp.ne.s32.totalorder %s36, %s38
      %p45 = scmp.eq.s32.totalorder %s33, 1
      %p46 = por %p44, %p45
      %p47 = scmp.ne.s32.totalorder %s38, %s39
      %p48 = scmp.eq.s32.totalorder %s33, 0
      %p49 = por %p47, %p48
      %p50 = scmp.ne.s32.totalorder %s38, %s39
      %p51 = scmp.eq.s32.totalorder %s34, 1
      %p52 = por %p50, %p51
      %p54 = scmp.ne.s32.totalorder %s39, %s53
      %p55 = scmp.eq.s32.totalorder %s34, 0
      %p56 = por %p54, %p55
      %s58 = sadd.s32 %s57, 1
      %p61 = scmp.eq.s32.totalorder %s28, 1
      %p62 = scmp.ne.s32.totalorder %s57, %s59
      %p63 = scmp.eq.s32.totalorder %s28, 0
      %p64 = por %p62, %p63
      %p65 = scmp.ne.s32.totalorder %s57, %s59
      %p66 = scmp.eq.s32.totalorder %s33, 1
      %p67 = por %p65, %p66
      %p68 = scmp.ne.s32.totalorder %s59, %s60
      %p69 = scmp.eq.s32.totalorder %s33, 0
      %p70 = por %p68, %p69
      %p71 = scmp.ne.s32.totalorder %s59, %s60
      %p72 = scmp.eq.s32.totalorder %s34, 1
      %p73 = por %p71, %p72
      %p75 = scmp.ne.s32.totalorder %s60, %s74
      %p76 = scmp.eq.s32.totalorder %s34, 0
      %p77 = por %p75, %p76
      %s78 = ssub.s32 %s28, %s35
      %p79 = scmp.eq.s32.totalorder %s78, 0
      %s81 = sadd.s32 %s80, 1
      %s82 = scalar_select %p79, %s80, %s81
      %p85 = pneg %p79
      %p86 = scmp.eq.s32.totalorder %s28, 1
      %p87 = por %p85, %p86
      %p88 = scmp.ne.s32.totalorder %s80, %s83
      %p89 = scmp.eq.s32.totalorder %s28, 0
      %p90 = por %p88, %p89
      %p91 = scmp.ne.s32.totalorder %s80, %s83
      %p92 = scmp.eq.s32.totalorder %s33, 1
      %p93 = por %p91, %p92
      %p94 = scmp.ne.s32.totalorder %s83, %s84
      %p95 = scmp.eq.s32.totalorder %s33, 0
      %p96 = por %p94, %p95
      %p97 = scmp.ne.s32.totalorder %s83, %s84
      %p98 = scmp.eq.s32.totalorder %s34, 1
      %p99 = por %p97, %p98
      %p101 = scmp.ne.s32.totalorder %s84, %s100
      %p102 = scmp.eq.s32.totalorder %s34, 0
      %p103 = por %p101, %p102
      %s105 = sadd.s32 %s104, 1
      %p108 = scmp.eq.s32.totalorder %s28, 1
      %p109 = scmp.ne.s32.totalorder %s104, %s106
      %p110 = scmp.eq.s32.totalorder %s28, 0
      %p111 = por %p109, %p110
      %p112 = scmp.ne.s32.totalorder %s104, %s106
      %p113 = scmp.eq.s32.totalorder %s33, 1
      %p114 = por %p112, %p113
      %p115 = scmp.ne.s32.totalorder %s106, %s107
      %p116 = scmp.eq.s32.totalorder %s33, 0
      %p117 = por %p115, %p116
      %p118 = scmp.ne.s32.totalorder %s106, %s107
      %p119 = scmp.eq.s32.totalorder %s34, 1
      %p120 = por %p118, %p119
      %p122 = scmp.ne.s32.totalorder %s107, %s121
      %p123 = scmp.eq.s32.totalorder %s34, 0
      %p124 = por %p122, %p123
      %s126 = sadd.s32 %s125, 1
      %p129 = scmp.eq.s32.totalorder %s28, 1
      %p130 = scmp.ne.s32.totalorder %s125, %s127
      %p131 = scmp.eq.s32.totalorder %s28, 0
      %p132 = por %p130, %p131
      %p133 = scmp.ne.s32.totalorder %s125, %s127
      %p134 = scmp.eq.s32.totalorder %s33, 1
      %p135 = por %p133, %p134
      %p136 = scmp.ne.s32.totalorder %s127, %s128
      %p137 = scmp.eq.s32.totalorder %s33, 0
      %p138 = por %p136, %p137
      %p139 = scmp.ne.s32.totalorder %s127, %s128
      %p140 = scmp.eq.s32.totalorder %s34, 1
      %p141 = por %p139, %p140
      %p143 = scmp.ne.s32.totalorder %s128, %s142
      %p144 = scmp.eq.s32.totalorder %s34, 0
      %p145 = por %p143, %p144
      %s147 = sadd.s32 %s146, 1
      %p150 = scmp.eq.s32.totalorder %s28, 1
      %p151 = scmp.ne.s32.totalorder %s146, %s148
      %p152 = scmp.eq.s32.totalorder %s28, 0
      %p153 = por %p151, %p152
      %p154 = scmp.ne.s32.totalorder %s146, %s148
      %p155 = scmp.eq.s32.totalorder %s33, 1
      %p156 = por %p154, %p155
      %p157 = scmp.ne.s32.totalorder %s148, %s149
      %p158 = scmp.eq.s32.totalorder %s33, 0
      %p159 = por %p157, %p158
      %p160 = scmp.ne.s32.totalorder %s148, %s149
      %p161 = scmp.eq.s32.totalorder %s34, 1
      %p162 = por %p160, %p161
      %p164 = scmp.ne.s32.totalorder %s149, %s163
      %p165 = scmp.eq.s32.totalorder %s34, 0
      %p166 = por %p164, %p165
      %s168 = sadd.s32 %s167, 1
      %p171 = scmp.eq.s32.totalorder %s28, 1
      %p172 = scmp.ne.s32.totalorder %s167, %s169
      %p173 = scmp.eq.s32.totalorder %s28, 0
      %p174 = por %p172, %p173
      %p175 = scmp.ne.s32.totalorder %s167, %s169
      %p176 = scmp.eq.s32.totalorder %s33, 1
      %p177 = por %p175, %p176
      %p178 = scmp.ne.s32.totalorder %s169, %s170
      %p179 = scmp.eq.s32.totalorder %s33, 0
      %p180 = por %p178, %p179
      %p181 = scmp.ne.s32.totalorder %s169, %s170
      %p182 = scmp.eq.s32.totalorder %s34, 1
      %p183 = por %p181, %p182
      %p185 = scmp.ne.s32.totalorder %s170, %s184
      %p186 = scmp.eq.s32.totalorder %s34, 0
      %p187 = por %p185, %p186
      %s189 = sadd.s32 %s188, 1
      %p192 = scmp.eq.s32.totalorder %s28, 1
      %p193 = scmp.ne.s32.totalorder %s188, %s190
      %p194 = scmp.eq.s32.totalorder %s28, 0
      %p195 = por %p193, %p194
      %p196 = scmp.ne.s32.totalorder %s188, %s190
      %p197 = scmp.eq.s32.totalorder %s33, 1
      %p198 = por %p196, %p197
      %p199 = scmp.ne.s32.totalorder %s190, %s191
      %p200 = scmp.eq.s32.totalorder %s33, 0
      %p201 = por %p199, %p200
      %p202 = scmp.ne.s32.totalorder %s190, %s191
      %p203 = scmp.eq.s32.totalorder %s34, 1
      %p204 = por %p202, %p203
      %p206 = scmp.ne.s32.totalorder %s191, %s205
      %p207 = scmp.eq.s32.totalorder %s34, 0
      %p208 = por %p206, %p207
      %s210 = sadd.s32 %s209, 1
      %p213 = scmp.eq.s32.totalorder %s28, 1
      %p214 = scmp.ne.s32.totalorder %s209, %s211
      %p215 = scmp.eq.s32.totalorder %s28, 0
      %p216 = por %p214, %p215
      %p217 = scmp.ne.s32.totalorder %s209, %s211
      %p218 = scmp.eq.s32.totalorder %s33, 1
      %p219 = por %p217, %p218
      %p220 = scmp.ne.s32.totalorder %s211, %s212
      %p221 = scmp.eq.s32.totalorder %s33, 0
      %p222 = por %p220, %p221
      %p223 = scmp.ne.s32.totalorder %s211, %s212
      %p224 = scmp.eq.s32.totalorder %s34, 1
      %p225 = por %p223, %p224
      %p227 = scmp.ne.s32.totalorder %s212, %s226
      %p228 = scmp.eq.s32.totalorder %s34, 0
      %p229 = por %p227, %p228
      %s231 = sadd.s32 %s230, 1
      %p234 = scmp.eq.s32.totalorder %s28, 1
      %p235 = scmp.ne.s32.totalorder %s230, %s232
      %p236 = scmp.eq.s32.totalorder %s28, 0
      %p237 = por %p235, %p236
      %p238 = scmp.ne.s32.totalorder %s230, %s232
      %p239 = scmp.eq.s32.totalorder %s33, 1
      %p240 = por %p238, %p239
      %p241 = scmp.ne.s32.totalorder %s232, %s233
      %p242 = scmp.eq.s32.totalorder %s33, 0
      %p243 = por %p241, %p242
      %p244 = scmp.ne.s32.totalorder %s232, %s233
      %p245 = scmp.eq.s32.totalorder %s34, 1
      %p246 = por %p244, %p245
      %p248 = scmp.ne.s32.totalorder %s233, %s247
      %p249 = scmp.eq.s32.totalorder %s34, 0
      %p250 = por %p248, %p249
      %s252 = sadd.s32 %s251, 1
      %p255 = scmp.eq.s32.totalorder %s28, 1
      %p256 = scmp.ne.s32.totalorder %s251, %s253
      %p257 = scmp.eq.s32.totalorder %s28, 0
      %p258 = por %p256, %p257
      %p259 = scmp.ne.s32.totalorder %s251, %s253
      %p260 = scmp.eq.s32.totalorder %s33, 1
      %p261 = por %p259, %p260
      %p262 = scmp.ne.s32.totalorder %s253, %s254
      %p263 = scmp.eq.s32.totalorder %s33, 0
      %p264 = por %p262, %p263
      %p265 = scmp.ne.s32.totalorder %s253, %s254
      %p266 = scmp.eq.s32.totalorder %s34, 1
      %p267 = por %p265, %p266
      %p269 = scmp.ne.s32.totalorder %s254, %s268
      %p270 = scmp.eq.s32.totalorder %s34, 0
      %p271 = por %p269, %p270
      %s273 = sadd.s32 %s272, 1
      %p276 = scmp.eq.s32.totalorder %s28, 1
      %p277 = scmp.ne.s32.totalorder %s272, %s274
      %p278 = scmp.eq.s32.totalorder %s28, 0
      %p279 = por %p277, %p278
      %p280 = scmp.ne.s32.totalorder %s272, %s274
      %p281 = scmp.eq.s32.totalorder %s33, 1
      %p282 = por %p280, %p281
      %p283 = scmp.ne.s32.totalorder %s274, %s275
      %p284 = scmp.eq.s32.totalorder %s33, 0
      %p285 = por %p283, %p284
      %p286 = scmp.ne.s32.totalorder %s274, %s275
      %p287 = scmp.eq.s32.totalorder %s34, 1
      %p288 = por %p286, %p287
      %p290 = scmp.ne.s32.totalorder %s275, %s289
      %p291 = scmp.eq.s32.totalorder %s34, 0
      %p292 = por %p290, %p291
      %s294 = sadd.s32 %s293, 1
      %p297 = scmp.eq.s32.totalorder %s28, 1
      %p298 = scmp.ne.s32.totalorder %s293, %s295
      %p299 = scmp.eq.s32.totalorder %s28, 0
      %p300 = por %p298, %p299
      %p301 = scmp.ne.s32.totalorder %s293, %s295
      %p302 = scmp.eq.s32.totalorder %s33, 1
      %p303 = por %p301, %p302
      %p304 = scmp.ne.s32.totalorder %s295, %s296
      %p305 = scmp.eq.s32.totalorder %s33, 0
      %p306 = por %p304, %p305
      %p307 = scmp.ne.s32.totalorder %s295, %s296
      %p308 = scmp.eq.s32.totalorder %s34, 1
      %p309 = por %p307, %p308
      %p311 = scmp.ne.s32.totalorder %s296, %s310
      %p312 = scmp.eq.s32.totalorder %s34, 0
      %p313 = por %p311, %p312
      %s315 = sadd.s32 %s314, 1
      %p318 = scmp.eq.s32.totalorder %s28, 1
      %p319 = scmp.ne.s32.totalorder %s314, %s316
      %p320 = scmp.eq.s32.totalorder %s28, 0
      %p321 = por %p319, %p320
      %p322 = scmp.ne.s32.totalorder %s314, %s316
      %p323 = scmp.eq.s32.totalorder %s33, 1
      %p324 = por %p322, %p323
      %p325 = scmp.ne.s32.totalorder %s316, %s317
      %p326 = scmp.eq.s32.totalorder %s33, 0
      %p327 = por %p325, %p326
      %p328 = scmp.ne.s32.totalorder %s316, %s317
      %p329 = scmp.eq.s32.totalorder %s34, 1
      %p330 = por %p328, %p329
      %p332 = scmp.ne.s32.totalorder %s317, %s331
      %p333 = scmp.eq.s32.totalorder %s34, 0
      %p334 = por %p332, %p333
      %s336 = sadd.s32 %s335, 1
      %p339 = scmp.eq.s32.totalorder %s28, 1
      %p340 = scmp.ne.s32.totalorder %s335, %s337
      %p341 = scmp.eq.s32.totalorder %s28, 0
      %p342 = por %p340, %p341
      %p343 = scmp.ne.s32.totalorder %s335, %s337
      %p344 = scmp.eq.s32.totalorder %s33, 1
      %p345 = por %p343, %p344
      %p346 = scmp.ne.s32.totalorder %s337, %s338
      %p347 = scmp.eq.s32.totalorder %s33, 0
      %p348 = por %p346, %p347
      %p349 = scmp.ne.s32.totalorder %s337, %s338
      %p350 = scmp.eq.s32.totalorder %s34, 1
      %p351 = por %p349, %p350
      %p353 = scmp.ne.s32.totalorder %s338, %s352
      %p354 = scmp.eq.s32.totalorder %s34, 0
      %p355 = por %p353, %p354
      %s357 = sadd.s32 %s356, 1
      %p360 = scmp.eq.s32.totalorder %s28, 1
      %p361 = scmp.ne.s32.totalorder %s356, %s358
      %p362 = scmp.eq.s32.totalorder %s28, 0
      %p363 = por %p361, %p362
      %p364 = scmp.ne.s32.totalorder %s356, %s358
      %p365 = scmp.eq.s32.totalorder %s33, 1
      %p366 = por %p364, %p365
      %p367 = scmp.ne.s32.totalorder %s358, %s359
      %p368 = scmp.eq.s32.totalorder %s33, 0
      %p369 = por %p367, %p368
      %p370 = scmp.ne.s32.totalorder %s358, %s359
      %p371 = scmp.eq.s32.totalorder %s34, 1
      %p372 = por %p370, %p371
      %p374 = scmp.ne.s32.totalorder %s359, %s373
      %p375 = scmp.eq.s32.totalorder %s34, 0
      %p376 = por %p374, %p375
      %s378 = sadd.s32 %s377, 1
      %p381 = scmp.eq.s32.totalorder %s28, 1
      %p382 = scmp.ne.s32.totalorder %s377, %s379
      %p383 = scmp.eq.s32.totalorder %s28, 0
      %p384 = por %p382, %p383
      %p385 = scmp.ne.s32.totalorder %s377, %s379
      %p386 = scmp.eq.s32.totalorder %s33, 1
      %p387 = por %p385, %p386
      %p388 = scmp.ne.s32.totalorder %s379, %s380
      %p389 = scmp.eq.s32.totalorder %s33, 0
      %p390 = por %p388, %p389
      %p391 = scmp.ne.s32.totalorder %s379, %s380
      %p392 = scmp.eq.s32.totalorder %s34, 1
      %p393 = por %p391, %p392
      %p395 = scmp.ne.s32.totalorder %s380, %s394
      %p396 = scmp.eq.s32.totalorder %s34, 0
      %p397 = por %p395, %p396
      %s398 = ssub.s32 %s28, %s35
      %p399 = scmp.eq.s32.totalorder %s398, 0
      %s401 = sadd.s32 %s400, 1
      %s402 = scalar_select %p399, %s400, %s401
      %p405 = pneg %p399
      %p406 = scmp.eq.s32.totalorder %s28, 1
      %p407 = por %p405, %p406
      %p408 = scmp.ne.s32.totalorder %s400, %s403
      %p409 = scmp.eq.s32.totalorder %s28, 0
      %p410 = por %p408, %p409
      %p411 = scmp.ne.s32.totalorder %s400, %s403
      %p412 = scmp.eq.s32.totalorder %s33, 1
      %p413 = por %p411, %p412
      %p414 = scmp.ne.s32.totalorder %s403, %s404
      %p415 = scmp.eq.s32.totalorder %s33, 0
      %p416 = por %p414, %p415
      %p417 = scmp.ne.s32.totalorder %s403, %s404
      %p418 = scmp.eq.s32.totalorder %s34, 1
      %p419 = por %p417, %p418
      %p421 = scmp.ne.s32.totalorder %s404, %s420
      %p422 = scmp.eq.s32.totalorder %s34, 0
      %p423 = por %p421, %p422
      %p424 = scmp.le.s32.totalorder 1, %s28
      %p425 = scmp.lt.s32.totalorder %s28, 3
      %p426 = pnand %p424, %p425
      %p427 = pneg %p426
      // Predicated region
      $region9: #{tpu_custom_call.1} parent=5 // pred_check
        _
      $region10: #{tpu_custom_call.1} parent=5 // pred_check_branch
        %429 = sbr.rel (%p426) target = $region12
      $region11: #{tpu_custom_call.1} parent=5 // pred_region
        %s430 = ssub.s32 %s28, 1
        // Predicated region
        $region13: #{tpu_custom_call.1} parent=11 // pred_check
          %p431 = pneg %p49
        $region14: #{tpu_custom_call.1} parent=11 // pred_check_branch
          %433 = sbr.rel (%p431) target = $region16
        $region15: #{tpu_custom_call.1} parent=11 // pred_region
          _
        $region16: #{tpu_custom_call.1} parent=11 // pred_fallthru
          _
        // Predicated region
        $region17: #{tpu_custom_call.1} parent=11 // pred_check
          %p434 = pneg %p70
        $region18: #{tpu_custom_call.1} parent=11 // pred_check_branch
          %436 = sbr.rel (%p434) target = $region20
        $region19: #{tpu_custom_call.1} parent=11 // pred_region
          _
        $region20: #{tpu_custom_call.1} parent=11 // pred_fallthru
          _
        // Predicated region
        $region21: #{tpu_custom_call.1} parent=11 // pred_check
          %p437 = pneg %p117
        $region22: #{tpu_custom_call.1} parent=11 // pred_check_branch
          %439 = sbr.rel (%p437) target = $region24
        $region23: #{tpu_custom_call.1} parent=11 // pred_region
          _
        $region24: #{tpu_custom_call.1} parent=11 // pred_fallthru
          _
        // Predicated region
        $region25: #{tpu_custom_call.1} parent=11 // pred_check
          %p440 = pneg %p138
        $region26: #{tpu_custom_call.1} parent=11 // pred_check_branch
          %442 = sbr.rel (%p440) target = $region28
        $region27: #{tpu_custom_call.1} parent=11 // pred_region
          _
        $region28: #{tpu_custom_call.1} parent=11 // pred_fallthru
          _
        // Predicated region
        $region29: #{tpu_custom_call.1} parent=11 // pred_check
          %p443 = pneg %p159
        $region30: #{tpu_custom_call.1} parent=11 // pred_check_branch
          %445 = sbr.rel (%p443) target = $region32
        $region31: #{tpu_custom_call.1} parent=11 // pred_region
          _
        $region32: #{tpu_custom_call.1} parent=11 // pred_fallthru
          _
        // Predicated region
        $region33: #{tpu_custom_call.1} parent=11 // pred_check
          %p446 = pneg %p180
        $region34: #{tpu_custom_call.1} parent=11 // pred_check_branch
          %448 = sbr.rel (%p446) target = $region36
        $region35: #{tpu_custom_call.1} parent=11 // pred_region
          _
        $region36: #{tpu_custom_call.1} parent=11 // pred_fallthru
          _
        // Predicated region
        $region37: #{tpu_custom_call.1} parent=11 // pred_check
          %p449 = pneg %p201
        $region38: #{tpu_custom_call.1} parent=11 // pred_check_branch
          %451 = sbr.rel (%p449) target = $region40
        $region39: #{tpu_custom_call.1} parent=11 // pred_region
          _
        $region40: #{tpu_custom_call.1} parent=11 // pred_fallthru
          _
        // Predicated region
        $region41: #{tpu_custom_call.1} parent=11 // pred_check
          %p452 = pneg %p222
        $region42: #{tpu_custom_call.1} parent=11 // pred_check_branch
          %454 = sbr.rel (%p452) target = $region44
        $region43: #{tpu_custom_call.1} parent=11 // pred_region
          _
        $region44: #{tpu_custom_call.1} parent=11 // pred_fallthru
          _
        // Predicated region
        $region45: #{tpu_custom_call.1} parent=11 // pred_check
          %p455 = pneg %p243
        $region46: #{tpu_custom_call.1} parent=11 // pred_check_branch
          %457 = sbr.rel (%p455) target = $region48
        $region47: #{tpu_custom_call.1} parent=11 // pred_region
          _
        $region48: #{tpu_custom_call.1} parent=11 // pred_fallthru
          _
        // Predicated region
        $region49: #{tpu_custom_call.1} parent=11 // pred_check
          %p458 = pneg %p264
        $region50: #{tpu_custom_call.1} parent=11 // pred_check_branch
          %460 = sbr.rel (%p458) target = $region52
        $region51: #{tpu_custom_call.1} parent=11 // pred_region
          _
        $region52: #{tpu_custom_call.1} parent=11 // pred_fallthru
          _
        // Predicated region
        $region53: #{tpu_custom_call.1} parent=11 // pred_check
          %p461 = pneg %p285
        $region54: #{tpu_custom_call.1} parent=11 // pred_check_branch
          %463 = sbr.rel (%p461) target = $region56
        $region55: #{tpu_custom_call.1} parent=11 // pred_region
          _
        $region56: #{tpu_custom_call.1} parent=11 // pred_fallthru
          _
        // Predicated region
        $region57: #{tpu_custom_call.1} parent=11 // pred_check
          %p464 = pneg %p306
        $region58: #{tpu_custom_call.1} parent=11 // pred_check_branch
          %466 = sbr.rel (%p464) target = $region60
        $region59: #{tpu_custom_call.1} parent=11 // pred_region
          _
        $region60: #{tpu_custom_call.1} parent=11 // pred_fallthru
          _
        // Predicated region
        $region61: #{tpu_custom_call.1} parent=11 // pred_check
          %p467 = pneg %p327
        $region62: #{tpu_custom_call.1} parent=11 // pred_check_branch
          %469 = sbr.rel (%p467) target = $region64
        $region63: #{tpu_custom_call.1} parent=11 // pred_region
          _
        $region64: #{tpu_custom_call.1} parent=11 // pred_fallthru
          _
        // Predicated region
        $region65: #{tpu_custom_call.1} parent=11 // pred_check
          %p470 = pneg %p348
        $region66: #{tpu_custom_call.1} parent=11 // pred_check_branch
          %472 = sbr.rel (%p470) target = $region68
        $region67: #{tpu_custom_call.1} parent=11 // pred_region
          _
        $region68: #{tpu_custom_call.1} parent=11 // pred_fallthru
          _
        // Predicated region
        $region69: #{tpu_custom_call.1} parent=11 // pred_check
          %p473 = pneg %p369
        $region70: #{tpu_custom_call.1} parent=11 // pred_check_branch
          %475 = sbr.rel (%p473) target = $region72
        $region71: #{tpu_custom_call.1} parent=11 // pred_region
          _
        $region72: #{tpu_custom_call.1} parent=11 // pred_fallthru
          _
        // Predicated region
        $region73: #{tpu_custom_call.1} parent=11 // pred_check
          %p476 = pneg %p390
        $region74: #{tpu_custom_call.1} parent=11 // pred_check_branch
          %478 = sbr.rel (%p476) target = $region76
        $region75: #{tpu_custom_call.1} parent=11 // pred_region
          _
        $region76: #{tpu_custom_call.1} parent=11 // pred_fallthru
          _
      $region12: #{tpu_custom_call.1} parent=5 // pred_fallthru
        _
      %p479 = scmp.lt.s32.totalorder %s28, 2
      // Predicated region
      $region77: #{tpu_custom_call.1} parent=5 // pred_check
        %p480 = pneg %p479
      $region78: #{tpu_custom_call.1} parent=5 // pred_check_branch
        %482 = sbr.rel (%p480) target = $region80
      $region79: #{tpu_custom_call.1} parent=5 // pred_region
        // Predicated region
        $region81: #{tpu_custom_call.1} parent=79 // pred_check
          %p483 = pneg %p90
        $region82: #{tpu_custom_call.1} parent=79 // pred_check_branch
          %485 = sbr.rel (%p483) target = $region84
        $region83: #{tpu_custom_call.1} parent=79 // pred_region
          %p486 = scmp.lt.s32.totalorder %s28, 1
          %s487 = scalar_select %p486, %s28, 1
          %s488 = smul.addr %s487, 2
          %s489 = smul.addr %s488, 4
          %s490 = scalar_lea.vmem %s2, %s489
        $region84: #{tpu_custom_call.1} parent=79 // pred_fallthru
          _
      $region80: #{tpu_custom_call.1} parent=5 // pred_fallthru
        _
      %p491 = scmp.le.s32.totalorder 1, %s28
      %p492 = scmp.lt.s32.totalorder %s28, 3
      %p493 = pnand %p491, %p492
      %p494 = pneg %p493
      // Predicated region
      $region85: #{tpu_custom_call.1} parent=5 // pred_check
        _
      $region86: #{tpu_custom_call.1} parent=5 // pred_check_branch
        %496 = sbr.rel (%p493) target = $region88
      $region87: #{tpu_custom_call.1} parent=5 // pred_region
        %s497 = ssub.s32 %s28, 1
        %p498 = pneg %p49
        %p499 = pneg %p46
        %p500 = pneg %p70
        %p501 = pneg %p67
        %p502 = scmp.lt.s32.totalorder %s33, 1
        %s503 = scalar_select %p502, %s33, 1
        %s504 = smul.addr %s503, 2
        %s505 = smul.addr %s504, 4
        %s506 = scalar_lea.vmem %s2, %s505
        %p507 = pneg %p96
        %p508 = pneg %p93
        %p509 = pneg %p117
        %p510 = pneg %p114
        %p511 = pneg %p138
        %p512 = pneg %p135
        %p513 = pneg %p159
        %p514 = pneg %p156
        %p515 = pneg %p180
        %p516 = pneg %p177
        %p517 = pneg %p201
        %p518 = pneg %p198
        %p519 = pneg %p222
        %p520 = pneg %p219
        %p521 = pneg %p243
        %p522 = pneg %p240
        %p523 = pneg %p264
        %p524 = pneg %p261
        %p525 = pneg %p285
        %p526 = pneg %p282
        %p527 = pneg %p306
        %p528 = pneg %p303
        %p529 = pneg %p327
        %p530 = pneg %p324
        %p531 = pneg %p348
        %p532 = pneg %p345
        %p533 = pneg %p369
        %p534 = pneg %p366
        %p535 = pneg %p390
        %p536 = pneg %p387
        %p537 = pneg %p416
        %p538 = pneg %p413
        %s539 = sand.u32 %s403, 1
        %s540 = scalar_lea.sflag [#allocation4], %s539
        %s541 = sand.u32 %s403, 1
        %s542 = smul.addr %s541, 16
        %s543 = scalar_lea.vmem [#allocation3], %s542
        %p544 = scmp.lt.s32.totalorder %s33, 1
        %s545 = scalar_select %p544, %s33, 1
        %s546 = smul.addr %s545, 2
        %s547 = smul.addr %s546, 4
        %s548 = scalar_lea.vmem %s2, %s547
        %v549 = vld [vmem:[%s548] sm:$0xff]
        %v550 = vld [vmem:[%s0] sm:$0x3]
        %v551 = vld [vmem:[%s1] sm:$0x3]
        %vm552 = vcmp.eq.s32.totalorder %v550, 0
        %vm553 = vcmp.eq.s32.totalorder %v550, 15
        %vm554 = vcmp.eq.s32.totalorder %v551, 0
        %vm555 = vcmp.eq.s32.totalorder %v551, 15
        %v557 = vcombine.high %v549, %v549
        %vm559 = vcmask 1043456
        %v560 = vsel %vm559, %v549, 0.0
        %v561 = vsel %vm559, %v557, 0.0
        %v562 = vadd.f32 %v560, %v561
        %563 = vadd.xlane.f32.xlu0 %v562
        %v564 = vpop.xlane.xlu0 %563
        %v565 = vrcp.pop 256.0
        %v566 = vmul.f32 %v564, %v565
        %v567 = vld [vmem:[%s3] sm:$0xf]
        %v568 = vmul.f32 %v567, %v566
        %vm569 = vcmask 11264
        %v570 = vsel %vm569, %v568, 0.0
        %v571 = vrot.slane %v570, 4
        %v572 = vadd.f32 %v570, %v571
        %v573 = vrot.slane %v572, 2
        %v574 = vadd.f32 %v572, %v573
        %v575 = vrot.slane %v574, 1
        %v576 = vadd.f32 %v574, %v575
        %v577 = vld [vmem:[%s4] sm:$0x1]
        %v578 = vadd.f32 %v576, %v577
        %v579 = vmul.f32 %v578, 0.3
        %v580 = vmax.f32 %v578, %v579
        %v581 = vld [vmem:[%s5] sm:$0xf]
        %v582 = vlaneseq
        %v583 = vshrl.u32 %v582, 7
        %v584 = vsub.s32 0, %v583
        %v585 = vrot.slane %v580, %v584
        %v586 = vmul.f32 %v581, %v585
        %v587 = vsel %vm569, %v586, 0.0
        %588 = vadd.xlane.f32.xlu0 %v587
        %v589 = vpop.xlane.xlu0 %588
        %v590 = vld [vmem:[%s6] sm:$0xf]
        %v591 = vadd.f32 %v589, %v590
        %v592 = vxor.u32 %v591, 2147483648
        %v593 = vmul.f32 %v592, 1.442695
        %v594 = vpow.pop %v593
        %v595 = vadd.f32 %v594, 1.0
        %v596 = vrcp.pop %v595
        %v597 = vmul.f32 1.0, %v596
        %v598 = vld [vmem:[%s7] sm:$0x3]
        %v599 = vld [vmem:[%s8] sm:$0x3]
        %601 = vset.pattern.permute.xlu0 0
        %602 = vperm.xlu0 %601, %v599
        %v603 = vpop.permute.xlu0 %602
        %vm605 = vcmask 31744
        %v607 = vsel %vm605, %v598, 0
        %v609 = vsel %vm559, %v549, 0
        %v611 = vsel %vm559, %v557, 0
        %613 = vmatprep.subr.mxu0 %v611
        %614 = vmatpush1.msra.mxu0 %v609
        %615 = vmatprep.subr.mxu0 0.0
        %616 = vmatpush1.msra.mxu0 0.0
        %617 = vmatprep.subr.mxu0 0.0
        %618 = vmatpush1.msra.mxu0 0.0
        %619 = vmatprep.subr.mxu0 0.0
        %620 = vmatpush1.msra.mxu0 0.0
        %621 = vmatprep.subr.mxu0 0.0
        %622 = vmatpush1.msra.mxu0 0.0
        %623 = vmatprep.subr.mxu0 0.0
        %624 = vmatpush1.msra.mxu0 0.0
        %625 = vmatprep.subr.mxu0 0.0
        %626 = vmatpush1.msra.mxu0 0.0
        %627 = vmatprep.subr.mxu0 0.0
        %628 = vmatpush1.msra.mxu0 0.0
        %629 = vmatprep.subr.mxu0 0.0
        %630 = vmatpush1.msra.mxu0 0.0
        %631 = vmatprep.subr.mxu0 0.0
        %632 = vmatpush1.msra.mxu0 0.0
        %633 = vmatprep.subr.mxu0 0.0
        %634 = vmatpush1.msra.mxu0 0.0
        %635 = vmatprep.subr.mxu0 0.0
        %636 = vmatpush1.msra.mxu0 0.0
        %637 = vmatprep.subr.mxu0 0.0
        %638 = vmatpush1.msra.mxu0 0.0
        %639 = vmatprep.subr.mxu0 0.0
        %640 = vmatpush1.msra.mxu0 0.0
        %641 = vmatprep.subr.mxu0 0.0
        %642 = vmatpush1.msra.mxu0 0.0
        %643 = vmatprep.subr.mxu0 0.0
        %644 = vmatpush1.msra.mxu0 0.0
        %645 = vmatprep.subr.mxu0 0.0
        %646 = vmatpush1.msra.mxu0 0.0
        %647 = vmatprep.subr.mxu0 0.0
        %648 = vmatpush1.msra.mxu0 0.0
        %649 = vmatprep.subr.mxu0 0.0
        %650 = vmatpush1.msra.mxu0 0.0
        %651 = vmatprep.subr.mxu0 0.0
        %652 = vmatpush1.msra.mxu0 0.0
        %653 = vmatprep.subr.mxu0 0.0
        %654 = vmatpush1.msra.mxu0 0.0
        %655 = vmatprep.subr.mxu0 0.0
        %656 = vmatpush1.msra.mxu0 0.0
        %657 = vmatprep.subr.mxu0 0.0
        %658 = vmatpush1.msra.mxu0 0.0
        %659 = vmatprep.subr.mxu0 0.0
        %660 = vmatpush1.msra.mxu0 0.0
        %661 = vmatprep.subr.mxu0 0.0
        %662 = vmatpush1.msra.mxu0 0.0
        %663 = vmatprep.subr.mxu0 0.0
        %664 = vmatpush1.msra.mxu0 0.0
        %665 = vmatprep.subr.mxu0 0.0
        %666 = vmatpush1.msra.mxu0 0.0
        %667 = vmatprep.subr.mxu0 0.0
        %668 = vmatpush1.msra.mxu0 0.0
        %669 = vmatprep.subr.mxu0 0.0
        %670 = vmatpush1.msra.mxu0 0.0
        %671 = vmatprep.subr.mxu0 0.0
        %672 = vmatpush1.msra.mxu0 0.0
        %673 = vmatprep.subr.mxu0 0.0
        %674 = vmatpush1.msra.mxu0 0.0
        %675 = vmatprep.subr.mxu0 0.0
        %676 = vmatpush1.msra.mxu0 0.0
        %677 = vmatprep.mubr.f32.mxu0 0.0
        %678 = vmatmul.mubr.f32.gmra.mrb[0].mxu0 %v607
        %v679 = vpop.f32.mrb[0].mxu0
        %v680 = vadd.f32 %v603, %v679
        %v681 = vpop.f32.mrb[0].mxu0
        %v682 = vadd.f32 %v603, %v681
        %683 = vdwg.mxu0
        %v684 = vmul.f32 %v680, 0.3
        %v685 = vmul.f32 %v682, 0.3
        %v686 = vmax.f32 %v680, %v684
        %v687 = vmax.f32 %v682, %v685
        %v688 = vld [vmem:[%s9] sm:$0x3]
        %690 = vset.pattern.permute.xlu0 0
        %691 = vperm.xlu0 %690, %v688
        %v692 = vpop.permute.xlu0 %691
        %v694 = vmul.f32 %v692, %v686
        %v695 = vmul.f32 %v692, %v687
        %vm696 = vcmask 1041408
        %v697 = vsel %vm696, %v694, 0.0
        %v698 = vrot.slane %v697, 4
        %v699 = vadd.f32 %v697, %v698
        %v700 = vrot.slane %v699, 2
        %v701 = vadd.f32 %v699, %v700
        %v702 = vrot.slane %v701, 1
        %v703 = vadd.f32 %v701, %v702
        %v704 = vsel %vm696, %v695, 0.0
        %v705 = vrot.slane %v704, 4
        %v706 = vadd.f32 %v704, %v705
        %v707 = vrot.slane %v706, 2
        %v708 = vadd.f32 %v706, %v707
        %v709 = vrot.slane %v708, 1
        %v710 = vadd.f32 %v708, %v709
        %v711 = vld [vmem:[#allocation2] sm:$0x1]
        %713 = vset.pattern.permute.xlu0 0
        %714 = vperm.xlu0 %713, %v711
        %v715 = vpop.permute.xlu0 %714
        %v717 = vlaneseq
        %v718 = vshrl.u32 %v717, 7
        %v719 = vsub.s32 0, %v718
        %v720 = vrot.slane %v715, %v719
        %v721 = vadd.f32 %v703, %v720
        %v722 = vadd.f32 %v710, %v720
        %v723 = vxor.u32 %v721, 2147483648
        %v724 = vxor.u32 %v722, 2147483648
        %v725 = vmul.f32 %v723, 1.442695
        %v726 = vpow.pop %v725
        %v727 = vmul.f32 %v724, 1.442695
        %v728 = vpow.pop %v727
        %v729 = vadd.f32 %v726, 1.0
        %v730 = vadd.f32 %v728, 1.0
        %v731 = vrcp.pop %v729
        %v732 = vmul.f32 1.0, %v731
        %v733 = vrcp.pop %v730
        %v734 = vmul.f32 1.0, %v733
        %736 = vset.pattern.permute.xlu0 0
        %737 = vperm.xlu0 %736, %v597
        %v738 = vpop.permute.xlu0 %737
        %v740 = vadd.f32 %v738, %v732
        %v741 = vadd.f32 %v738, %v734
        %v744 = vcombine.low %v740, %v741
        %v746 = vmul.f32 %v549, %v744
        %v748 = vcombine.high %v746, %v746
        %750 = vrot.lane.b32.xlu0 %v746, 15
        %v751 = vpop.permute.xlu0 %750
        %752 = vrot.lane.b32.xlu0 %v748, 15
        %v753 = vpop.permute.xlu0 %752
        %v754 = vlaneseq
        %v755 = vand.u32 %v754, 127
        %vm756 = vcmp.lt.s32.totalorder %v755, 15
        %v757 = vsel %vm756, %v751, %v753
        %v758 = vsel %vm756, %v753, %v751
        %759 = vrot.lane.b32.xlu0 %v746, 127
        %v760 = vpop.permute.xlu0 %759
        %761 = vrot.lane.b32.xlu0 %v748, 127
        %v762 = vpop.permute.xlu0 %761
        %vm763 = vcmp.lt.s32.totalorder %v755, 127
        %v764 = vsel %vm763, %v760, %v762
        %v765 = vsel %vm763, %v762, %v760
        %v766 = vsel %vm555, 1, 0
        %v767 = vlaneseq
        %v768 = vshrl.u32 %v767, 7
        %v769 = vsub.s32 0, %v768
        %v770 = vrot.slane %v766, %v769
        %v771 = vlaneseq
        %v772 = vshrl.u32 %v771, 7
        %v773 = vsub.s32 1, %v772
        %v774 = vrot.slane %v766, %v773
        %vm775 = vcmp.eq.s32.totalorder %v770, 1
        %vm776 = vcmp.eq.s32.totalorder %v774, 1
        %v777 = vsel %vm775, %v758, %v764
        %v778 = vsel %vm776, %v757, %v765
        %779 = vrot.lane.b32.xlu0 %v746, 113
        %v780 = vpop.permute.xlu0 %779
        %781 = vrot.lane.b32.xlu0 %v748, 113
        %v782 = vpop.permute.xlu0 %781
        %vm783 = vcmp.lt.s32.totalorder %v755, 113
        %v784 = vsel %vm783, %v780, %v782
        %v785 = vsel %vm783, %v782, %v780
        %786 = vrot.lane.b32.xlu0 %v746, 1
        %v787 = vpop.permute.xlu0 %786
        %788 = vrot.lane.b32.xlu0 %v748, 1
        %v789 = vpop.permute.xlu0 %788
        %vm790 = vcmp.lt.s32.totalorder %v755, 1
        %v791 = vsel %vm790, %v787, %v789
        %v792 = vsel %vm790, %v789, %v787
        %v793 = vsel %vm554, 1, 0
        %v794 = vlaneseq
        %v795 = vshrl.u32 %v794, 7
        %v796 = vsub.s32 0, %v795
        %v797 = vrot.slane %v793, %v796
        %v798 = vlaneseq
        %v799 = vshrl.u32 %v798, 7
        %v800 = vsub.s32 1, %v799
        %v801 = vrot.slane %v793, %v800
        %vm802 = vcmp.eq.s32.totalorder %v797, 1
        %vm803 = vcmp.eq.s32.totalorder %v801, 1
        %v804 = vsel %vm802, %v784, %v792
        %v805 = vsel %vm803, %v785, %v791
        %806 = vrot.lane.b32.xlu0 %v804, 112
        %v807 = vpop.permute.xlu0 %806
        %808 = vrot.lane.b32.xlu0 %v805, 112
        %v809 = vpop.permute.xlu0 %808
        %vm810 = vcmp.lt.s32.totalorder %v755, 112
        %v811 = vsel %vm810, %v807, %v809
        %v812 = vsel %vm810, %v809, %v807
        %813 = vrot.lane.b32.xlu0 %v804, 16
        %v814 = vpop.permute.xlu0 %813
        %815 = vrot.lane.b32.xlu0 %v805, 16
        %v816 = vpop.permute.xlu0 %815
        %vm817 = vcmp.lt.s32.totalorder %v755, 16
        %v818 = vsel %vm817, %v814, %v816
        %v819 = vsel %vm817, %v816, %v814
        %v820 = vsel %vm552, 1, 0
        %v821 = vlaneseq
        %v822 = vshrl.u32 %v821, 7
        %v823 = vsub.s32 0, %v822
        %v824 = vrot.slane %v820, %v823
        %v825 = vlaneseq
        %v826 = vshrl.u32 %v825, 7
        %v827 = vsub.s32 1, %v826
        %v828 = vrot.slane %v820, %v827
        %vm829 = vcmp.eq.s32.totalorder %v824, 1
        %vm830 = vcmp.eq.s32.totalorder %v828, 1
        %v831 = vsel %vm829, %v811, %v819
        %v832 = vsel %vm830, %v812, %v818
        %v833 = vsel %vm553, 1, 0
        %v834 = vlaneseq
        %v835 = vshrl.u32 %v834, 7
        %v836 = vsub.s32 0, %v835
        %v837 = vrot.slane %v833, %v836
        %v838 = vlaneseq
        %v839 = vshrl.u32 %v838, 7
        %v840 = vsub.s32 1, %v839
        %v841 = vrot.slane %v833, %v840
        %vm842 = vcmp.eq.s32.totalorder %v837, 1
        %vm843 = vcmp.eq.s32.totalorder %v841, 1
        %v844 = vsel %vm842, %v819, %v811
        %v845 = vsel %vm843, %v818, %v812
        %846 = vrot.lane.b32.xlu0 %v746, 112
        %v847 = vpop.permute.xlu0 %846
        %848 = vrot.lane.b32.xlu0 %v748, 112
        %v849 = vpop.permute.xlu0 %848
        %v850 = vsel %vm810, %v847, %v849
        %v851 = vsel %vm810, %v849, %v847
        %852 = vrot.lane.b32.xlu0 %v746, 16
        %v853 = vpop.permute.xlu0 %852
        %854 = vrot.lane.b32.xlu0 %v748, 16
        %v855 = vpop.permute.xlu0 %854
        %v856 = vsel %vm817, %v853, %v855
        %v857 = vsel %vm817, %v855, %v853
        %v858 = vsel %vm829, %v850, %v857
        %v859 = vsel %vm830, %v851, %v856
        %v860 = vsel %vm842, %v857, %v850
        %v861 = vsel %vm843, %v856, %v851
        %862 = vrot.lane.b32.xlu0 %v777, 112
        %v863 = vpop.permute.xlu0 %862
        %864 = vrot.lane.b32.xlu0 %v778, 112
        %v865 = vpop.permute.xlu0 %864
        %v866 = vsel %vm810, %v863, %v865
        %v867 = vsel %vm810, %v865, %v863
        %868 = vrot.lane.b32.xlu0 %v777, 16
        %v869 = vpop.permute.xlu0 %868
        %870 = vrot.lane.b32.xlu0 %v778, 16
        %v871 = vpop.permute.xlu0 %870
        %v872 = vsel %vm817, %v869, %v871
        %v873 = vsel %vm817, %v871, %v869
        %v874 = vsel %vm829, %v866, %v873
        %v875 = vsel %vm830, %v867, %v872
        %v876 = vsel %vm842, %v873, %v866
        %v877 = vsel %vm843, %v872, %v867
        %v878 = vld [vmem:[%s11] sm:$0xff]
        %s879 = scalar_lea.vmem %s11, 8
        %v880 = vld [vmem:[%s879] sm:$0xff]
        %v882 = vsel %vm605, %v880, 0
        %v885 = vsel %vm559, %v858, 0
        %v888 = vsel %vm559, %v859, 0
        %890 = vmatprep.subr.mxu0 %v888
        %891 = vmatpush1.msra.mxu0 %v885
        %892 = vmatprep.subr.mxu0 0.0
        %893 = vmatpush1.msra.mxu0 0.0
        %894 = vmatprep.subr.mxu0 0.0
        %895 = vmatpush1.msra.mxu0 0.0
        %896 = vmatprep.subr.mxu0 0.0
        %897 = vmatpush1.msra.mxu0 0.0
        %898 = vmatprep.subr.mxu0 0.0
        %899 = vmatpush1.msra.mxu0 0.0
        %900 = vmatprep.subr.mxu0 0.0
        %901 = vmatpush1.msra.mxu0 0.0
        %902 = vmatprep.subr.mxu0 0.0
        %903 = vmatpush1.msra.mxu0 0.0
        %904 = vmatprep.subr.mxu0 0.0
        %905 = vmatpush1.msra.mxu0 0.0
        %906 = vmatprep.subr.mxu0 0.0
        %907 = vmatpush1.msra.mxu0 0.0
        %908 = vmatprep.subr.mxu0 0.0
        %909 = vmatpush1.msra.mxu0 0.0
        %910 = vmatprep.subr.mxu0 0.0
        %911 = vmatpush1.msra.mxu0 0.0
        %912 = vmatprep.subr.mxu0 0.0
        %913 = vmatpush1.msra.mxu0 0.0
        %914 = vmatprep.subr.mxu0 0.0
        %915 = vmatpush1.msra.mxu0 0.0
        %916 = vmatprep.subr.mxu0 0.0
        %917 = vmatpush1.msra.mxu0 0.0
        %918 = vmatprep.subr.mxu0 0.0
        %919 = vmatpush1.msra.mxu0 0.0
        %920 = vmatprep.subr.mxu0 0.0
        %921 = vmatpush1.msra.mxu0 0.0
        %922 = vmatprep.subr.mxu0 0.0
        %923 = vmatpush1.msra.mxu0 0.0
        %924 = vmatprep.subr.mxu0 0.0
        %925 = vmatpush1.msra.mxu0 0.0
        %926 = vmatprep.subr.mxu0 0.0
        %927 = vmatpush1.msra.mxu0 0.0
        %928 = vmatprep.subr.mxu0 0.0
        %929 = vmatpush1.msra.mxu0 0.0
        %930 = vmatprep.subr.mxu0 0.0
        %931 = vmatpush1.msra.mxu0 0.0
        %932 = vmatprep.subr.mxu0 0.0
        %933 = vmatpush1.msra.mxu0 0.0
        %934 = vmatprep.subr.mxu0 0.0
        %935 = vmatpush1.msra.mxu0 0.0
        %936 = vmatprep.subr.mxu0 0.0
        %937 = vmatpush1.msra.mxu0 0.0
        %938 = vmatprep.subr.mxu0 0.0
        %939 = vmatpush1.msra.mxu0 0.0
        %940 = vmatprep.subr.mxu0 0.0
        %941 = vmatpush1.msra.mxu0 0.0
        %942 = vmatprep.subr.mxu0 0.0
        %943 = vmatpush1.msra.mxu0 0.0
        %944 = vmatprep.subr.mxu0 0.0
        %945 = vmatpush1.msra.mxu0 0.0
        %946 = vmatprep.subr.mxu0 0.0
        %947 = vmatpush1.msra.mxu0 0.0
        %948 = vmatprep.subr.mxu0 0.0
        %949 = vmatpush1.msra.mxu0 0.0
        %950 = vmatprep.subr.mxu0 0.0
        %951 = vmatpush1.msra.mxu0 0.0
        %952 = vmatprep.subr.mxu0 0.0
        %953 = vmatpush1.msra.mxu0 0.0
        %954 = vmatprep.mubr.f32.mxu0 0.0
        %955 = vmatmul.mubr.f32.gmra.mrb[0].mxu0 %v882
        %v956 = vpop.f32.mrb[0].mxu0
        %v957 = vadd.f32 0.0, %v956
        %v958 = vpop.f32.mrb[0].mxu0
        %v959 = vadd.f32 0.0, %v958
        %960 = vdwg.mxu0
        %v962 = vsel %vm605, %v878, 0
        %v965 = vsel %vm559, %v831, 0
        %v968 = vsel %vm559, %v832, 0
        %970 = vmatprep.subr.mxu0 %v968
        %971 = vmatpush1.msra.mxu0 %v965
        %972 = vmatprep.subr.mxu0 0.0
        %973 = vmatpush1.msra.mxu0 0.0
        %974 = vmatprep.subr.mxu0 0.0
        %975 = vmatpush1.msra.mxu0 0.0
        %976 = vmatprep.subr.mxu0 0.0
        %977 = vmatpush1.msra.mxu0 0.0
        %978 = vmatprep.subr.mxu0 0.0
        %979 = vmatpush1.msra.mxu0 0.0
        %980 = vmatprep.subr.mxu0 0.0
        %981 = vmatpush1.msra.mxu0 0.0
        %982 = vmatprep.subr.mxu0 0.0
        %983 = vmatpush1.msra.mxu0 0.0
        %984 = vmatprep.subr.mxu0 0.0
        %985 = vmatpush1.msra.mxu0 0.0
        %986 = vmatprep.subr.mxu0 0.0
        %987 = vmatpush1.msra.mxu0 0.0
        %988 = vmatprep.subr.mxu0 0.0
        %989 = vmatpush1.msra.mxu0 0.0
        %990 = vmatprep.subr.mxu0 0.0
        %991 = vmatpush1.msra.mxu0 0.0
        %992 = vmatprep.subr.mxu0 0.0
        %993 = vmatpush1.msra.mxu0 0.0
        %994 = vmatprep.subr.mxu0 0.0
        %995 = vmatpush1.msra.mxu0 0.0
        %996 = vmatprep.subr.mxu0 0.0
        %997 = vmatpush1.msra.mxu0 0.0
        %998 = vmatprep.subr.mxu0 0.0
        %999 = vmatpush1.msra.mxu0 0.0
        %1000 = vmatprep.subr.mxu0 0.0
        %1001 = vmatpush1.msra.mxu0 0.0
        %1002 = vmatprep.subr.mxu0 0.0
        %1003 = vmatpush1.msra.mxu0 0.0
        %1004 = vmatprep.subr.mxu0 0.0
        %1005 = vmatpush1.msra.mxu0 0.0
        %1006 = vmatprep.subr.mxu0 0.0
        %1007 = vmatpush1.msra.mxu0 0.0
        %1008 = vmatprep.subr.mxu0 0.0
        %1009 = vmatpush1.msra.mxu0 0.0
        %1010 = vmatprep.subr.mxu0 0.0
        %1011 = vmatpush1.msra.mxu0 0.0
        %1012 = vmatprep.subr.mxu0 0.0
        %1013 = vmatpush1.msra.mxu0 0.0
        %1014 = vmatprep.subr.mxu0 0.0
        %1015 = vmatpush1.msra.mxu0 0.0
        %1016 = vmatprep.subr.mxu0 0.0
        %1017 = vmatpush1.msra.mxu0 0.0
        %1018 = vmatprep.subr.mxu0 0.0
        %1019 = vmatpush1.msra.mxu0 0.0
        %1020 = vmatprep.subr.mxu0 0.0
        %1021 = vmatpush1.msra.mxu0 0.0
        %1022 = vmatprep.subr.mxu0 0.0
        %1023 = vmatpush1.msra.mxu0 0.0
        %1024 = vmatprep.subr.mxu0 0.0
        %1025 = vmatpush1.msra.mxu0 0.0
        %1026 = vmatprep.subr.mxu0 0.0
        %1027 = vmatpush1.msra.mxu0 0.0
        %1028 = vmatprep.subr.mxu0 0.0
        %1029 = vmatpush1.msra.mxu0 0.0
        %1030 = vmatprep.subr.mxu0 0.0
        %1031 = vmatpush1.msra.mxu0 0.0
        %1032 = vmatprep.subr.mxu0 0.0
        %1033 = vmatpush1.msra.mxu0 0.0
        %1034 = vmatprep.mubr.f32.mxu0 0.0
        %1035 = vmatmul.mubr.f32.gmra.mrb[0].mxu0 %v962
        %v1036 = vpop.f32.mrb[0].mxu0
        %v1037 = vadd.f32 %v957, %v1036
        %v1038 = vpop.f32.mrb[0].mxu0
        %v1039 = vadd.f32 %v959, %v1038
        %1040 = vdwg.mxu0
        %s1041 = scalar_lea.vmem %s11, 16
        %v1042 = vld [vmem:[%s1041] sm:$0xff]
        %v1044 = vsel %vm605, %v1042, 0
        %v1047 = vsel %vm559, %v874, 0
        %v1050 = vsel %vm559, %v875, 0
        %1052 = vmatprep.subr.mxu0 %v1050
        %1053 = vmatpush1.msra.mxu0 %v1047
        %1054 = vmatprep.subr.mxu0 0.0
        %1055 = vmatpush1.msra.mxu0 0.0
        %1056 = vmatprep.subr.mxu0 0.0
        %1057 = vmatpush1.msra.mxu0 0.0
        %1058 = vmatprep.subr.mxu0 0.0
        %1059 = vmatpush1.msra.mxu0 0.0
        %1060 = vmatprep.subr.mxu0 0.0
        %1061 = vmatpush1.msra.mxu0 0.0
        %1062 = vmatprep.subr.mxu0 0.0
        %1063 = vmatpush1.msra.mxu0 0.0
        %1064 = vmatprep.subr.mxu0 0.0
        %1065 = vmatpush1.msra.mxu0 0.0
        %1066 = vmatprep.subr.mxu0 0.0
        %1067 = vmatpush1.msra.mxu0 0.0
        %1068 = vmatprep.subr.mxu0 0.0
        %1069 = vmatpush1.msra.mxu0 0.0
        %1070 = vmatprep.subr.mxu0 0.0
        %1071 = vmatpush1.msra.mxu0 0.0
        %1072 = vmatprep.subr.mxu0 0.0
        %1073 = vmatpush1.msra.mxu0 0.0
        %1074 = vmatprep.subr.mxu0 0.0
        %1075 = vmatpush1.msra.mxu0 0.0
        %1076 = vmatprep.subr.mxu0 0.0
        %1077 = vmatpush1.msra.mxu0 0.0
        %1078 = vmatprep.subr.mxu0 0.0
        %1079 = vmatpush1.msra.mxu0 0.0
        %1080 = vmatprep.subr.mxu0 0.0
        %1081 = vmatpush1.msra.mxu0 0.0
        %1082 = vmatprep.subr.mxu0 0.0
        %1083 = vmatpush1.msra.mxu0 0.0
        %1084 = vmatprep.subr.mxu0 0.0
        %1085 = vmatpush1.msra.mxu0 0.0
        %1086 = vmatprep.subr.mxu0 0.0
        %1087 = vmatpush1.msra.mxu0 0.0
        %1088 = vmatprep.subr.mxu0 0.0
        %1089 = vmatpush1.msra.mxu0 0.0
        %1090 = vmatprep.subr.mxu0 0.0
        %1091 = vmatpush1.msra.mxu0 0.0
        %1092 = vmatprep.subr.mxu0 0.0
        %1093 = vmatpush1.msra.mxu0 0.0
        %1094 = vmatprep.subr.mxu0 0.0
        %1095 = vmatpush1.msra.mxu0 0.0
        %1096 = vmatprep.subr.mxu0 0.0
        %1097 = vmatpush1.msra.mxu0 0.0
        %1098 = vmatprep.subr.mxu0 0.0
        %1099 = vmatpush1.msra.mxu0 0.0
        %1100 = vmatprep.subr.mxu0 0.0
        %1101 = vmatpush1.msra.mxu0 0.0
        %1102 = vmatprep.subr.mxu0 0.0
        %1103 = vmatpush1.msra.mxu0 0.0
        %1104 = vmatprep.subr.mxu0 0.0
        %1105 = vmatpush1.msra.mxu0 0.0
        %1106 = vmatprep.subr.mxu0 0.0
        %1107 = vmatpush1.msra.mxu0 0.0
        %1108 = vmatprep.subr.mxu0 0.0
        %1109 = vmatpush1.msra.mxu0 0.0
        %1110 = vmatprep.subr.mxu0 0.0
        %1111 = vmatpush1.msra.mxu0 0.0
        %1112 = vmatprep.subr.mxu0 0.0
        %1113 = vmatpush1.msra.mxu0 0.0
        %1114 = vmatprep.subr.mxu0 0.0
        %1115 = vmatpush1.msra.mxu0 0.0
        %1116 = vmatprep.mubr.f32.mxu0 0.0
        %1117 = vmatmul.mubr.f32.gmra.mrb[0].mxu0 %v1044
        %v1118 = vpop.f32.mrb[0].mxu0
        %v1119 = vadd.f32 0.0, %v1118
        %v1120 = vpop.f32.mrb[0].mxu0
        %v1121 = vadd.f32 0.0, %v1120
        %1122 = vdwg.mxu0
        %v1123 = vadd.f32 %v1037, %v1119
        %v1124 = vadd.f32 %v1039, %v1121
        %s1125 = scalar_lea.vmem %s11, 24
        %v1126 = vld [vmem:[%s1125] sm:$0xff]
        %v1128 = vsel %vm605, %v1126, 0
        %v1131 = vsel %vm559, %v804, 0
        %v1134 = vsel %vm559, %v805, 0
        %1136 = vmatprep.subr.mxu0 %v1134
        %1137 = vmatpush1.msra.mxu0 %v1131
        %1138 = vmatprep.subr.mxu0 0.0
        %1139 = vmatpush1.msra.mxu0 0.0
        %1140 = vmatprep.subr.mxu0 0.0
        %1141 = vmatpush1.msra.mxu0 0.0
        %1142 = vmatprep.subr.mxu0 0.0
        %1143 = vmatpush1.msra.mxu0 0.0
        %1144 = vmatprep.subr.mxu0 0.0
        %1145 = vmatpush1.msra.mxu0 0.0
        %1146 = vmatprep.subr.mxu0 0.0
        %1147 = vmatpush1.msra.mxu0 0.0
        %1148 = vmatprep.subr.mxu0 0.0
        %1149 = vmatpush1.msra.mxu0 0.0
        %1150 = vmatprep.subr.mxu0 0.0
        %1151 = vmatpush1.msra.mxu0 0.0
        %1152 = vmatprep.subr.mxu0 0.0
        %1153 = vmatpush1.msra.mxu0 0.0
        %1154 = vmatprep.subr.mxu0 0.0
        %1155 = vmatpush1.msra.mxu0 0.0
        %1156 = vmatprep.subr.mxu0 0.0
        %1157 = vmatpush1.msra.mxu0 0.0
        %1158 = vmatprep.subr.mxu0 0.0
        %1159 = vmatpush1.msra.mxu0 0.0
        %1160 = vmatprep.subr.mxu0 0.0
        %1161 = vmatpush1.msra.mxu0 0.0
        %1162 = vmatprep.subr.mxu0 0.0
        %1163 = vmatpush1.msra.mxu0 0.0
        %1164 = vmatprep.subr.mxu0 0.0
        %1165 = vmatpush1.msra.mxu0 0.0
        %1166 = vmatprep.subr.mxu0 0.0
        %1167 = vmatpush1.msra.mxu0 0.0
        %1168 = vmatprep.subr.mxu0 0.0
        %1169 = vmatpush1.msra.mxu0 0.0
        %1170 = vmatprep.subr.mxu0 0.0
        %1171 = vmatpush1.msra.mxu0 0.0
        %1172 = vmatprep.subr.mxu0 0.0
        %1173 = vmatpush1.msra.mxu0 0.0
        %1174 = vmatprep.subr.mxu0 0.0
        %1175 = vmatpush1.msra.mxu0 0.0
        %1176 = vmatprep.subr.mxu0 0.0
        %1177 = vmatpush1.msra.mxu0 0.0
        %1178 = vmatprep.subr.mxu0 0.0
        %1179 = vmatpush1.msra.mxu0 0.0
        %1180 = vmatprep.subr.mxu0 0.0
        %1181 = vmatpush1.msra.mxu0 0.0
        %1182 = vmatprep.subr.mxu0 0.0
        %1183 = vmatpush1.msra.mxu0 0.0
        %1184 = vmatprep.subr.mxu0 0.0
        %1185 = vmatpush1.msra.mxu0 0.0
        %1186 = vmatprep.subr.mxu0 0.0
        %1187 = vmatpush1.msra.mxu0 0.0
        %1188 = vmatprep.subr.mxu0 0.0
        %1189 = vmatpush1.msra.mxu0 0.0
        %1190 = vmatprep.subr.mxu0 0.0
        %1191 = vmatpush1.msra.mxu0 0.0
        %1192 = vmatprep.subr.mxu0 0.0
        %1193 = vmatpush1.msra.mxu0 0.0
        %1194 = vmatprep.subr.mxu0 0.0
        %1195 = vmatpush1.msra.mxu0 0.0
        %1196 = vmatprep.subr.mxu0 0.0
        %1197 = vmatpush1.msra.mxu0 0.0
        %1198 = vmatprep.subr.mxu0 0.0
        %1199 = vmatpush1.msra.mxu0 0.0
        %1200 = vmatprep.mubr.f32.mxu0 0.0
        %1201 = vmatmul.mubr.f32.gmra.mrb[0].mxu0 %v1128
        %v1202 = vpop.f32.mrb[0].mxu0
        %v1203 = vadd.f32 0.0, %v1202
        %v1204 = vpop.f32.mrb[0].mxu0
        %v1205 = vadd.f32 0.0, %v1204
        %1206 = vdwg.mxu0
        %v1207 = vadd.f32 %v1123, %v1203
        %v1208 = vadd.f32 %v1124, %v1205
        %s1209 = scalar_lea.vmem %s11, 32
        %v1210 = vld [vmem:[%s1209] sm:$0xff]
        %v1212 = vsel %vm605, %v1210, 0
        %v1214 = vsel %vm559, %v746, 0
        %v1216 = vsel %vm559, %v748, 0
        %1218 = vmatprep.subr.mxu0 %v1216
        %1219 = vmatpush1.msra.mxu0 %v1214
        %1220 = vmatprep.subr.mxu0 0.0
        %1221 = vmatpush1.msra.mxu0 0.0
        %1222 = vmatprep.subr.mxu0 0.0
        %1223 = vmatpush1.msra.mxu0 0.0
        %1224 = vmatprep.subr.mxu0 0.0
        %1225 = vmatpush1.msra.mxu0 0.0
        %1226 = vmatprep.subr.mxu0 0.0
        %1227 = vmatpush1.msra.mxu0 0.0
        %1228 = vmatprep.subr.mxu0 0.0
        %1229 = vmatpush1.msra.mxu0 0.0
        %1230 = vmatprep.subr.mxu0 0.0
        %1231 = vmatpush1.msra.mxu0 0.0
        %1232 = vmatprep.subr.mxu0 0.0
        %1233 = vmatpush1.msra.mxu0 0.0
        %1234 = vmatprep.subr.mxu0 0.0
        %1235 = vmatpush1.msra.mxu0 0.0
        %1236 = vmatprep.subr.mxu0 0.0
        %1237 = vmatpush1.msra.mxu0 0.0
        %1238 = vmatprep.subr.mxu0 0.0
        %1239 = vmatpush1.msra.mxu0 0.0
        %1240 = vmatprep.subr.mxu0 0.0
        %1241 = vmatpush1.msra.mxu0 0.0
        %1242 = vmatprep.subr.mxu0 0.0
        %1243 = vmatpush1.msra.mxu0 0.0
        %1244 = vmatprep.subr.mxu0 0.0
        %1245 = vmatpush1.msra.mxu0 0.0
        %1246 = vmatprep.subr.mxu0 0.0
        %1247 = vmatpush1.msra.mxu0 0.0
        %1248 = vmatprep.subr.mxu0 0.0
        %1249 = vmatpush1.msra.mxu0 0.0
        %1250 = vmatprep.subr.mxu0 0.0
        %1251 = vmatpush1.msra.mxu0 0.0
        %1252 = vmatprep.subr.mxu0 0.0
        %1253 = vmatpush1.msra.mxu0 0.0
        %1254 = vmatprep.subr.mxu0 0.0
        %1255 = vmatpush1.msra.mxu0 0.0
        %1256 = vmatprep.subr.mxu0 0.0
        %1257 = vmatpush1.msra.mxu0 0.0
        %1258 = vmatprep.subr.mxu0 0.0
        %1259 = vmatpush1.msra.mxu0 0.0
        %1260 = vmatprep.subr.mxu0 0.0
        %1261 = vmatpush1.msra.mxu0 0.0
        %1262 = vmatprep.subr.mxu0 0.0
        %1263 = vmatpush1.msra.mxu0 0.0
        %1264 = vmatprep.subr.mxu0 0.0
        %1265 = vmatpush1.msra.mxu0 0.0
        %1266 = vmatprep.subr.mxu0 0.0
        %1267 = vmatpush1.msra.mxu0 0.0
        %1268 = vmatprep.subr.mxu0 0.0
        %1269 = vmatpush1.msra.mxu0 0.0
        %1270 = vmatprep.subr.mxu0 0.0
        %1271 = vmatpush1.msra.mxu0 0.0
        %1272 = vmatprep.subr.mxu0 0.0
        %1273 = vmatpush1.msra.mxu0 0.0
        %1274 = vmatprep.subr.mxu0 0.0
        %1275 = vmatpush1.msra.mxu0 0.0
        %1276 = vmatprep.subr.mxu0 0.0
        %1277 = vmatpush1.msra.mxu0 0.0
        %1278 = vmatprep.subr.mxu0 0.0
        %1279 = vmatpush1.msra.mxu0 0.0
        %1280 = vmatprep.subr.mxu0 0.0
        %1281 = vmatpush1.msra.mxu0 0.0
        %1282 = vmatprep.mubr.f32.mxu0 0.0
        %1283 = vmatmul.mubr.f32.gmra.mrb[0].mxu0 %v1212
        %v1284 = vpop.f32.mrb[0].mxu0
        %v1285 = vadd.f32 0.0, %v1284
        %v1286 = vpop.f32.mrb[0].mxu0
        %v1287 = vadd.f32 0.0, %v1286
        %1288 = vdwg.mxu0
        %v1289 = vadd.f32 %v1207, %v1285
        %v1290 = vadd.f32 %v1208, %v1287
        %s1291 = scalar_lea.vmem %s11, 40
        %v1292 = vld [vmem:[%s1291] sm:$0xff]
        %v1294 = vsel %vm605, %v1292, 0
        %v1297 = vsel %vm559, %v777, 0
        %v1300 = vsel %vm559, %v778, 0
        %1302 = vmatprep.subr.mxu0 %v1300
        %1303 = vmatpush1.msra.mxu0 %v1297
        %1304 = vmatprep.subr.mxu0 0.0
        %1305 = vmatpush1.msra.mxu0 0.0
        %1306 = vmatprep.subr.mxu0 0.0
        %1307 = vmatpush1.msra.mxu0 0.0
        %1308 = vmatprep.subr.mxu0 0.0
        %1309 = vmatpush1.msra.mxu0 0.0
        %1310 = vmatprep.subr.mxu0 0.0
        %1311 = vmatpush1.msra.mxu0 0.0
        %1312 = vmatprep.subr.mxu0 0.0
        %1313 = vmatpush1.msra.mxu0 0.0
        %1314 = vmatprep.subr.mxu0 0.0
        %1315 = vmatpush1.msra.mxu0 0.0
        %1316 = vmatprep.subr.mxu0 0.0
        %1317 = vmatpush1.msra.mxu0 0.0
        %1318 = vmatprep.subr.mxu0 0.0
        %1319 = vmatpush1.msra.mxu0 0.0
        %1320 = vmatprep.subr.mxu0 0.0
        %1321 = vmatpush1.msra.mxu0 0.0
        %1322 = vmatprep.subr.mxu0 0.0
        %1323 = vmatpush1.msra.mxu0 0.0
        %1324 = vmatprep.subr.mxu0 0.0
        %1325 = vmatpush1.msra.mxu0 0.0
        %1326 = vmatprep.subr.mxu0 0.0
        %1327 = vmatpush1.msra.mxu0 0.0
        %1328 = vmatprep.subr.mxu0 0.0
        %1329 = vmatpush1.msra.mxu0 0.0
        %1330 = vmatprep.subr.mxu0 0.0
        %1331 = vmatpush1.msra.mxu0 0.0
        %1332 = vmatprep.subr.mxu0 0.0
        %1333 = vmatpush1.msra.mxu0 0.0
        %1334 = vmatprep.subr.mxu0 0.0
        %1335 = vmatpush1.msra.mxu0 0.0
        %1336 = vmatprep.subr.mxu0 0.0
        %1337 = vmatpush1.msra.mxu0 0.0
        %1338 = vmatprep.subr.mxu0 0.0
        %1339 = vmatpush1.msra.mxu0 0.0
        %1340 = vmatprep.subr.mxu0 0.0
        %1341 = vmatpush1.msra.mxu0 0.0
        %1342 = vmatprep.subr.mxu0 0.0
        %1343 = vmatpush1.msra.mxu0 0.0
        %1344 = vmatprep.subr.mxu0 0.0
        %1345 = vmatpush1.msra.mxu0 0.0
        %1346 = vmatprep.subr.mxu0 0.0
        %1347 = vmatpush1.msra.mxu0 0.0
        %1348 = vmatprep.subr.mxu0 0.0
        %1349 = vmatpush1.msra.mxu0 0.0
        %1350 = vmatprep.subr.mxu0 0.0
        %1351 = vmatpush1.msra.mxu0 0.0
        %1352 = vmatprep.subr.mxu0 0.0
        %1353 = vmatpush1.msra.mxu0 0.0
        %1354 = vmatprep.subr.mxu0 0.0
        %1355 = vmatpush1.msra.mxu0 0.0
        %1356 = vmatprep.subr.mxu0 0.0
        %1357 = vmatpush1.msra.mxu0 0.0
        %1358 = vmatprep.subr.mxu0 0.0
        %1359 = vmatpush1.msra.mxu0 0.0
        %1360 = vmatprep.subr.mxu0 0.0
        %1361 = vmatpush1.msra.mxu0 0.0
        %1362 = vmatprep.subr.mxu0 0.0
        %1363 = vmatpush1.msra.mxu0 0.0
        %1364 = vmatprep.subr.mxu0 0.0
        %1365 = vmatpush1.msra.mxu0 0.0
        %1366 = vmatprep.mubr.f32.mxu0 0.0
        %1367 = vmatmul.mubr.f32.gmra.mrb[0].mxu0 %v1294
        %v1368 = vpop.f32.mrb[0].mxu0
        %v1369 = vadd.f32 0.0, %v1368
        %v1370 = vpop.f32.mrb[0].mxu0
        %v1371 = vadd.f32 0.0, %v1370
        %1372 = vdwg.mxu0
        %v1373 = vadd.f32 %v1289, %v1369
        %v1374 = vadd.f32 %v1290, %v1371
        %s1375 = scalar_lea.vmem %s11, 48
        %v1376 = vld [vmem:[%s1375] sm:$0xff]
        %v1378 = vsel %vm605, %v1376, 0
        %v1381 = vsel %vm559, %v844, 0
        %v1384 = vsel %vm559, %v845, 0
        %1386 = vmatprep.subr.mxu0 %v1384
        %1387 = vmatpush1.msra.mxu0 %v1381
        %1388 = vmatprep.subr.mxu0 0.0
        %1389 = vmatpush1.msra.mxu0 0.0
        %1390 = vmatprep.subr.mxu0 0.0
        %1391 = vmatpush1.msra.mxu0 0.0
        %1392 = vmatprep.subr.mxu0 0.0
        %1393 = vmatpush1.msra.mxu0 0.0
        %1394 = vmatprep.subr.mxu0 0.0
        %1395 = vmatpush1.msra.mxu0 0.0
        %1396 = vmatprep.subr.mxu0 0.0
        %1397 = vmatpush1.msra.mxu0 0.0
        %1398 = vmatprep.subr.mxu0 0.0
        %1399 = vmatpush1.msra.mxu0 0.0
        %1400 = vmatprep.subr.mxu0 0.0
        %1401 = vmatpush1.msra.mxu0 0.0
        %1402 = vmatprep.subr.mxu0 0.0
        %1403 = vmatpush1.msra.mxu0 0.0
        %1404 = vmatprep.subr.mxu0 0.0
        %1405 = vmatpush1.msra.mxu0 0.0
        %1406 = vmatprep.subr.mxu0 0.0
        %1407 = vmatpush1.msra.mxu0 0.0
        %1408 = vmatprep.subr.mxu0 0.0
        %1409 = vmatpush1.msra.mxu0 0.0
        %1410 = vmatprep.subr.mxu0 0.0
        %1411 = vmatpush1.msra.mxu0 0.0
        %1412 = vmatprep.subr.mxu0 0.0
        %1413 = vmatpush1.msra.mxu0 0.0
        %1414 = vmatprep.subr.mxu0 0.0
        %1415 = vmatpush1.msra.mxu0 0.0
        %1416 = vmatprep.subr.mxu0 0.0
        %1417 = vmatpush1.msra.mxu0 0.0
        %1418 = vmatprep.subr.mxu0 0.0
        %1419 = vmatpush1.msra.mxu0 0.0
        %1420 = vmatprep.subr.mxu0 0.0
        %1421 = vmatpush1.msra.mxu0 0.0
        %1422 = vmatprep.subr.mxu0 0.0
        %1423 = vmatpush1.msra.mxu0 0.0
        %1424 = vmatprep.subr.mxu0 0.0
        %1425 = vmatpush1.msra.mxu0 0.0
        %1426 = vmatprep.subr.mxu0 0.0
        %1427 = vmatpush1.msra.mxu0 0.0
        %1428 = vmatprep.subr.mxu0 0.0
        %1429 = vmatpush1.msra.mxu0 0.0
        %1430 = vmatprep.subr.mxu0 0.0
        %1431 = vmatpush1.msra.mxu0 0.0
        %1432 = vmatprep.subr.mxu0 0.0
        %1433 = vmatpush1.msra.mxu0 0.0
        %1434 = vmatprep.subr.mxu0 0.0
        %1435 = vmatpush1.msra.mxu0 0.0
        %1436 = vmatprep.subr.mxu0 0.0
        %1437 = vmatpush1.msra.mxu0 0.0
        %1438 = vmatprep.subr.mxu0 0.0
        %1439 = vmatpush1.msra.mxu0 0.0
        %1440 = vmatprep.subr.mxu0 0.0
        %1441 = vmatpush1.msra.mxu0 0.0
        %1442 = vmatprep.subr.mxu0 0.0
        %1443 = vmatpush1.msra.mxu0 0.0
        %1444 = vmatprep.subr.mxu0 0.0
        %1445 = vmatpush1.msra.mxu0 0.0
        %1446 = vmatprep.subr.mxu0 0.0
        %1447 = vmatpush1.msra.mxu0 0.0
        %1448 = vmatprep.subr.mxu0 0.0
        %1449 = vmatpush1.msra.mxu0 0.0
        %1450 = vmatprep.mubr.f32.mxu0 0.0
        %1451 = vmatmul.mubr.f32.gmra.mrb[0].mxu0 %v1378
        %v1452 = vpop.f32.mrb[0].mxu0
        %v1453 = vadd.f32 0.0, %v1452
        %v1454 = vpop.f32.mrb[0].mxu0
        %v1455 = vadd.f32 0.0, %v1454
        %1456 = vdwg.mxu0
        %v1457 = vadd.f32 %v1373, %v1453
        %v1458 = vadd.f32 %v1374, %v1455
        %s1459 = scalar_lea.vmem %s11, 56
        %v1460 = vld [vmem:[%s1459] sm:$0xff]
        %v1462 = vsel %vm605, %v1460, 0
        %v1465 = vsel %vm559, %v860, 0
        %v1468 = vsel %vm559, %v861, 0
        %1470 = vmatprep.subr.mxu0 %v1468
        %1471 = vmatpush1.msra.mxu0 %v1465
        %1472 = vmatprep.subr.mxu0 0.0
        %1473 = vmatpush1.msra.mxu0 0.0
        %1474 = vmatprep.subr.mxu0 0.0
        %1475 = vmatpush1.msra.mxu0 0.0
        %1476 = vmatprep.subr.mxu0 0.0
        %1477 = vmatpush1.msra.mxu0 0.0
        %1478 = vmatprep.subr.mxu0 0.0
        %1479 = vmatpush1.msra.mxu0 0.0
        %1480 = vmatprep.subr.mxu0 0.0
        %1481 = vmatpush1.msra.mxu0 0.0
        %1482 = vmatprep.subr.mxu0 0.0
        %1483 = vmatpush1.msra.mxu0 0.0
        %1484 = vmatprep.subr.mxu0 0.0
        %1485 = vmatpush1.msra.mxu0 0.0
        %1486 = vmatprep.subr.mxu0 0.0
        %1487 = vmatpush1.msra.mxu0 0.0
        %1488 = vmatprep.subr.mxu0 0.0
        %1489 = vmatpush1.msra.mxu0 0.0
        %1490 = vmatprep.subr.mxu0 0.0
        %1491 = vmatpush1.msra.mxu0 0.0
        %1492 = vmatprep.subr.mxu0 0.0
        %1493 = vmatpush1.msra.mxu0 0.0
        %1494 = vmatprep.subr.mxu0 0.0
        %1495 = vmatpush1.msra.mxu0 0.0
        %1496 = vmatprep.subr.mxu0 0.0
        %1497 = vmatpush1.msra.mxu0 0.0
        %1498 = vmatprep.subr.mxu0 0.0
        %1499 = vmatpush1.msra.mxu0 0.0
        %1500 = vmatprep.subr.mxu0 0.0
        %1501 = vmatpush1.msra.mxu0 0.0
        %1502 = vmatprep.subr.mxu0 0.0
        %1503 = vmatpush1.msra.mxu0 0.0
        %1504 = vmatprep.subr.mxu0 0.0
        %1505 = vmatpush1.msra.mxu0 0.0
        %1506 = vmatprep.subr.mxu0 0.0
        %1507 = vmatpush1.msra.mxu0 0.0
        %1508 = vmatprep.subr.mxu0 0.0
        %1509 = vmatpush1.msra.mxu0 0.0
        %1510 = vmatprep.subr.mxu0 0.0
        %1511 = vmatpush1.msra.mxu0 0.0
        %1512 = vmatprep.subr.mxu0 0.0
        %1513 = vmatpush1.msra.mxu0 0.0
        %1514 = vmatprep.subr.mxu0 0.0
        %1515 = vmatpush1.msra.mxu0 0.0
        %1516 = vmatprep.subr.mxu0 0.0
        %1517 = vmatpush1.msra.mxu0 0.0
        %1518 = vmatprep.subr.mxu0 0.0
        %1519 = vmatpush1.msra.mxu0 0.0
        %1520 = vmatprep.subr.mxu0 0.0
        %1521 = vmatpush1.msra.mxu0 0.0
        %1522 = vmatprep.subr.mxu0 0.0
        %1523 = vmatpush1.msra.mxu0 0.0
        %1524 = vmatprep.subr.mxu0 0.0
        %1525 = vmatpush1.msra.mxu0 0.0
        %1526 = vmatprep.subr.mxu0 0.0
        %1527 = vmatpush1.msra.mxu0 0.0
        %1528 = vmatprep.subr.mxu0 0.0
        %1529 = vmatpush1.msra.mxu0 0.0
        %1530 = vmatprep.subr.mxu0 0.0
        %1531 = vmatpush1.msra.mxu0 0.0
        %1532 = vmatprep.subr.mxu0 0.0
        %1533 = vmatpush1.msra.mxu0 0.0
        %1534 = vmatprep.mubr.f32.mxu0 0.0
        %1535 = vmatmul.mubr.f32.gmra.mrb[0].mxu0 %v1462
        %v1536 = vpop.f32.mrb[0].mxu0
        %v1537 = vadd.f32 0.0, %v1536
        %v1538 = vpop.f32.mrb[0].mxu0
        %v1539 = vadd.f32 0.0, %v1538
        %1540 = vdwg.mxu0
        %v1541 = vadd.f32 %v1457, %v1537
        %v1542 = vadd.f32 %v1458, %v1539
        %s1543 = scalar_lea.vmem %s11, 64
        %v1544 = vld [vmem:[%s1543] sm:$0xff]
        %v1546 = vsel %vm605, %v1544, 0
        %v1549 = vsel %vm559, %v876, 0
        %v1552 = vsel %vm559, %v877, 0
        %1554 = vmatprep.subr.mxu0 %v1552
        %1555 = vmatpush1.msra.mxu0 %v1549
        %1556 = vmatprep.subr.mxu0 0.0
        %1557 = vmatpush1.msra.mxu0 0.0
        %1558 = vmatprep.subr.mxu0 0.0
        %1559 = vmatpush1.msra.mxu0 0.0
        %1560 = vmatprep.subr.mxu0 0.0
        %1561 = vmatpush1.msra.mxu0 0.0
        %1562 = vmatprep.subr.mxu0 0.0
        %1563 = vmatpush1.msra.mxu0 0.0
        %1564 = vmatprep.subr.mxu0 0.0
        %1565 = vmatpush1.msra.mxu0 0.0
        %1566 = vmatprep.subr.mxu0 0.0
        %1567 = vmatpush1.msra.mxu0 0.0
        %1568 = vmatprep.subr.mxu0 0.0
        %1569 = vmatpush1.msra.mxu0 0.0
        %1570 = vmatprep.subr.mxu0 0.0
        %1571 = vmatpush1.msra.mxu0 0.0
        %1572 = vmatprep.subr.mxu0 0.0
        %1573 = vmatpush1.msra.mxu0 0.0
        %1574 = vmatprep.subr.mxu0 0.0
        %1575 = vmatpush1.msra.mxu0 0.0
        %1576 = vmatprep.subr.mxu0 0.0
        %1577 = vmatpush1.msra.mxu0 0.0
        %1578 = vmatprep.subr.mxu0 0.0
        %1579 = vmatpush1.msra.mxu0 0.0
        %1580 = vmatprep.subr.mxu0 0.0
        %1581 = vmatpush1.msra.mxu0 0.0
        %1582 = vmatprep.subr.mxu0 0.0
        %1583 = vmatpush1.msra.mxu0 0.0
        %1584 = vmatprep.subr.mxu0 0.0
        %1585 = vmatpush1.msra.mxu0 0.0
        %1586 = vmatprep.subr.mxu0 0.0
        %1587 = vmatpush1.msra.mxu0 0.0
        %1588 = vmatprep.subr.mxu0 0.0
        %1589 = vmatpush1.msra.mxu0 0.0
        %1590 = vmatprep.subr.mxu0 0.0
        %1591 = vmatpush1.msra.mxu0 0.0
        %1592 = vmatprep.subr.mxu0 0.0
        %1593 = vmatpush1.msra.mxu0 0.0
        %1594 = vmatprep.subr.mxu0 0.0
        %1595 = vmatpush1.msra.mxu0 0.0
        %1596 = vmatprep.subr.mxu0 0.0
        %1597 = vmatpush1.msra.mxu0 0.0
        %1598 = vmatprep.subr.mxu0 0.0
        %1599 = vmatpush1.msra.mxu0 0.0
        %1600 = vmatprep.subr.mxu0 0.0
        %1601 = vmatpush1.msra.mxu0 0.0
        %1602 = vmatprep.subr.mxu0 0.0
        %1603 = vmatpush1.msra.mxu0 0.0
        %1604 = vmatprep.subr.mxu0 0.0
        %1605 = vmatpush1.msra.mxu0 0.0
        %1606 = vmatprep.subr.mxu0 0.0
        %1607 = vmatpush1.msra.mxu0 0.0
        %1608 = vmatprep.subr.mxu0 0.0
        %1609 = vmatpush1.msra.mxu0 0.0
        %1610 = vmatprep.subr.mxu0 0.0
        %1611 = vmatpush1.msra.mxu0 0.0
        %1612 = vmatprep.subr.mxu0 0.0
        %1613 = vmatpush1.msra.mxu0 0.0
        %1614 = vmatprep.subr.mxu0 0.0
        %1615 = vmatpush1.msra.mxu0 0.0
        %1616 = vmatprep.subr.mxu0 0.0
        %1617 = vmatpush1.msra.mxu0 0.0
        %1618 = vmatprep.mubr.f32.mxu0 0.0
        %1619 = vmatmul.mubr.f32.gmra.mrb[0].mxu0 %v1546
        %v1620 = vpop.f32.mrb[0].mxu0
        %v1621 = vadd.f32 0.0, %v1620
        %v1622 = vpop.f32.mrb[0].mxu0
        %v1623 = vadd.f32 0.0, %v1622
        %1624 = vdwg.mxu0
        %v1625 = vadd.f32 %v1541, %v1621
        %v1626 = vadd.f32 %v1542, %v1623
        %v1627 = vld [vmem:[%s12] sm:$0xff]
        %1629 = vset.pattern.permute.xlu0 0
        %1630 = vperm.xlu0 %1629, %v1627
        %v1631 = vpop.permute.xlu0 %1630
        %v1633 = vadd.f32 %v1625, %v1631
        %v1634 = vadd.f32 %v1626, %v1631
        %v1635 = vmul.f32 %v1633, 0.3
        %v1636 = vmul.f32 %v1634, 0.3
        %v1637 = vmax.f32 %v1633, %v1635
        %v1638 = vmax.f32 %v1634, %v1636
        %1639 = vrot.lane.b32.xlu0 %v1637, 15
        %v1640 = vpop.permute.xlu0 %1639
        %1641 = vrot.lane.b32.xlu0 %v1638, 15
        %v1642 = vpop.permute.xlu0 %1641
        %v1643 = vsel %vm756, %v1640, %v1642
        %v1644 = vsel %vm756, %v1642, %v1640
        %1645 = vrot.lane.b32.xlu0 %v1637, 127
        %v1646 = vpop.permute.xlu0 %1645
        %1647 = vrot.lane.b32.xlu0 %v1638, 127
        %v1648 = vpop.permute.xlu0 %1647
        %v1649 = vsel %vm763, %v1646, %v1648
        %v1650 = vsel %vm763, %v1648, %v1646
        %v1651 = vsel %vm775, %v1644, %v1649
        %v1652 = vsel %vm776, %v1643, %v1650
        %1653 = vrot.lane.b32.xlu0 %v1637, 113
        %v1654 = vpop.permute.xlu0 %1653
        %1655 = vrot.lane.b32.xlu0 %v1638, 113
        %v1656 = vpop.permute.xlu0 %1655
        %v1657 = vsel %vm783, %v1654, %v1656
        %v1658 = vsel %vm783, %v1656, %v1654
        %1659 = vrot.lane.b32.xlu0 %v1637, 1
        %v1660 = vpop.permute.xlu0 %1659
        %1661 = vrot.lane.b32.xlu0 %v1638, 1
        %v1662 = vpop.permute.xlu0 %1661
        %v1663 = vsel %vm790, %v1660, %v1662
        %v1664 = vsel %vm790, %v1662, %v1660
        %v1665 = vsel %vm802, %v1657, %v1664
        %v1666 = vsel %vm803, %v1658, %v1663
        %1667 = vrot.lane.b32.xlu0 %v1665, 112
        %v1668 = vpop.permute.xlu0 %1667
        %1669 = vrot.lane.b32.xlu0 %v1666, 112
        %v1670 = vpop.permute.xlu0 %1669
        %v1671 = vsel %vm810, %v1668, %v1670
        %v1672 = vsel %vm810, %v1670, %v1668
        %1673 = vrot.lane.b32.xlu0 %v1665, 16
        %v1674 = vpop.permute.xlu0 %1673
        %1675 = vrot.lane.b32.xlu0 %v1666, 16
        %v1676 = vpop.permute.xlu0 %1675
        %v1677 = vsel %vm817, %v1674, %v1676
        %v1678 = vsel %vm817, %v1676, %v1674
        %v1679 = vsel %vm829, %v1671, %v1678
        %v1680 = vsel %vm830, %v1672, %v1677
        %v1681 = vsel %vm842, %v1678, %v1671
        %v1682 = vsel %vm843, %v1677, %v1672
        %1683 = vrot.lane.b32.xlu0 %v1637, 112
        %v1684 = vpop.permute.xlu0 %1683
        %1685 = vrot.lane.b32.xlu0 %v1638, 112
        %v1686 = vpop.permute.xlu0 %1685
        %v1687 = vsel %vm810, %v1684, %v1686
        %v1688 = vsel %vm810, %v1686, %v1684
        %1689 = vrot.lane.b32.xlu0 %v1637, 16
        %v1690 = vpop.permute.xlu0 %1689
        %1691 = vrot.lane.b32.xlu0 %v1638, 16
        %v1692 = vpop.permute.xlu0 %1691
        %v1693 = vsel %vm817, %v1690, %v1692
        %v1694 = vsel %vm817, %v1692, %v1690
        %v1695 = vsel %vm829, %v1687, %v1694
        %v1696 = vsel %vm830, %v1688, %v1693
        %v1697 = vsel %vm842, %v1694, %v1687
        %v1698 = vsel %vm843, %v1693, %v1688
        %1699 = vrot.lane.b32.xlu0 %v1651, 112
        %v1700 = vpop.permute.xlu0 %1699
        %1701 = vrot.lane.b32.xlu0 %v1652, 112
        %v1702 = vpop.permute.xlu0 %1701
        %v1703 = vsel %vm810, %v1700, %v1702
        %v1704 = vsel %vm810, %v1702, %v1700
        %1705 = vrot.lane.b32.xlu0 %v1651, 16
        %v1706 = vpop.permute.xlu0 %1705
        %1707 = vrot.lane.b32.xlu0 %v1652, 16
        %v1708 = vpop.permute.xlu0 %1707
        %v1709 = vsel %vm817, %v1706, %v1708
        %v1710 = vsel %vm817, %v1708, %v1706
        %v1711 = vsel %vm829, %v1703, %v1710
        %v1712 = vsel %vm830, %v1704, %v1709
        %v1713 = vsel %vm842, %v1710, %v1703
        %v1714 = vsel %vm843, %v1709, %v1704
        %v1715 = vld [vmem:[%s13] sm:$0xff]
        %s1716 = scalar_lea.vmem %s13, 8
        %v1717 = vld [vmem:[%s1716] sm:$0xff]
        %vm1718 = vcmask 64512
        %v1720 = vsel %vm1718, %v1717, 0
        %1722 = vmatprep.subr.mxu0 %v1696
        %1723 = vmatpush1.msra.mxu0 %v1695
        %1724 = vmatprep.subr.mxu0 0.0
        %1725 = vmatpush1.msra.mxu0 0.0
        %1726 = vmatprep.subr.mxu0 0.0
        %1727 = vmatpush1.msra.mxu0 0.0
        %1728 = vmatprep.subr.mxu0 0.0
        %1729 = vmatpush1.msra.mxu0 0.0
        %1730 = vmatprep.subr.mxu0 0.0
        %1731 = vmatpush1.msra.mxu0 0.0
        %1732 = vmatprep.subr.mxu0 0.0
        %1733 = vmatpush1.msra.mxu0 0.0
        %1734 = vmatprep.subr.mxu0 0.0
        %1735 = vmatpush1.msra.mxu0 0.0
        %1736 = vmatprep.subr.mxu0 0.0
        %1737 = vmatpush1.msra.mxu0 0.0
        %1738 = vmatprep.subr.mxu0 0.0
        %1739 = vmatpush1.msra.mxu0 0.0
        %1740 = vmatprep.subr.mxu0 0.0
        %1741 = vmatpush1.msra.mxu0 0.0
        %1742 = vmatprep.subr.mxu0 0.0
        %1743 = vmatpush1.msra.mxu0 0.0
        %1744 = vmatprep.subr.mxu0 0.0
        %1745 = vmatpush1.msra.mxu0 0.0
        %1746 = vmatprep.subr.mxu0 0.0
        %1747 = vmatpush1.msra.mxu0 0.0
        %1748 = vmatprep.subr.mxu0 0.0
        %1749 = vmatpush1.msra.mxu0 0.0
        %1750 = vmatprep.subr.mxu0 0.0
        %1751 = vmatpush1.msra.mxu0 0.0
        %1752 = vmatprep.subr.mxu0 0.0
        %1753 = vmatpush1.msra.mxu0 0.0
        %1754 = vmatprep.subr.mxu0 0.0
        %1755 = vmatpush1.msra.mxu0 0.0
        %1756 = vmatprep.subr.mxu0 0.0
        %1757 = vmatpush1.msra.mxu0 0.0
        %1758 = vmatprep.subr.mxu0 0.0
        %1759 = vmatpush1.msra.mxu0 0.0
        %1760 = vmatprep.subr.mxu0 0.0
        %1761 = vmatpush1.msra.mxu0 0.0
        %1762 = vmatprep.subr.mxu0 0.0
        %1763 = vmatpush1.msra.mxu0 0.0
        %1764 = vmatprep.subr.mxu0 0.0
        %1765 = vmatpush1.msra.mxu0 0.0
        %1766 = vmatprep.subr.mxu0 0.0
        %1767 = vmatpush1.msra.mxu0 0.0
        %1768 = vmatprep.subr.mxu0 0.0
        %1769 = vmatpush1.msra.mxu0 0.0
        %1770 = vmatprep.subr.mxu0 0.0
        %1771 = vmatpush1.msra.mxu0 0.0
        %1772 = vmatprep.subr.mxu0 0.0
        %1773 = vmatpush1.msra.mxu0 0.0
        %1774 = vmatprep.subr.mxu0 0.0
        %1775 = vmatpush1.msra.mxu0 0.0
        %1776 = vmatprep.subr.mxu0 0.0
        %1777 = vmatpush1.msra.mxu0 0.0
        %1778 = vmatprep.subr.mxu0 0.0
        %1779 = vmatpush1.msra.mxu0 0.0
        %1780 = vmatprep.subr.mxu0 0.0
        %1781 = vmatpush1.msra.mxu0 0.0
        %1782 = vmatprep.subr.mxu0 0.0
        %1783 = vmatpush1.msra.mxu0 0.0
        %1784 = vmatprep.subr.mxu0 0.0
        %1785 = vmatpush1.msra.mxu0 0.0
        %1786 = vmatprep.mubr.f32.mxu0 0.0
        %1787 = vmatmul.mubr.f32.gmra.mrb[0].mxu0 %v1720
        %v1788 = vpop.f32.mrb[0].mxu0
        %v1789 = vadd.f32 0.0, %v1788
        %v1790 = vpop.f32.mrb[0].mxu0
        %v1791 = vadd.f32 0.0, %v1790
        %1792 = vdwg.mxu0
        %v1794 = vsel %vm1718, %v1715, 0
        %1796 = vmatprep.subr.mxu0 %v1680
        %1797 = vmatpush1.msra.mxu0 %v1679
        %1798 = vmatprep.subr.mxu0 0.0
        %1799 = vmatpush1.msra.mxu0 0.0
        %1800 = vmatprep.subr.mxu0 0.0
        %1801 = vmatpush1.msra.mxu0 0.0
        %1802 = vmatprep.subr.mxu0 0.0
        %1803 = vmatpush1.msra.mxu0 0.0
        %1804 = vmatprep.subr.mxu0 0.0
        %1805 = vmatpush1.msra.mxu0 0.0
        %1806 = vmatprep.subr.mxu0 0.0
        %1807 = vmatpush1.msra.mxu0 0.0
        %1808 = vmatprep.subr.mxu0 0.0
        %1809 = vmatpush1.msra.mxu0 0.0
        %1810 = vmatprep.subr.mxu0 0.0
        %1811 = vmatpush1.msra.mxu0 0.0
        %1812 = vmatprep.subr.mxu0 0.0
        %1813 = vmatpush1.msra.mxu0 0.0
        %1814 = vmatprep.subr.mxu0 0.0
        %1815 = vmatpush1.msra.mxu0 0.0
        %1816 = vmatprep.subr.mxu0 0.0
        %1817 = vmatpush1.msra.mxu0 0.0
        %1818 = vmatprep.subr.mxu0 0.0
        %1819 = vmatpush1.msra.mxu0 0.0
        %1820 = vmatprep.subr.mxu0 0.0
        %1821 = vmatpush1.msra.mxu0 0.0
        %1822 = vmatprep.subr.mxu0 0.0
        %1823 = vmatpush1.msra.mxu0 0.0
        %1824 = vmatprep.subr.mxu0 0.0
        %1825 = vmatpush1.msra.mxu0 0.0
        %1826 = vmatprep.subr.mxu0 0.0
        %1827 = vmatpush1.msra.mxu0 0.0
        %1828 = vmatprep.subr.mxu0 0.0
        %1829 = vmatpush1.msra.mxu0 0.0
        %1830 = vmatprep.subr.mxu0 0.0
        %1831 = vmatpush1.msra.mxu0 0.0
        %1832 = vmatprep.subr.mxu0 0.0
        %1833 = vmatpush1.msra.mxu0 0.0
        %1834 = vmatprep.subr.mxu0 0.0
        %1835 = vmatpush1.msra.mxu0 0.0
        %1836 = vmatprep.subr.mxu0 0.0
        %1837 = vmatpush1.msra.mxu0 0.0
        %1838 = vmatprep.subr.mxu0 0.0
        %1839 = vmatpush1.msra.mxu0 0.0
        %1840 = vmatprep.subr.mxu0 0.0
        %1841 = vmatpush1.msra.mxu0 0.0
        %1842 = vmatprep.subr.mxu0 0.0
        %1843 = vmatpush1.msra.mxu0 0.0
        %1844 = vmatprep.subr.mxu0 0.0
        %1845 = vmatpush1.msra.mxu0 0.0
        %1846 = vmatprep.subr.mxu0 0.0
        %1847 = vmatpush1.msra.mxu0 0.0
        %1848 = vmatprep.subr.mxu0 0.0
        %1849 = vmatpush1.msra.mxu0 0.0
        %1850 = vmatprep.subr.mxu0 0.0
        %1851 = vmatpush1.msra.mxu0 0.0
        %1852 = vmatprep.subr.mxu0 0.0
        %1853 = vmatpush1.msra.mxu0 0.0
        %1854 = vmatprep.subr.mxu0 0.0
        %1855 = vmatpush1.msra.mxu0 0.0
        %1856 = vmatprep.subr.mxu0 0.0
        %1857 = vmatpush1.msra.mxu0 0.0
        %1858 = vmatprep.subr.mxu0 0.0
        %1859 = vmatpush1.msra.mxu0 0.0
        %1860 = vmatprep.mubr.f32.mxu0 0.0
        %1861 = vmatmul.mubr.f32.gmra.mrb[0].mxu0 %v1794
        %v1862 = vpop.f32.mrb[0].mxu0
        %v1863 = vadd.f32 %v1789, %v1862
        %v1864 = vpop.f32.mrb[0].mxu0
        %v1865 = vadd.f32 %v1791, %v1864
        %1866 = vdwg.mxu0
        %s1867 = scalar_lea.vmem %s13, 16
        %v1868 = vld [vmem:[%s1867] sm:$0xff]
        %v1870 = vsel %vm1718, %v1868, 0
        %1872 = vmatprep.subr.mxu0 %v1712
        %1873 = vmatpush1.msra.mxu0 %v1711
        %1874 = vmatprep.subr.mxu0 0.0
        %1875 = vmatpush1.msra.mxu0 0.0
        %1876 = vmatprep.subr.mxu0 0.0
        %1877 = vmatpush1.msra.mxu0 0.0
        %1878 = vmatprep.subr.mxu0 0.0
        %1879 = vmatpush1.msra.mxu0 0.0
        %1880 = vmatprep.subr.mxu0 0.0
        %1881 = vmatpush1.msra.mxu0 0.0
        %1882 = vmatprep.subr.mxu0 0.0
        %1883 = vmatpush1.msra.mxu0 0.0
        %1884 = vmatprep.subr.mxu0 0.0
        %1885 = vmatpush1.msra.mxu0 0.0
        %1886 = vmatprep.subr.mxu0 0.0
        %1887 = vmatpush1.msra.mxu0 0.0
        %1888 = vmatprep.subr.mxu0 0.0
        %1889 = vmatpush1.msra.mxu0 0.0
        %1890 = vmatprep.subr.mxu0 0.0
        %1891 = vmatpush1.msra.mxu0 0.0
        %1892 = vmatprep.subr.mxu0 0.0
        %1893 = vmatpush1.msra.mxu0 0.0
        %1894 = vmatprep.subr.mxu0 0.0
        %1895 = vmatpush1.msra.mxu0 0.0
        %1896 = vmatprep.subr.mxu0 0.0
        %1897 = vmatpush1.msra.mxu0 0.0
        %1898 = vmatprep.subr.mxu0 0.0
        %1899 = vmatpush1.msra.mxu0 0.0
        %1900 = vmatprep.subr.mxu0 0.0
        %1901 = vmatpush1.msra.mxu0 0.0
        %1902 = vmatprep.subr.mxu0 0.0
        %1903 = vmatpush1.msra.mxu0 0.0
        %1904 = vmatprep.subr.mxu0 0.0
        %1905 = vmatpush1.msra.mxu0 0.0
        %1906 = vmatprep.subr.mxu0 0.0
        %1907 = vmatpush1.msra.mxu0 0.0
        %1908 = vmatprep.subr.mxu0 0.0
        %1909 = vmatpush1.msra.mxu0 0.0
        %1910 = vmatprep.subr.mxu0 0.0
        %1911 = vmatpush1.msra.mxu0 0.0
        %1912 = vmatprep.subr.mxu0 0.0
        %1913 = vmatpush1.msra.mxu0 0.0
        %1914 = vmatprep.subr.mxu0 0.0
        %1915 = vmatpush1.msra.mxu0 0.0
        %1916 = vmatprep.subr.mxu0 0.0
        %1917 = vmatpush1.msra.mxu0 0.0
        %1918 = vmatprep.subr.mxu0 0.0
        %1919 = vmatpush1.msra.mxu0 0.0
        %1920 = vmatprep.subr.mxu0 0.0
        %1921 = vmatpush1.msra.mxu0 0.0
        %1922 = vmatprep.subr.mxu0 0.0
        %1923 = vmatpush1.msra.mxu0 0.0
        %1924 = vmatprep.subr.mxu0 0.0
        %1925 = vmatpush1.msra.mxu0 0.0
        %1926 = vmatprep.subr.mxu0 0.0
        %1927 = vmatpush1.msra.mxu0 0.0
        %1928 = vmatprep.subr.mxu0 0.0
        %1929 = vmatpush1.msra.mxu0 0.0
        %1930 = vmatprep.subr.mxu0 0.0
        %1931 = vmatpush1.msra.mxu0 0.0
        %1932 = vmatprep.subr.mxu0 0.0
        %1933 = vmatpush1.msra.mxu0 0.0
        %1934 = vmatprep.subr.mxu0 0.0
        %1935 = vmatpush1.msra.mxu0 0.0
        %1936 = vmatprep.mubr.f32.mxu0 0.0
        %1937 = vmatmul.mubr.f32.gmra.mrb[0].mxu0 %v1870
        %v1938 = vpop.f32.mrb[0].mxu0
        %v1939 = vadd.f32 0.0, %v1938
        %v1940 = vpop.f32.mrb[0].mxu0
        %v1941 = vadd.f32 0.0, %v1940
        %1942 = vdwg.mxu0
        %v1943 = vadd.f32 %v1863, %v1939
        %v1944 = vadd.f32 %v1865, %v1941
        %s1945 = scalar_lea.vmem %s13, 24
        %v1946 = vld [vmem:[%s1945] sm:$0xff]
        %v1948 = vsel %vm1718, %v1946, 0
        %1950 = vmatprep.subr.mxu0 %v1666
        %1951 = vmatpush1.msra.mxu0 %v1665
        %1952 = vmatprep.subr.mxu0 0.0
        %1953 = vmatpush1.msra.mxu0 0.0
        %1954 = vmatprep.subr.mxu0 0.0
        %1955 = vmatpush1.msra.mxu0 0.0
        %1956 = vmatprep.subr.mxu0 0.0
        %1957 = vmatpush1.msra.mxu0 0.0
        %1958 = vmatprep.subr.mxu0 0.0
        %1959 = vmatpush1.msra.mxu0 0.0
        %1960 = vmatprep.subr.mxu0 0.0
        %1961 = vmatpush1.msra.mxu0 0.0
        %1962 = vmatprep.subr.mxu0 0.0
        %1963 = vmatpush1.msra.mxu0 0.0
        %1964 = vmatprep.subr.mxu0 0.0
        %1965 = vmatpush1.msra.mxu0 0.0
        %1966 = vmatprep.subr.mxu0 0.0
        %1967 = vmatpush1.msra.mxu0 0.0
        %1968 = vmatprep.subr.mxu0 0.0
        %1969 = vmatpush1.msra.mxu0 0.0
        %1970 = vmatprep.subr.mxu0 0.0
        %1971 = vmatpush1.msra.mxu0 0.0
        %1972 = vmatprep.subr.mxu0 0.0
        %1973 = vmatpush1.msra.mxu0 0.0
        %1974 = vmatprep.subr.mxu0 0.0
        %1975 = vmatpush1.msra.mxu0 0.0
        %1976 = vmatprep.subr.mxu0 0.0
        %1977 = vmatpush1.msra.mxu0 0.0
        %1978 = vmatprep.subr.mxu0 0.0
        %1979 = vmatpush1.msra.mxu0 0.0
        %1980 = vmatprep.subr.mxu0 0.0
        %1981 = vmatpush1.msra.mxu0 0.0
        %1982 = vmatprep.subr.mxu0 0.0
        %1983 = vmatpush1.msra.mxu0 0.0
        %1984 = vmatprep.subr.mxu0 0.0
        %1985 = vmatpush1.msra.mxu0 0.0
        %1986 = vmatprep.subr.mxu0 0.0
        %1987 = vmatpush1.msra.mxu0 0.0
        %1988 = vmatprep.subr.mxu0 0.0
        %1989 = vmatpush1.msra.mxu0 0.0
        %1990 = vmatprep.subr.mxu0 0.0
        %1991 = vmatpush1.msra.mxu0 0.0
        %1992 = vmatprep.subr.mxu0 0.0
        %1993 = vmatpush1.msra.mxu0 0.0
        %1994 = vmatprep.subr.mxu0 0.0
        %1995 = vmatpush1.msra.mxu0 0.0
        %1996 = vmatprep.subr.mxu0 0.0
        %1997 = vmatpush1.msra.mxu0 0.0
        %1998 = vmatprep.subr.mxu0 0.0
        %1999 = vmatpush1.msra.mxu0 0.0
        %2000 = vmatprep.subr.mxu0 0.0
        %2001 = vmatpush1.msra.mxu0 0.0
        %2002 = vmatprep.subr.mxu0 0.0
        %2003 = vmatpush1.msra.mxu0 0.0
        %2004 = vmatprep.subr.mxu0 0.0
        %2005 = vmatpush1.msra.mxu0 0.0
        %2006 = vmatprep.subr.mxu0 0.0
        %2007 = vmatpush1.msra.mxu0 0.0
        %2008 = vmatprep.subr.mxu0 0.0
        %2009 = vmatpush1.msra.mxu0 0.0
        %2010 = vmatprep.subr.mxu0 0.0
        %2011 = vmatpush1.msra.mxu0 0.0
        %2012 = vmatprep.subr.mxu0 0.0
        %2013 = vmatpush1.msra.mxu0 0.0
        %2014 = vmatprep.mubr.f32.mxu0 0.0
        %2015 = vmatmul.mubr.f32.gmra.mrb[0].mxu0 %v1948
        %v2016 = vpop.f32.mrb[0].mxu0
        %v2017 = vadd.f32 0.0, %v2016
        %v2018 = vpop.f32.mrb[0].mxu0
        %v2019 = vadd.f32 0.0, %v2018
        %2020 = vdwg.mxu0
        %v2021 = vadd.f32 %v1943, %v2017
        %v2022 = vadd.f32 %v1944, %v2019
        %s2023 = scalar_lea.vmem %s13, 32
        %v2024 = vld [vmem:[%s2023] sm:$0xff]
        %v2026 = vsel %vm1718, %v2024, 0
        %2028 = vmatprep.subr.mxu0 %v1638
        %2029 = vmatpush1.msra.mxu0 %v1637
        %2030 = vmatprep.subr.mxu0 0.0
        %2031 = vmatpush1.msra.mxu0 0.0
        %2032 = vmatprep.subr.mxu0 0.0
        %2033 = vmatpush1.msra.mxu0 0.0
        %2034 = vmatprep.subr.mxu0 0.0
        %2035 = vmatpush1.msra.mxu0 0.0
        %2036 = vmatprep.subr.mxu0 0.0
        %2037 = vmatpush1.msra.mxu0 0.0
        %2038 = vmatprep.subr.mxu0 0.0
        %2039 = vmatpush1.msra.mxu0 0.0
        %2040 = vmatprep.subr.mxu0 0.0
        %2041 = vmatpush1.msra.mxu0 0.0
        %2042 = vmatprep.subr.mxu0 0.0
        %2043 = vmatpush1.msra.mxu0 0.0
        %2044 = vmatprep.subr.mxu0 0.0
        %2045 = vmatpush1.msra.mxu0 0.0
        %2046 = vmatprep.subr.mxu0 0.0
        %2047 = vmatpush1.msra.mxu0 0.0
        %2048 = vmatprep.subr.mxu0 0.0
        %2049 = vmatpush1.msra.mxu0 0.0
        %2050 = vmatprep.subr.mxu0 0.0
        %2051 = vmatpush1.msra.mxu0 0.0
        %2052 = vmatprep.subr.mxu0 0.0
        %2053 = vmatpush1.msra.mxu0 0.0
        %2054 = vmatprep.subr.mxu0 0.0
        %2055 = vmatpush1.msra.mxu0 0.0
        %2056 = vmatprep.subr.mxu0 0.0
        %2057 = vmatpush1.msra.mxu0 0.0
        %2058 = vmatprep.subr.mxu0 0.0
        %2059 = vmatpush1.msra.mxu0 0.0
        %2060 = vmatprep.subr.mxu0 0.0
        %2061 = vmatpush1.msra.mxu0 0.0
        %2062 = vmatprep.subr.mxu0 0.0
        %2063 = vmatpush1.msra.mxu0 0.0
        %2064 = vmatprep.subr.mxu0 0.0
        %2065 = vmatpush1.msra.mxu0 0.0
        %2066 = vmatprep.subr.mxu0 0.0
        %2067 = vmatpush1.msra.mxu0 0.0
        %2068 = vmatprep.subr.mxu0 0.0
        %2069 = vmatpush1.msra.mxu0 0.0
        %2070 = vmatprep.subr.mxu0 0.0
        %2071 = vmatpush1.msra.mxu0 0.0
        %2072 = vmatprep.subr.mxu0 0.0
        %2073 = vmatpush1.msra.mxu0 0.0
        %2074 = vmatprep.subr.mxu0 0.0
        %2075 = vmatpush1.msra.mxu0 0.0
        %2076 = vmatprep.subr.mxu0 0.0
        %2077 = vmatpush1.msra.mxu0 0.0
        %2078 = vmatprep.subr.mxu0 0.0
        %2079 = vmatpush1.msra.mxu0 0.0
        %2080 = vmatprep.subr.mxu0 0.0
        %2081 = vmatpush1.msra.mxu0 0.0
        %2082 = vmatprep.subr.mxu0 0.0
        %2083 = vmatpush1.msra.mxu0 0.0
        %2084 = vmatprep.subr.mxu0 0.0
        %2085 = vmatpush1.msra.mxu0 0.0
        %2086 = vmatprep.subr.mxu0 0.0
        %2087 = vmatpush1.msra.mxu0 0.0
        %2088 = vmatprep.subr.mxu0 0.0
        %2089 = vmatpush1.msra.mxu0 0.0
        %2090 = vmatprep.subr.mxu0 0.0
        %2091 = vmatpush1.msra.mxu0 0.0
        %2092 = vmatprep.mubr.f32.mxu0 0.0
        %2093 = vmatmul.mubr.f32.gmra.mrb[0].mxu0 %v2026
        %v2094 = vpop.f32.mrb[0].mxu0
        %v2095 = vadd.f32 0.0, %v2094
        %v2096 = vpop.f32.mrb[0].mxu0
        %v2097 = vadd.f32 0.0, %v2096
        %2098 = vdwg.mxu0
        %v2099 = vadd.f32 %v2021, %v2095
        %v2100 = vadd.f32 %v2022, %v2097
        %s2101 = scalar_lea.vmem %s13, 40
        %v2102 = vld [vmem:[%s2101] sm:$0xff]
        %v2104 = vsel %vm1718, %v2102, 0
        %2106 = vmatprep.subr.mxu0 %v1652
        %2107 = vmatpush1.msra.mxu0 %v1651
        %2108 = vmatprep.subr.mxu0 0.0
        %2109 = vmatpush1.msra.mxu0 0.0
        %2110 = vmatprep.subr.mxu0 0.0
        %2111 = vmatpush1.msra.mxu0 0.0
        %2112 = vmatprep.subr.mxu0 0.0
        %2113 = vmatpush1.msra.mxu0 0.0
        %2114 = vmatprep.subr.mxu0 0.0
        %2115 = vmatpush1.msra.mxu0 0.0
        %2116 = vmatprep.subr.mxu0 0.0
        %2117 = vmatpush1.msra.mxu0 0.0
        %2118 = vmatprep.subr.mxu0 0.0
        %2119 = vmatpush1.msra.mxu0 0.0
        %2120 = vmatprep.subr.mxu0 0.0
        %2121 = vmatpush1.msra.mxu0 0.0
        %2122 = vmatprep.subr.mxu0 0.0
        %2123 = vmatpush1.msra.mxu0 0.0
        %2124 = vmatprep.subr.mxu0 0.0
        %2125 = vmatpush1.msra.mxu0 0.0
        %2126 = vmatprep.subr.mxu0 0.0
        %2127 = vmatpush1.msra.mxu0 0.0
        %2128 = vmatprep.subr.mxu0 0.0
        %2129 = vmatpush1.msra.mxu0 0.0
        %2130 = vmatprep.subr.mxu0 0.0
        %2131 = vmatpush1.msra.mxu0 0.0
        %2132 = vmatprep.subr.mxu0 0.0
        %2133 = vmatpush1.msra.mxu0 0.0
        %2134 = vmatprep.subr.mxu0 0.0
        %2135 = vmatpush1.msra.mxu0 0.0
        %2136 = vmatprep.subr.mxu0 0.0
        %2137 = vmatpush1.msra.mxu0 0.0
        %2138 = vmatprep.subr.mxu0 0.0
        %2139 = vmatpush1.msra.mxu0 0.0
        %2140 = vmatprep.subr.mxu0 0.0
        %2141 = vmatpush1.msra.mxu0 0.0
        %2142 = vmatprep.subr.mxu0 0.0
        %2143 = vmatpush1.msra.mxu0 0.0
        %2144 = vmatprep.subr.mxu0 0.0
        %2145 = vmatpush1.msra.mxu0 0.0
        %2146 = vmatprep.subr.mxu0 0.0
        %2147 = vmatpush1.msra.mxu0 0.0
        %2148 = vmatprep.subr.mxu0 0.0
        %2149 = vmatpush1.msra.mxu0 0.0
        %2150 = vmatprep.subr.mxu0 0.0
        %2151 = vmatpush1.msra.mxu0 0.0
        %2152 = vmatprep.subr.mxu0 0.0
        %2153 = vmatpush1.msra.mxu0 0.0
        %2154 = vmatprep.subr.mxu0 0.0
        %2155 = vmatpush1.msra.mxu0 0.0
        %2156 = vmatprep.subr.mxu0 0.0
        %2157 = vmatpush1.msra.mxu0 0.0
        %2158 = vmatprep.subr.mxu0 0.0
        %2159 = vmatpush1.msra.mxu0 0.0
        %2160 = vmatprep.subr.mxu0 0.0
        %2161 = vmatpush1.msra.mxu0 0.0
        %2162 = vmatprep.subr.mxu0 0.0
        %2163 = vmatpush1.msra.mxu0 0.0
        %2164 = vmatprep.subr.mxu0 0.0
        %2165 = vmatpush1.msra.mxu0 0.0
        %2166 = vmatprep.subr.mxu0 0.0
        %2167 = vmatpush1.msra.mxu0 0.0
        %2168 = vmatprep.subr.mxu0 0.0
        %2169 = vmatpush1.msra.mxu0 0.0
        %2170 = vmatprep.mubr.f32.mxu0 0.0
        %2171 = vmatmul.mubr.f32.gmra.mrb[0].mxu0 %v2104
        %v2172 = vpop.f32.mrb[0].mxu0
        %v2173 = vadd.f32 0.0, %v2172
        %v2174 = vpop.f32.mrb[0].mxu0
        %v2175 = vadd.f32 0.0, %v2174
        %2176 = vdwg.mxu0
        %v2177 = vadd.f32 %v2099, %v2173
        %v2178 = vadd.f32 %v2100, %v2175
        %s2179 = scalar_lea.vmem %s13, 48
        %v2180 = vld [vmem:[%s2179] sm:$0xff]
        %v2182 = vsel %vm1718, %v2180, 0
        %2184 = vmatprep.subr.mxu0 %v1682
        %2185 = vmatpush1.msra.mxu0 %v1681
        %2186 = vmatprep.subr.mxu0 0.0
        %2187 = vmatpush1.msra.mxu0 0.0
        %2188 = vmatprep.subr.mxu0 0.0
        %2189 = vmatpush1.msra.mxu0 0.0
        %2190 = vmatprep.subr.mxu0 0.0
        %2191 = vmatpush1.msra.mxu0 0.0
        %2192 = vmatprep.subr.mxu0 0.0
        %2193 = vmatpush1.msra.mxu0 0.0
        %2194 = vmatprep.subr.mxu0 0.0
        %2195 = vmatpush1.msra.mxu0 0.0
        %2196 = vmatprep.subr.mxu0 0.0
        %2197 = vmatpush1.msra.mxu0 0.0
        %2198 = vmatprep.subr.mxu0 0.0
        %2199 = vmatpush1.msra.mxu0 0.0
        %2200 = vmatprep.subr.mxu0 0.0
        %2201 = vmatpush1.msra.mxu0 0.0
        %2202 = vmatprep.subr.mxu0 0.0
        %2203 = vmatpush1.msra.mxu0 0.0
        %2204 = vmatprep.subr.mxu0 0.0
        %2205 = vmatpush1.msra.mxu0 0.0
        %2206 = vmatprep.subr.mxu0 0.0
        %2207 = vmatpush1.msra.mxu0 0.0
        %2208 = vmatprep.subr.mxu0 0.0
        %2209 = vmatpush1.msra.mxu0 0.0
        %2210 = vmatprep.subr.mxu0 0.0
        %2211 = vmatpush1.msra.mxu0 0.0
        %2212 = vmatprep.subr.mxu0 0.0
        %2213 = vmatpush1.msra.mxu0 0.0
        %2214 = vmatprep.subr.mxu0 0.0
        %2215 = vmatpush1.msra.mxu0 0.0
        %2216 = vmatprep.subr.mxu0 0.0
        %2217 = vmatpush1.msra.mxu0 0.0
        %2218 = vmatprep.subr.mxu0 0.0
        %2219 = vmatpush1.msra.mxu0 0.0
        %2220 = vmatprep.subr.mxu0 0.0
        %2221 = vmatpush1.msra.mxu0 0.0
        %2222 = vmatprep.subr.mxu0 0.0
        %2223 = vmatpush1.msra.mxu0 0.0
        %2224 = vmatprep.subr.mxu0 0.0
        %2225 = vmatpush1.msra.mxu0 0.0
        %2226 = vmatprep.subr.mxu0 0.0
        %2227 = vmatpush1.msra.mxu0 0.0
        %2228 = vmatprep.subr.mxu0 0.0
        %2229 = vmatpush1.msra.mxu0 0.0
        %2230 = vmatprep.subr.mxu0 0.0
        %2231 = vmatpush1.msra.mxu0 0.0
        %2232 = vmatprep.subr.mxu0 0.0
        %2233 = vmatpush1.msra.mxu0 0.0
        %2234 = vmatprep.subr.mxu0 0.0
        %2235 = vmatpush1.msra.mxu0 0.0
        %2236 = vmatprep.subr.mxu0 0.0
        %2237 = vmatpush1.msra.mxu0 0.0
        %2238 = vmatprep.subr.mxu0 0.0
        %2239 = vmatpush1.msra.mxu0 0.0
        %2240 = vmatprep.subr.mxu0 0.0
        %2241 = vmatpush1.msra.mxu0 0.0
        %2242 = vmatprep.subr.mxu0 0.0
        %2243 = vmatpush1.msra.mxu0 0.0
        %2244 = vmatprep.subr.mxu0 0.0
        %2245 = vmatpush1.msra.mxu0 0.0
        %2246 = vmatprep.subr.mxu0 0.0
        %2247 = vmatpush1.msra.mxu0 0.0
        %2248 = vmatprep.mubr.f32.mxu0 0.0
        %2249 = vmatmul.mubr.f32.gmra.mrb[0].mxu0 %v2182
        %v2250 = vpop.f32.mrb[0].mxu0
        %v2251 = vadd.f32 0.0, %v2250
        %v2252 = vpop.f32.mrb[0].mxu0
        %v2253 = vadd.f32 0.0, %v2252
        %2254 = vdwg.mxu0
        %v2255 = vadd.f32 %v2177, %v2251
        %v2256 = vadd.f32 %v2178, %v2253
        %s2257 = scalar_lea.vmem %s13, 56
        %v2258 = vld [vmem:[%s2257] sm:$0xff]
        %v2260 = vsel %vm1718, %v2258, 0
        %2262 = vmatprep.subr.mxu0 %v1698
        %2263 = vmatpush1.msra.mxu0 %v1697
        %2264 = vmatprep.subr.mxu0 0.0
        %2265 = vmatpush1.msra.mxu0 0.0
        %2266 = vmatprep.subr.mxu0 0.0
        %2267 = vmatpush1.msra.mxu0 0.0
        %2268 = vmatprep.subr.mxu0 0.0
        %2269 = vmatpush1.msra.mxu0 0.0
        %2270 = vmatprep.subr.mxu0 0.0
        %2271 = vmatpush1.msra.mxu0 0.0
        %2272 = vmatprep.subr.mxu0 0.0
        %2273 = vmatpush1.msra.mxu0 0.0
        %2274 = vmatprep.subr.mxu0 0.0
        %2275 = vmatpush1.msra.mxu0 0.0
        %2276 = vmatprep.subr.mxu0 0.0
        %2277 = vmatpush1.msra.mxu0 0.0
        %2278 = vmatprep.subr.mxu0 0.0
        %2279 = vmatpush1.msra.mxu0 0.0
        %2280 = vmatprep.subr.mxu0 0.0
        %2281 = vmatpush1.msra.mxu0 0.0
        %2282 = vmatprep.subr.mxu0 0.0
        %2283 = vmatpush1.msra.mxu0 0.0
        %2284 = vmatprep.subr.mxu0 0.0
        %2285 = vmatpush1.msra.mxu0 0.0
        %2286 = vmatprep.subr.mxu0 0.0
        %2287 = vmatpush1.msra.mxu0 0.0
        %2288 = vmatprep.subr.mxu0 0.0
        %2289 = vmatpush1.msra.mxu0 0.0
        %2290 = vmatprep.subr.mxu0 0.0
        %2291 = vmatpush1.msra.mxu0 0.0
        %2292 = vmatprep.subr.mxu0 0.0
        %2293 = vmatpush1.msra.mxu0 0.0
        %2294 = vmatprep.subr.mxu0 0.0
        %2295 = vmatpush1.msra.mxu0 0.0
        %2296 = vmatprep.subr.mxu0 0.0
        %2297 = vmatpush1.msra.mxu0 0.0
        %2298 = vmatprep.subr.mxu0 0.0
        %2299 = vmatpush1.msra.mxu0 0.0
        %2300 = vmatprep.subr.mxu0 0.0
        %2301 = vmatpush1.msra.mxu0 0.0
        %2302 = vmatprep.subr.mxu0 0.0
        %2303 = vmatpush1.msra.mxu0 0.0
        %2304 = vmatprep.subr.mxu0 0.0
        %2305 = vmatpush1.msra.mxu0 0.0
        %2306 = vmatprep.subr.mxu0 0.0
        %2307 = vmatpush1.msra.mxu0 0.0
        %2308 = vmatprep.subr.mxu0 0.0
        %2309 = vmatpush1.msra.mxu0 0.0
        %2310 = vmatprep.subr.mxu0 0.0
        %2311 = vmatpush1.msra.mxu0 0.0
        %2312 = vmatprep.subr.mxu0 0.0
        %2313 = vmatpush1.msra.mxu0 0.0
        %2314 = vmatprep.subr.mxu0 0.0
        %2315 = vmatpush1.msra.mxu0 0.0
        %2316 = vmatprep.subr.mxu0 0.0
        %2317 = vmatpush1.msra.mxu0 0.0
        %2318 = vmatprep.subr.mxu0 0.0
        %2319 = vmatpush1.msra.mxu0 0.0
        %2320 = vmatprep.subr.mxu0 0.0
        %2321 = vmatpush1.msra.mxu0 0.0
        %2322 = vmatprep.subr.mxu0 0.0
        %2323 = vmatpush1.msra.mxu0 0.0
        %2324 = vmatprep.subr.mxu0 0.0
        %2325 = vmatpush1.msra.mxu0 0.0
        %2326 = vmatprep.mubr.f32.mxu0 0.0
        %2327 = vmatmul.mubr.f32.gmra.mrb[0].mxu0 %v2260
        %v2328 = vpop.f32.mrb[0].mxu0
        %v2329 = vadd.f32 0.0, %v2328
        %v2330 = vpop.f32.mrb[0].mxu0
        %v2331 = vadd.f32 0.0, %v2330
        %2332 = vdwg.mxu0
        %v2333 = vadd.f32 %v2255, %v2329
        %v2334 = vadd.f32 %v2256, %v2331
        %s2335 = scalar_lea.vmem %s13, 64
        %v2336 = vld [vmem:[%s2335] sm:$0xff]
        %v2338 = vsel %vm1718, %v2336, 0
        %2340 = vmatprep.subr.mxu0 %v1714
        %2341 = vmatpush1.msra.mxu0 %v1713
        %2342 = vmatprep.subr.mxu0 0.0
        %2343 = vmatpush1.msra.mxu0 0.0
        %2344 = vmatprep.subr.mxu0 0.0
        %2345 = vmatpush1.msra.mxu0 0.0
        %2346 = vmatprep.subr.mxu0 0.0
        %2347 = vmatpush1.msra.mxu0 0.0
        %2348 = vmatprep.subr.mxu0 0.0
        %2349 = vmatpush1.msra.mxu0 0.0
        %2350 = vmatprep.subr.mxu0 0.0
        %2351 = vmatpush1.msra.mxu0 0.0
        %2352 = vmatprep.subr.mxu0 0.0
        %2353 = vmatpush1.msra.mxu0 0.0
        %2354 = vmatprep.subr.mxu0 0.0
        %2355 = vmatpush1.msra.mxu0 0.0
        %2356 = vmatprep.subr.mxu0 0.0
        %2357 = vmatpush1.msra.mxu0 0.0
        %2358 = vmatprep.subr.mxu0 0.0
        %2359 = vmatpush1.msra.mxu0 0.0
        %2360 = vmatprep.subr.mxu0 0.0
        %2361 = vmatpush1.msra.mxu0 0.0
        %2362 = vmatprep.subr.mxu0 0.0
        %2363 = vmatpush1.msra.mxu0 0.0
        %2364 = vmatprep.subr.mxu0 0.0
        %2365 = vmatpush1.msra.mxu0 0.0
        %2366 = vmatprep.subr.mxu0 0.0
        %2367 = vmatpush1.msra.mxu0 0.0
        %2368 = vmatprep.subr.mxu0 0.0
        %2369 = vmatpush1.msra.mxu0 0.0
        %2370 = vmatprep.subr.mxu0 0.0
        %2371 = vmatpush1.msra.mxu0 0.0
        %2372 = vmatprep.subr.mxu0 0.0
        %2373 = vmatpush1.msra.mxu0 0.0
        %2374 = vmatprep.subr.mxu0 0.0
        %2375 = vmatpush1.msra.mxu0 0.0
        %2376 = vmatprep.subr.mxu0 0.0
        %2377 = vmatpush1.msra.mxu0 0.0
        %2378 = vmatprep.subr.mxu0 0.0
        %2379 = vmatpush1.msra.mxu0 0.0
        %2380 = vmatprep.subr.mxu0 0.0
        %2381 = vmatpush1.msra.mxu0 0.0
        %2382 = vmatprep.subr.mxu0 0.0
        %2383 = vmatpush1.msra.mxu0 0.0
        %2384 = vmatprep.subr.mxu0 0.0
        %2385 = vmatpush1.msra.mxu0 0.0
        %2386 = vmatprep.subr.mxu0 0.0
        %2387 = vmatpush1.msra.mxu0 0.0
        %2388 = vmatprep.subr.mxu0 0.0
        %2389 = vmatpush1.msra.mxu0 0.0
        %2390 = vmatprep.subr.mxu0 0.0
        %2391 = vmatpush1.msra.mxu0 0.0
        %2392 = vmatprep.subr.mxu0 0.0
        %2393 = vmatpush1.msra.mxu0 0.0
        %2394 = vmatprep.subr.mxu0 0.0
        %2395 = vmatpush1.msra.mxu0 0.0
        %2396 = vmatprep.subr.mxu0 0.0
        %2397 = vmatpush1.msra.mxu0 0.0
        %2398 = vmatprep.subr.mxu0 0.0
        %2399 = vmatpush1.msra.mxu0 0.0
        %2400 = vmatprep.subr.mxu0 0.0
        %2401 = vmatpush1.msra.mxu0 0.0
        %2402 = vmatprep.subr.mxu0 0.0
        %2403 = vmatpush1.msra.mxu0 0.0
        %2404 = vmatprep.mubr.f32.mxu0 0.0
        %2405 = vmatmul.mubr.f32.gmra.mrb[0].mxu0 %v2338
        %v2406 = vpop.f32.mrb[0].mxu0
        %v2407 = vadd.f32 0.0, %v2406
        %v2408 = vpop.f32.mrb[0].mxu0
        %v2409 = vadd.f32 0.0, %v2408
        %2410 = vdwg.mxu0
        %v2411 = vadd.f32 %v2333, %v2407
        %v2412 = vadd.f32 %v2334, %v2409
        %v2413 = vld [vmem:[%s14] sm:$0xff]
        %2415 = vset.pattern.permute.xlu0 0
        %2416 = vperm.xlu0 %2415, %v2413
        %v2417 = vpop.permute.xlu0 %2416
        %v2419 = vadd.f32 %v2411, %v2417
        %v2420 = vadd.f32 %v2412, %v2417
        %v2421 = vmul.f32 %v2419, 0.3
        %v2422 = vmul.f32 %v2420, 0.3
        %v2423 = vmax.f32 %v2419, %v2421
        %v2424 = vmax.f32 %v2420, %v2422
        %v2425 = vld [vmem:[%s15] sm:$0xff]
        %v2426 = vld [vmem:[%s16] sm:$0xff]
        %2428 = vset.pattern.permute.xlu0 0
        %2429 = vperm.xlu0 %2428, %v2426
        %v2430 = vpop.permute.xlu0 %2429
        %v2433 = vsel %vm605, %v2425, 0
        %2435 = vmatprep.subr.mxu0 %v611
        %2436 = vmatpush1.msra.mxu0 %v609
        %2437 = vmatprep.subr.mxu0 0.0
        %2438 = vmatpush1.msra.mxu0 0.0
        %2439 = vmatprep.subr.mxu0 0.0
        %2440 = vmatpush1.msra.mxu0 0.0
        %2441 = vmatprep.subr.mxu0 0.0
        %2442 = vmatpush1.msra.mxu0 0.0
        %2443 = vmatprep.subr.mxu0 0.0
        %2444 = vmatpush1.msra.mxu0 0.0
        %2445 = vmatprep.subr.mxu0 0.0
        %2446 = vmatpush1.msra.mxu0 0.0
        %2447 = vmatprep.subr.mxu0 0.0
        %2448 = vmatpush1.msra.mxu0 0.0
        %2449 = vmatprep.subr.mxu0 0.0
        %2450 = vmatpush1.msra.mxu0 0.0
        %2451 = vmatprep.subr.mxu0 0.0
        %2452 = vmatpush1.msra.mxu0 0.0
        %2453 = vmatprep.subr.mxu0 0.0
        %2454 = vmatpush1.msra.mxu0 0.0
        %2455 = vmatprep.subr.mxu0 0.0
        %2456 = vmatpush1.msra.mxu0 0.0
        %2457 = vmatprep.subr.mxu0 0.0
        %2458 = vmatpush1.msra.mxu0 0.0
        %2459 = vmatprep.subr.mxu0 0.0
        %2460 = vmatpush1.msra.mxu0 0.0
        %2461 = vmatprep.subr.mxu0 0.0
        %2462 = vmatpush1.msra.mxu0 0.0
        %2463 = vmatprep.subr.mxu0 0.0
        %2464 = vmatpush1.msra.mxu0 0.0
        %2465 = vmatprep.subr.mxu0 0.0
        %2466 = vmatpush1.msra.mxu0 0.0
        %2467 = vmatprep.subr.mxu0 0.0
        %2468 = vmatpush1.msra.mxu0 0.0
        %2469 = vmatprep.subr.mxu0 0.0
        %2470 = vmatpush1.msra.mxu0 0.0
        %2471 = vmatprep.subr.mxu0 0.0
        %2472 = vmatpush1.msra.mxu0 0.0
        %2473 = vmatprep.subr.mxu0 0.0
        %2474 = vmatpush1.msra.mxu0 0.0
        %2475 = vmatprep.subr.mxu0 0.0
        %2476 = vmatpush1.msra.mxu0 0.0
        %2477 = vmatprep.subr.mxu0 0.0
        %2478 = vmatpush1.msra.mxu0 0.0
        %2479 = vmatprep.subr.mxu0 0.0
        %2480 = vmatpush1.msra.mxu0 0.0
        %2481 = vmatprep.subr.mxu0 0.0
        %2482 = vmatpush1.msra.mxu0 0.0
        %2483 = vmatprep.subr.mxu0 0.0
        %2484 = vmatpush1.msra.mxu0 0.0
        %2485 = vmatprep.subr.mxu0 0.0
        %2486 = vmatpush1.msra.mxu0 0.0
        %2487 = vmatprep.subr.mxu0 0.0
        %2488 = vmatpush1.msra.mxu0 0.0
        %2489 = vmatprep.subr.mxu0 0.0
        %2490 = vmatpush1.msra.mxu0 0.0
        %2491 = vmatprep.subr.mxu0 0.0
        %2492 = vmatpush1.msra.mxu0 0.0
        %2493 = vmatprep.subr.mxu0 0.0
        %2494 = vmatpush1.msra.mxu0 0.0
        %2495 = vmatprep.subr.mxu0 0.0
        %2496 = vmatpush1.msra.mxu0 0.0
        %2497 = vmatprep.subr.mxu0 0.0
        %2498 = vmatpush1.msra.mxu0 0.0
        %2499 = vmatprep.mubr.f32.mxu0 0.0
        %2500 = vmatmul.mubr.f32.gmra.mrb[0].mxu0 %v2433
        %v2501 = vpop.f32.mrb[0].mxu0
        %v2502 = vadd.f32 %v2430, %v2501
        %v2503 = vpop.f32.mrb[0].mxu0
        %v2504 = vadd.f32 %v2430, %v2503
        %2505 = vdwg.mxu0
        %v2506 = vadd.f32 %v2423, %v2502
        %v2507 = vadd.f32 %v2424, %v2504
        %2508 = vst [vmem:[%s543] sm:$0xff] %v2506
        %2509 = vst [vmem:[%s543 + $0x8] sm:$0xff] %v2507
        %s2510 = sand.u32 %s403, 1
        %s2511 = scalar_lea.sflag [#allocation4], %s2510
        %s2512 = sand.u32 %s403, 1
        %s2513 = smul.addr %s2512, 16
        %s2514 = scalar_lea.vmem [#allocation3], %s2513
        // Predicated region
        $region89: #{tpu_custom_call.1} parent=87 // pred_check
          %p2515 = pneg %p413
        $region90: #{tpu_custom_call.1} parent=87 // pred_check_branch
          %2517 = sbr.rel (%p2515) target = $region92
        $region91: #{tpu_custom_call.1} parent=87 // pred_region
          %s2519 = ssub.s32 256, 256
          %2520 = vsyncadd %s2511, %s2519
          %s2521 = smul.addr %s33, 2
          %s2522 = smul.addr %s2521, 128
          %s2523 = scalar_lea.hbm %s17, %s2522
          %s2525 = sshll.u32 %s2514, 4
          %s2526 = int_to_ptr.vmem [resolvable:$true] %s2525
          %2528 = dma.vmem_to_hbm [thread:$0]  %s2526, 256, %s2523, %s2511
        $region92: #{tpu_custom_call.1} parent=87 // pred_fallthru
          _
      $region88: #{tpu_custom_call.1} parent=5 // pred_fallthru
        _
      %p2529 = scmp.le.s32.totalorder 2, %s28
      // Predicated region
      $region93: #{tpu_custom_call.1} parent=5 // pred_check
        %p2530 = pneg %p2529
      $region94: #{tpu_custom_call.1} parent=5 // pred_check_branch
        %2532 = sbr.rel (%p2530) target = $region96
      $region95: #{tpu_custom_call.1} parent=5 // pred_region
        %s2533 = ssub.s32 %s28, 2
        // Predicated region
        $region97: #{tpu_custom_call.1} parent=95 // pred_check
          %p2534 = pneg %p419
        $region98: #{tpu_custom_call.1} parent=95 // pred_check_branch
          %2536 = sbr.rel (%p2534) target = $region100
        $region99: #{tpu_custom_call.1} parent=95 // pred_region
          %s2537 = sand.u32 %s404, 1
          %s2538 = scalar_lea.sflag [#allocation4], %s2537
          %s2539 = sand.u32 %s404, 1
          %s2540 = smul.addr %s2539, 16
          %s2541 = scalar_lea.vmem [#allocation3], %s2540
          %2542 = dma.done %s2538, 256
        $region100: #{tpu_custom_call.1} parent=95 // pred_fallthru
          _
      $region96: #{tpu_custom_call.1} parent=5 // pred_fallthru
        _
    $region6: #{tpu_custom_call.1} parent=1 // loop_footer
      %s32 = sadd.s32 1, %s28
    $region7: #{tpu_custom_call.1} parent=1 // loop_footer_branch
      %27 = sbr.rel target = $region3
    $region8: #{tpu_custom_call.1} parent=1 // loop_exit
      _
    %2543 = vsyncpa [#allocation4], 1
    %s2544 = scalar_lea.sflag [#allocation4], 1
    %2545 = vsyncpa %s2544, 1

</llo_original>
